<compile_context>
chip_gen: v5e
topology: v5e:2x2
jax: 0.10.0
libtpu: 0.0.40
codegen_flags: <defaults>
</compile_context>

<pallas_src>
import functools

import jax
import jax.numpy as jnp
from jax.experimental import pallas as pl
from jax.experimental.pallas import tpu as pltpu

NEG_SLOPE = 0.2
_LANE = 128      # lane width: channel dims padded to multiples of this
_SUBLANE = 8     # sublane width: node count padded to multiples of this
_VSPEC = pl.BlockSpec(memory_space=pltpu.MemorySpace.VMEM)


def _round_up(v, m):
    return ((v + m - 1) // m) * m


def _pad2(a, rows, cols):
    return jnp.pad(a, ((0, rows - a.shape[0]), (0, cols - a.shape[1])))


# ------------------------------ fused kernel -------------------------------- #

def _gae_forward_kernel(x_ref, adj_ref, w_ref, b_ref, att_ref, bias_ref, ep_ref,
                        wmulv_ref, bmulv_ref, noise_ref, z_ref, r_ref,
                        *, n_enc, n_dec, c):
    """Fused GraphAutoEncoder forward.

    x_ref     [Np, C]        f32   padded node features
    adj_ref   [Np, Np]       f32   dense adjacency (incl. self loops), {0,1}
    w_ref     [L, C, 2C]     bf16  per-layer fused (Wl | Wr)
    b_ref     [L, 1, 2C]     f32   per-layer fused (bl | br)
    att_ref   [L, 1, C]      f32   per-layer attention vector
    bias_ref  [L, 1, C]      f32   per-layer output bias
    ep_ref    [L, Np, Np, C] bf16  per-layer dense projected edge features
    wmulv_ref [C, 2C]        bf16  fused (W_mu | W_logvar)
    bmulv_ref [1, 2C]        f32   fused (b_mu | b_logvar)
    noise_ref [Np, C]        f32   precomputed gaussian noise
    z_ref     [Np, C]        f32   latent output
    r_ref     [Np, C]        f32   reconstruction output
    """
    # Hoisted once, shared by every GAT layer: additive softmax mask.
    adj = adj_ref[...]
    neg_mask = jnp.where(adj > 0.5, jnp.float32(0.0), jnp.float32(-1e30))

    def gat_layer(h, l):
        # Fused left/right projection: one bf16 MXU matmul, f32 accumulate.
        hw = jnp.dot(h.astype(jnp.bfloat16), w_ref[l],
                     preferred_element_type=jnp.float32) + b_ref[l]        # [Np, 2C]
        xl, xr = hw[:, :c], hw[:, c:]
        # s[t, src, ch] = leaky_relu(xl[src] + xr[t] + e_proj[t, src])
        s = xr[:, None, :] + xl[None, :, :] + ep_ref[l].astype(jnp.float32)
        s = jnp.where(s >= 0.0, s, NEG_SLOPE * s)
        logits = jnp.sum(s * att_ref[l][None, :, :], axis=-1) + neg_mask   # [Np, Np]
        m = jnp.max(logits, axis=-1, keepdims=True)
        p = jnp.exp(logits - m)            # masked entries underflow to exactly 0
        alpha = p * pl.reciprocal(jnp.sum(p, axis=-1, keepdims=True), approx=True)
        out = jnp.dot(alpha.astype(jnp.bfloat16), xl.astype(jnp.bfloat16),
                      preferred_element_type=jnp.float32)
        return out + bias_ref[l]

    h = x_ref[...]
    for l in range(n_enc):                 # static unroll: few layers, all in VMEM
        h = gat_layer(h, l)

    # Reparametrize: fused mu/logvar projection, z = mu + 0.5*exp(logvar)*noise.
    mv = jnp.dot(h.astype(jnp.bfloat16), wmulv_ref[...],
                 preferred_element_type=jnp.float32) + bmulv_ref[...]      # [Np, 2C]
    mu, logvar = mv[:, :c], mv[:, c:]
    z = mu + 0.5 * jnp.exp(logvar) * noise_ref[...]
    z_ref[...] = z.astype(z_ref.dtype)

    r = z
    for l in range(n_dec):
        r = gat_layer(r, n_enc + l)
    r_ref[...] = r.astype(r_ref.dtype)


def _fused_forward(x_p, adj, w_all, b_all, att_all, bias_all, ep_all,
                   wmulv, bmulv, noise_p, *, n_enc, n_dec):
    n_pad, c = x_p.shape
    kernel = functools.partial(_gae_forward_kernel, n_enc=n_enc, n_dec=n_dec, c=c)
    return pl.pallas_call(
        kernel,
        out_shape=(jax.ShapeDtypeStruct((n_pad, c), jnp.float32),
                   jax.ShapeDtypeStruct((n_pad, c), jnp.float32)),
        in_specs=[_VSPEC] * 10,
        out_specs=(_VSPEC, _VSPEC),
    )(x_p, adj, w_all, b_all, att_all, bias_all, ep_all, wmulv, bmulv, noise_p)


# ----------------------- graph densification (glue) ------------------------- #

def _dense_adjacency(edge_index, n, n_pad):
    """Dense [n_pad, n_pad] adjacency, self-loops removed then re-added (PyG)."""
    src, tgt = edge_index[0], edge_index[1]
    not_self = (src != tgt).astype(jnp.float32)
    adj = jnp.zeros((n_pad, n_pad), jnp.float32).at[tgt, src].set(not_self)
    diag = jnp.arange(n)
    return adj.at[diag, diag].set(1.0)


def _dense_projected_edges(edge_index, edge_feat, we_pad, n, n_pad):
    """Project edge features while sparse, then densify to [n_pad, n_pad, C].

    Mirrors PyG add_self_loops(fill_value='mean'): the self-loop edge attribute
    is the mean of incoming-edge attributes (mean commutes with the linear We).
    Note: duplicate (src, tgt) edges collapse to one dense entry (last write wins),
    same behaviour as the previous accepted version.
    """
    c = we_pad.shape[1]
    src, tgt = edge_index[0], edge_index[1]
    keep = (src != tgt).astype(jnp.float32)
    e_proj = jnp.dot(edge_feat, we_pad) * keep[:, None]            # [num_edges, C]
    dense = jnp.zeros((n_pad, n_pad, c), jnp.float32).at[tgt, src].set(e_proj)
    sums = jnp.zeros((n_pad, c), jnp.float32).at[tgt].add(e_proj)
    counts = jnp.zeros((n_pad,), jnp.float32).at[tgt].add(keep)
    mean = sums / jnp.maximum(counts, 1.0)[:, None]
    diag = jnp.arange(n)
    return dense.at[diag, diag].set(mean[:n])


# ----------------------------- parameter packing ----------------------------- #

def _pack_gat_layers(layer_params, c):
    """Pad every layer to [C, C] channels and fuse Wl|Wr / bl|br; stack over layers."""
    w, b, att, bias = [], [], [], []
    for p in layer_params:
        w.append(jnp.concatenate([_pad2(p["wl"], c, c), _pad2(p["wr"], c, c)], axis=1))
        b.append(jnp.concatenate([_pad2(p["bl"], 1, c), _pad2(p["br"], 1, c)], axis=1))
        att.append(_pad2(p["att"], 1, c))
        bias.append(_pad2(p["bias"], 1, c))
    return (jnp.stack(w).astype(jnp.bfloat16),   # [L, C, 2C] bf16 (MXU operand)
            jnp.stack(b),                        # [L, 1, 2C] f32
            jnp.stack(att),                      # [L, 1, C]  f32
            jnp.stack(bias))                     # [L, 1, C]  f32


# ----------------------------- parameter init ------------------------------- #

def _glorot(key, shape):
    lim = (6.0 / (shape[0] + shape[1])) ** 0.5
    return jax.random.uniform(key, shape, jnp.float32, -lim, lim)


def make_gatv2_params(key, cin, cout, edim):
    k = jax.random.split(key, 7)
    return dict(
        wl=_glorot(k[0], (cin, cout)),
        bl=0.1 * jax.random.normal(k[1], (1, cout), jnp.float32),
        wr=_glorot(k[2], (cin, cout)),
        br=0.1 * jax.random.normal(k[3], (1, cout), jnp.float32),
        we=_glorot(k[4], (edim, cout)),
        att=_glorot(k[5], (1, cout)),
        bias=0.1 * jax.random.normal(k[6], (1, cout), jnp.float32),
    )


def init_params(key, input_dim, hidden_dims, edge_dim):
    layers = [input_dim] + hidden_dims
    enc_keys = jax.random.split(jax.random.fold_in(key, 0), len(layers) - 1)
    encoder = [make_gatv2_params(enc_keys[i], layers[i], layers[i + 1], edge_dim)
               for i in range(len(layers) - 1)]

    # TODO(synk): the reference decoder init (`layers[i+1]` for i = len(layers)-1)
    # is an IndexError as written; we implement the intended mirrored decoder
    # hidden_dims[-1] -> ... -> input_dim.
    rev = list(reversed(layers))
    dec_keys = jax.random.split(jax.random.fold_in(key, 1), len(rev) - 1)
    decoder = [make_gatv2_params(dec_keys[i], rev[i], rev[i + 1], edge_dim)
               for i in range(len(rev) - 1)]

    hdim = hidden_dims[-1]
    mk = jax.random.split(jax.random.fold_in(key, 2), 4)
    return dict(
        encoder=encoder,
        decoder=decoder,
        mu_w=_glorot(mk[0], (hdim, hdim)),
        mu_b=0.1 * jax.random.normal(mk[1], (1, hdim), jnp.float32),
        lv_w=_glorot(mk[2], (hdim, hdim)),
        lv_b=0.1 * jax.random.normal(mk[3], (1, hdim), jnp.float32),
    )


# ------------------------------- forward ------------------------------------ #

def graph_autoencoder_forward(x, edge_index, edge_feat, params, noise):
    n, input_dim = x.shape
    enc, dec = params["encoder"], params["decoder"]
    layers = enc + dec
    hdim = params["mu_w"].shape[0]
    out_dim = dec[-1]["wl"].shape[1]

    # One uniform padded channel width so all layer weights stack into one tensor.
    dims = [input_dim, hdim, out_dim] + [p["wl"].shape[1] for p in layers]
    c = max(_round_up(d, _LANE) for d in dims)
    n_pad = _round_up(n, _SUBLANE)

    adj = _dense_adjacency(edge_index, n, n_pad)
    # Project edge features while sparse (per layer), densify, stack over layers.
    ep_all = jnp.stack([
        _dense_projected_edges(edge_index, edge_feat,
                               _pad2(p["we"], p["we"].shape[0], c), n, n_pad)
        for p in layers
    ]).astype(jnp.bfloat16)                                        # [L, Np, Np, C]

    w_all, b_all, att_all, bias_all = _pack_gat_layers(layers, c)

    wmulv = jnp.concatenate([_pad2(params["mu_w"], c, c),
                             _pad2(params["lv_w"], c, c)], axis=1).astype(jnp.bfloat16)
    bmulv = jnp.concatenate([_pad2(params["mu_b"], 1, c),
                             _pad2(params["lv_b"], 1, c)], axis=1)

    x_p = _pad2(x, n_pad, c)
    noise_p = _pad2(noise, n_pad, c)

    z_p, r_p = _fused_forward(x_p, adj, w_all, b_all, att_all, bias_all, ep_all,
                              wmulv, bmulv, noise_p,
                              n_enc=len(enc), n_dec=len(dec))
    return z_p[:n, :hdim], r_p[:n, :out_dim]


if __name__ == "__main__":
    key = jax.random.PRNGKey(0)
    N, input_dim, edge_dim = 16, 8, 4
    hidden_dims = [16, 8]
    num_edges = 40

    keys = jax.random.split(key, 6)
    x = jax.random.normal(keys[0], (N, input_dim), jnp.float32)
    src = jax.random.randint(keys[1], (num_edges,), 0, N)
    tgt = jax.random.randint(keys[2], (num_edges,), 0, N)
    edge_index = jnp.stack([src, tgt])                      # [2, E]  (row0=src, row1=tgt)
    edge_feat = jax.random.normal(keys[3], (num_edges, edge_dim), jnp.float32)

    params = init_params(keys[4], input_dim, hidden_dims, edge_dim)
    # torch.randn_like(logvar) replaced by deterministic precomputed gaussian noise
    noise = jax.random.normal(keys[5], (N, hidden_dims[-1]), jnp.float32)

    z, reconstructed = graph_autoencoder_forward(x, edge_index, edge_feat, params, noise)
    jax.block_until_ready((z, reconstructed))
    assert z.shape == (N, hidden_dims[-1]) and reconstructed.shape == (N, input_dim)
    print("KERNEL_OK")
</pallas_src>

<mosaic_0001>
module attributes {stable_mosaic.version = 11 : i64} {
  func.func @_gae_forward_kernel(%arg0: memref<16x128xf32, #tpu.memory_space<vmem>>, %arg1: memref<16x16xf32, #tpu.memory_space<vmem>>, %arg2: memref<4x128x256xbf16, #tpu.memory_space<vmem>>, %arg3: memref<4x1x256xf32, #tpu.memory_space<vmem>>, %arg4: memref<4x1x128xf32, #tpu.memory_space<vmem>>, %arg5: memref<4x1x128xf32, #tpu.memory_space<vmem>>, %arg6: memref<4x16x16x128xbf16, #tpu.memory_space<vmem>>, %arg7: memref<128x256xbf16, #tpu.memory_space<vmem>>, %arg8: memref<1x256xf32, #tpu.memory_space<vmem>>, %arg9: memref<16x128xf32, #tpu.memory_space<vmem>>, %arg10: memref<16x128xf32, #tpu.memory_space<vmem>>, %arg11: memref<16x128xf32, #tpu.memory_space<vmem>>) attributes {dimension_semantics = [], scalar_prefetch = 0 : i64, scratch_operands = 0 : i64, tpu.core_type = #tpu.core_type<tc>} {
    %c0 = arith.constant 0 : index
    %c0_0 = arith.constant 0 : index
    %0 = vector.load %arg1[%c0, %c0_0] : memref<16x16xf32, #tpu.memory_space<vmem>>, vector<16x16xf32>
    %cst = arith.constant 5.000000e-01 : f32
    %1 = vector.broadcast %cst : f32 to vector<16x16xf32>
    %2 = arith.cmpf ogt, %0, %1 : vector<16x16xf32>
    %cst_1 = arith.constant 0.000000e+00 : f32
    %cst_2 = arith.constant -1.000000e+30 : f32
    %3 = vector.broadcast %cst_1 : f32 to vector<16x16xf32>
    %4 = vector.broadcast %cst_2 : f32 to vector<16x16xf32>
    %5 = arith.select %2, %3, %4 : vector<16x16xi1>, vector<16x16xf32>
    %c0_3 = arith.constant 0 : index
    %c0_4 = arith.constant 0 : index
    %6 = vector.load %arg0[%c0_3, %c0_4] : memref<16x128xf32, #tpu.memory_space<vmem>>, vector<16x128xf32>
    %7 = arith.truncf %6 : vector<16x128xf32> to vector<16x128xbf16>
    %c0_5 = arith.constant 0 : index
    %c0_6 = arith.constant 0 : index
    %c0_7 = arith.constant 0 : index
    %8 = vector.load %arg2[%c0_5, %c0_6, %c0_7] : memref<4x128x256xbf16, #tpu.memory_space<vmem>>, vector<1x128x256xbf16>
    %9 = vector.shape_cast %8 : vector<1x128x256xbf16> to vector<128x256xbf16>
    %cst_8 = arith.constant dense<0.000000e+00> : vector<16x256xf32>
    %10 = tpu.matmul %7, %9, %cst_8 {dimension_numbers = #tpu.dot_dimension_numbers<[1], [0], [0], [1], [0, 0, 1, 1], [], []>} : vector<16x128xbf16>, vector<128x256xbf16>, vector<16x256xf32> -> vector<16x256xf32>
    %c0_9 = arith.constant 0 : index
    %c0_10 = arith.constant 0 : index
    %c0_11 = arith.constant 0 : index
    %11 = vector.load %arg3[%c0_9, %c0_10, %c0_11] : memref<4x1x256xf32, #tpu.memory_space<vmem>>, vector<1x1x256xf32>
    %12 = vector.shape_cast %11 : vector<1x1x256xf32> to vector<1x256xf32>
    %13 = vector.broadcast %12 : vector<1x256xf32> to vector<16x256xf32>
    %14 = arith.addf %10, %13 : vector<16x256xf32>
    %15 = vector.extract_strided_slice %14 {offsets = [0, 0], sizes = [16, 128], strides = [1, 1]} : vector<16x256xf32> to vector<16x128xf32>
    %16 = vector.extract_strided_slice %14 {offsets = [0, 128], sizes = [16, 128], strides = [1, 1]} : vector<16x256xf32> to vector<16x128xf32>
    %17 = vector.shape_cast %16 : vector<16x128xf32> to vector<16x1x128xf32>
    %18 = vector.shape_cast %15 : vector<16x128xf32> to vector<1x16x128xf32>
    %19 = vector.broadcast %17 : vector<16x1x128xf32> to vector<16x16x128xf32>
    %20 = vector.broadcast %18 : vector<1x16x128xf32> to vector<16x16x128xf32>
    %21 = arith.addf %19, %20 : vector<16x16x128xf32>
    %c0_12 = arith.constant 0 : index
    %c0_13 = arith.constant 0 : index
    %c0_14 = arith.constant 0 : index
    %c0_15 = arith.constant 0 : index
    %22 = vector.load %arg6[%c0_12, %c0_13, %c0_14, %c0_15] : memref<4x16x16x128xbf16, #tpu.memory_space<vmem>>, vector<1x16x16x128xbf16>
    %23 = vector.shape_cast %22 : vector<1x16x16x128xbf16> to vector<16x16x128xbf16>
    %24 = arith.extf %23 : vector<16x16x128xbf16> to vector<16x16x128xf32>
    %25 = arith.addf %21, %24 : vector<16x16x128xf32>
    %cst_16 = arith.constant 0.000000e+00 : f32
    %26 = vector.broadcast %cst_16 : f32 to vector<16x16x128xf32>
    %27 = arith.cmpf oge, %25, %26 : vector<16x16x128xf32>
    %cst_17 = arith.constant 2.000000e-01 : f32
    %28 = vector.broadcast %cst_17 : f32 to vector<16x16x128xf32>
    %29 = arith.mulf %28, %25 : vector<16x16x128xf32>
    %30 = arith.select %27, %25, %29 : vector<16x16x128xi1>, vector<16x16x128xf32>
    %c0_18 = arith.constant 0 : index
    %c0_19 = arith.constant 0 : index
    %c0_20 = arith.constant 0 : index
    %31 = vector.load %arg4[%c0_18, %c0_19, %c0_20] : memref<4x1x128xf32, #tpu.memory_space<vmem>>, vector<1x1x128xf32>
    %32 = vector.shape_cast %31 : vector<1x1x128xf32> to vector<1x128xf32>
    %33 = vector.shape_cast %32 : vector<1x128xf32> to vector<1x1x128xf32>
    %34 = vector.broadcast %33 : vector<1x1x128xf32> to vector<16x16x128xf32>
    %35 = arith.mulf %30, %34 : vector<16x16x128xf32>
    %cst_21 = arith.constant dense<0.000000e+00> : vector<16x16xf32>
    %36 = vector.multi_reduction <add>, %35, %cst_21 [2] : vector<16x16x128xf32> to vector<16x16xf32>
    %37 = arith.addf %36, %5 : vector<16x16xf32>
    %cst_22 = arith.constant dense<0xFF800000> : vector<16xf32>
    %38 = vector.multi_reduction <maximumf>, %37, %cst_22 [1] : vector<16x16xf32> to vector<16xf32>
    %39 = vector.shape_cast %38 : vector<16xf32> to vector<16x1xf32>
    %40 = vector.broadcast %39 : vector<16x1xf32> to vector<16x16xf32>
    %41 = arith.subf %37, %40 : vector<16x16xf32>
    %42 = math.exp %41 : vector<16x16xf32>
    %cst_23 = arith.constant dense<0.000000e+00> : vector<16xf32>
    %43 = vector.multi_reduction <add>, %42, %cst_23 [1] : vector<16x16xf32> to vector<16xf32>
    %44 = vector.shape_cast %43 : vector<16xf32> to vector<16x1xf32>
    %45 = tpu.reciprocal %44 {approx = true} : vector<16x1xf32> -> vector<16x1xf32>
    %46 = vector.broadcast %45 : vector<16x1xf32> to vector<16x16xf32>
    %47 = arith.mulf %42, %46 : vector<16x16xf32>
    %48 = arith.truncf %47 : vector<16x16xf32> to vector<16x16xbf16>
    %49 = arith.truncf %15 : vector<16x128xf32> to vector<16x128xbf16>
    %cst_24 = arith.constant dense<0.000000e+00> : vector<16x128xf32>
    %50 = tpu.matmul %48, %49, %cst_24 {dimension_numbers = #tpu.dot_dimension_numbers<[1], [0], [0], [1], [0, 0, 1, 1], [], []>} : vector<16x16xbf16>, vector<16x128xbf16>, vector<16x128xf32> -> vector<16x128xf32>
    %c0_25 = arith.constant 0 : index
    %c0_26 = arith.constant 0 : index
    %c0_27 = arith.constant 0 : index
    %51 = vector.load %arg5[%c0_25, %c0_26, %c0_27] : memref<4x1x128xf32, #tpu.memory_space<vmem>>, vector<1x1x128xf32>
    %52 = vector.shape_cast %51 : vector<1x1x128xf32> to vector<1x128xf32>
    %53 = vector.broadcast %52 : vector<1x128xf32> to vector<16x128xf32>
    %54 = arith.addf %50, %53 : vector<16x128xf32>
    %55 = arith.truncf %54 : vector<16x128xf32> to vector<16x128xbf16>
    %c1 = arith.constant 1 : index
    %c0_28 = arith.constant 0 : index
    %c0_29 = arith.constant 0 : index
    %56 = vector.load %arg2[%c1, %c0_28, %c0_29] : memref<4x128x256xbf16, #tpu.memory_space<vmem>>, vector<1x128x256xbf16>
    %57 = vector.shape_cast %56 : vector<1x128x256xbf16> to vector<128x256xbf16>
    %cst_30 = arith.constant dense<0.000000e+00> : vector<16x256xf32>
    %58 = tpu.matmul %55, %57, %cst_30 {dimension_numbers = #tpu.dot_dimension_numbers<[1], [0], [0], [1], [0, 0, 1, 1], [], []>} : vector<16x128xbf16>, vector<128x256xbf16>, vector<16x256xf32> -> vector<16x256xf32>
    %c1_31 = arith.constant 1 : index
    %c0_32 = arith.constant 0 : index
    %c0_33 = arith.constant 0 : index
    %59 = vector.load %arg3[%c1_31, %c0_32, %c0_33] : memref<4x1x256xf32, #tpu.memory_space<vmem>>, vector<1x1x256xf32>
    %60 = vector.shape_cast %59 : vector<1x1x256xf32> to vector<1x256xf32>
    %61 = vector.broadcast %60 : vector<1x256xf32> to vector<16x256xf32>
    %62 = arith.addf %58, %61 : vector<16x256xf32>
    %63 = vector.extract_strided_slice %62 {offsets = [0, 0], sizes = [16, 128], strides = [1, 1]} : vector<16x256xf32> to vector<16x128xf32>
    %64 = vector.extract_strided_slice %62 {offsets = [0, 128], sizes = [16, 128], strides = [1, 1]} : vector<16x256xf32> to vector<16x128xf32>
    %65 = vector.shape_cast %64 : vector<16x128xf32> to vector<16x1x128xf32>
    %66 = vector.shape_cast %63 : vector<16x128xf32> to vector<1x16x128xf32>
    %67 = vector.broadcast %65 : vector<16x1x128xf32> to vector<16x16x128xf32>
    %68 = vector.broadcast %66 : vector<1x16x128xf32> to vector<16x16x128xf32>
    %69 = arith.addf %67, %68 : vector<16x16x128xf32>
    %c1_34 = arith.constant 1 : index
    %c0_35 = arith.constant 0 : index
    %c0_36 = arith.constant 0 : index
    %c0_37 = arith.constant 0 : index
    %70 = vector.load %arg6[%c1_34, %c0_35, %c0_36, %c0_37] : memref<4x16x16x128xbf16, #tpu.memory_space<vmem>>, vector<1x16x16x128xbf16>
    %71 = vector.shape_cast %70 : vector<1x16x16x128xbf16> to vector<16x16x128xbf16>
    %72 = arith.extf %71 : vector<16x16x128xbf16> to vector<16x16x128xf32>
    %73 = arith.addf %69, %72 : vector<16x16x128xf32>
    %cst_38 = arith.constant 0.000000e+00 : f32
    %74 = vector.broadcast %cst_38 : f32 to vector<16x16x128xf32>
    %75 = arith.cmpf oge, %73, %74 : vector<16x16x128xf32>
    %cst_39 = arith.constant 2.000000e-01 : f32
    %76 = vector.broadcast %cst_39 : f32 to vector<16x16x128xf32>
    %77 = arith.mulf %76, %73 : vector<16x16x128xf32>
    %78 = arith.select %75, %73, %77 : vector<16x16x128xi1>, vector<16x16x128xf32>
    %c1_40 = arith.constant 1 : index
    %c0_41 = arith.constant 0 : index
    %c0_42 = arith.constant 0 : index
    %79 = vector.load %arg4[%c1_40, %c0_41, %c0_42] : memref<4x1x128xf32, #tpu.memory_space<vmem>>, vector<1x1x128xf32>
    %80 = vector.shape_cast %79 : vector<1x1x128xf32> to vector<1x128xf32>
    %81 = vector.shape_cast %80 : vector<1x128xf32> to vector<1x1x128xf32>
    %82 = vector.broadcast %81 : vector<1x1x128xf32> to vector<16x16x128xf32>
    %83 = arith.mulf %78, %82 : vector<16x16x128xf32>
    %cst_43 = arith.constant dense<0.000000e+00> : vector<16x16xf32>
    %84 = vector.multi_reduction <add>, %83, %cst_43 [2] : vector<16x16x128xf32> to vector<16x16xf32>
    %85 = arith.addf %84, %5 : vector<16x16xf32>
    %cst_44 = arith.constant dense<0xFF800000> : vector<16xf32>
    %86 = vector.multi_reduction <maximumf>, %85, %cst_44 [1] : vector<16x16xf32> to vector<16xf32>
    %87 = vector.shape_cast %86 : vector<16xf32> to vector<16x1xf32>
    %88 = vector.broadcast %87 : vector<16x1xf32> to vector<16x16xf32>
    %89 = arith.subf %85, %88 : vector<16x16xf32>
    %90 = math.exp %89 : vector<16x16xf32>
    %cst_45 = arith.constant dense<0.000000e+00> : vector<16xf32>
    %91 = vector.multi_reduction <add>, %90, %cst_45 [1] : vector<16x16xf32> to vector<16xf32>
    %92 = vector.shape_cast %91 : vector<16xf32> to vector<16x1xf32>
    %93 = tpu.reciprocal %92 {approx = true} : vector<16x1xf32> -> vector<16x1xf32>
    %94 = vector.broadcast %93 : vector<16x1xf32> to vector<16x16xf32>
    %95 = arith.mulf %90, %94 : vector<16x16xf32>
    %96 = arith.truncf %95 : vector<16x16xf32> to vector<16x16xbf16>
    %97 = arith.truncf %63 : vector<16x128xf32> to vector<16x128xbf16>
    %cst_46 = arith.constant dense<0.000000e+00> : vector<16x128xf32>
    %98 = tpu.matmul %96, %97, %cst_46 {dimension_numbers = #tpu.dot_dimension_numbers<[1], [0], [0], [1], [0, 0, 1, 1], [], []>} : vector<16x16xbf16>, vector<16x128xbf16>, vector<16x128xf32> -> vector<16x128xf32>
    %c1_47 = arith.constant 1 : index
    %c0_48 = arith.constant 0 : index
    %c0_49 = arith.constant 0 : index
    %99 = vector.load %arg5[%c1_47, %c0_48, %c0_49] : memref<4x1x128xf32, #tpu.memory_space<vmem>>, vector<1x1x128xf32>
    %100 = vector.shape_cast %99 : vector<1x1x128xf32> to vector<1x128xf32>
    %101 = vector.broadcast %100 : vector<1x128xf32> to vector<16x128xf32>
    %102 = arith.addf %98, %101 : vector<16x128xf32>
    %103 = arith.truncf %102 : vector<16x128xf32> to vector<16x128xbf16>
    %c0_50 = arith.constant 0 : index
    %c0_51 = arith.constant 0 : index
    %104 = vector.load %arg7[%c0_50, %c0_51] : memref<128x256xbf16, #tpu.memory_space<vmem>>, vector<128x256xbf16>
    %cst_52 = arith.constant dense<0.000000e+00> : vector<16x256xf32>
    %105 = tpu.matmul %103, %104, %cst_52 {dimension_numbers = #tpu.dot_dimension_numbers<[1], [0], [0], [1], [0, 0, 1, 1], [], []>} : vector<16x128xbf16>, vector<128x256xbf16>, vector<16x256xf32> -> vector<16x256xf32>
    %c0_53 = arith.constant 0 : index
    %c0_54 = arith.constant 0 : index
    %106 = vector.load %arg8[%c0_53, %c0_54] : memref<1x256xf32, #tpu.memory_space<vmem>>, vector<1x256xf32>
    %107 = vector.broadcast %106 : vector<1x256xf32> to vector<16x256xf32>
    %108 = arith.addf %105, %107 : vector<16x256xf32>
    %109 = vector.extract_strided_slice %108 {offsets = [0, 0], sizes = [16, 128], strides = [1, 1]} : vector<16x256xf32> to vector<16x128xf32>
    %110 = vector.extract_strided_slice %108 {offsets = [0, 128], sizes = [16, 128], strides = [1, 1]} : vector<16x256xf32> to vector<16x128xf32>
    %111 = math.exp %110 : vector<16x128xf32>
    %cst_55 = arith.constant 5.000000e-01 : f32
    %112 = vector.broadcast %cst_55 : f32 to vector<16x128xf32>
    %113 = arith.mulf %112, %111 : vector<16x128xf32>
    %c0_56 = arith.constant 0 : index
    %c0_57 = arith.constant 0 : index
    %114 = vector.load %arg9[%c0_56, %c0_57] : memref<16x128xf32, #tpu.memory_space<vmem>>, vector<16x128xf32>
    %115 = arith.mulf %113, %114 : vector<16x128xf32>
    %116 = arith.addf %109, %115 : vector<16x128xf32>
    %c0_58 = arith.constant 0 : index
    %c0_59 = arith.constant 0 : index
    %117 = vector.load %arg10[%c0_58, %c0_59] : memref<16x128xf32, #tpu.memory_space<vmem>>, vector<16x128xf32>
    tpu.vector_store %arg10[%c0_58, %c0_59], %116 {strides = array<i32>} : memref<16x128xf32, #tpu.memory_space<vmem>>, vector<16x128xf32>,
    %118 = arith.truncf %116 : vector<16x128xf32> to vector<16x128xbf16>
    %c2 = arith.constant 2 : index
    %c0_60 = arith.constant 0 : index
    %c0_61 = arith.constant 0 : index
    %119 = vector.load %arg2[%c2, %c0_60, %c0_61] : memref<4x128x256xbf16, #tpu.memory_space<vmem>>, vector<1x128x256xbf16>
    %120 = vector.shape_cast %119 : vector<1x128x256xbf16> to vector<128x256xbf16>
    %cst_62 = arith.constant dense<0.000000e+00> : vector<16x256xf32>
    %121 = tpu.matmul %118, %120, %cst_62 {dimension_numbers = #tpu.dot_dimension_numbers<[1], [0], [0], [1], [0, 0, 1, 1], [], []>} : vector<16x128xbf16>, vector<128x256xbf16>, vector<16x256xf32> -> vector<16x256xf32>
    %c2_63 = arith.constant 2 : index
    %c0_64 = arith.constant 0 : index
    %c0_65 = arith.constant 0 : index
    %122 = vector.load %arg3[%c2_63, %c0_64, %c0_65] : memref<4x1x256xf32, #tpu.memory_space<vmem>>, vector<1x1x256xf32>
    %123 = vector.shape_cast %122 : vector<1x1x256xf32> to vector<1x256xf32>
    %124 = vector.broadcast %123 : vector<1x256xf32> to vector<16x256xf32>
    %125 = arith.addf %121, %124 : vector<16x256xf32>
    %126 = vector.extract_strided_slice %125 {offsets = [0, 0], sizes = [16, 128], strides = [1, 1]} : vector<16x256xf32> to vector<16x128xf32>
    %127 = vector.extract_strided_slice %125 {offsets = [0, 128], sizes = [16, 128], strides = [1, 1]} : vector<16x256xf32> to vector<16x128xf32>
    %128 = vector.shape_cast %127 : vector<16x128xf32> to vector<16x1x128xf32>
    %129 = vector.shape_cast %126 : vector<16x128xf32> to vector<1x16x128xf32>
    %130 = vector.broadcast %128 : vector<16x1x128xf32> to vector<16x16x128xf32>
    %131 = vector.broadcast %129 : vector<1x16x128xf32> to vector<16x16x128xf32>
    %132 = arith.addf %130, %131 : vector<16x16x128xf32>
    %c2_66 = arith.constant 2 : index
    %c0_67 = arith.constant 0 : index
    %c0_68 = arith.constant 0 : index
    %c0_69 = arith.constant 0 : index
    %133 = vector.load %arg6[%c2_66, %c0_67, %c0_68, %c0_69] : memref<4x16x16x128xbf16, #tpu.memory_space<vmem>>, vector<1x16x16x128xbf16>
    %134 = vector.shape_cast %133 : vector<1x16x16x128xbf16> to vector<16x16x128xbf16>
    %135 = arith.extf %134 : vector<16x16x128xbf16> to vector<16x16x128xf32>
    %136 = arith.addf %132, %135 : vector<16x16x128xf32>
    %cst_70 = arith.constant 0.000000e+00 : f32
    %137 = vector.broadcast %cst_70 : f32 to vector<16x16x128xf32>
    %138 = arith.cmpf oge, %136, %137 : vector<16x16x128xf32>
    %cst_71 = arith.constant 2.000000e-01 : f32
    %139 = vector.broadcast %cst_71 : f32 to vector<16x16x128xf32>
    %140 = arith.mulf %139, %136 : vector<16x16x128xf32>
    %141 = arith.select %138, %136, %140 : vector<16x16x128xi1>, vector<16x16x128xf32>
    %c2_72 = arith.constant 2 : index
    %c0_73 = arith.constant 0 : index
    %c0_74 = arith.constant 0 : index
    %142 = vector.load %arg4[%c2_72, %c0_73, %c0_74] : memref<4x1x128xf32, #tpu.memory_space<vmem>>, vector<1x1x128xf32>
    %143 = vector.shape_cast %142 : vector<1x1x128xf32> to vector<1x128xf32>
    %144 = vector.shape_cast %143 : vector<1x128xf32> to vector<1x1x128xf32>
    %145 = vector.broadcast %144 : vector<1x1x128xf32> to vector<16x16x128xf32>
    %146 = arith.mulf %141, %145 : vector<16x16x128xf32>
    %cst_75 = arith.constant dense<0.000000e+00> : vector<16x16xf32>
    %147 = vector.multi_reduction <add>, %146, %cst_75 [2] : vector<16x16x128xf32> to vector<16x16xf32>
    %148 = arith.addf %147, %5 : vector<16x16xf32>
    %cst_76 = arith.constant dense<0xFF800000> : vector<16xf32>
    %149 = vector.multi_reduction <maximumf>, %148, %cst_76 [1] : vector<16x16xf32> to vector<16xf32>
    %150 = vector.shape_cast %149 : vector<16xf32> to vector<16x1xf32>
    %151 = vector.broadcast %150 : vector<16x1xf32> to vector<16x16xf32>
    %152 = arith.subf %148, %151 : vector<16x16xf32>
    %153 = math.exp %152 : vector<16x16xf32>
    %cst_77 = arith.constant dense<0.000000e+00> : vector<16xf32>
    %154 = vector.multi_reduction <add>, %153, %cst_77 [1] : vector<16x16xf32> to vector<16xf32>
    %155 = vector.shape_cast %154 : vector<16xf32> to vector<16x1xf32>
    %156 = tpu.reciprocal %155 {approx = true} : vector<16x1xf32> -> vector<16x1xf32>
    %157 = vector.broadcast %156 : vector<16x1xf32> to vector<16x16xf32>
    %158 = arith.mulf %153, %157 : vector<16x16xf32>
    %159 = arith.truncf %158 : vector<16x16xf32> to vector<16x16xbf16>
    %160 = arith.truncf %126 : vector<16x128xf32> to vector<16x128xbf16>
    %cst_78 = arith.constant dense<0.000000e+00> : vector<16x128xf32>
    %161 = tpu.matmul %159, %160, %cst_78 {dimension_numbers = #tpu.dot_dimension_numbers<[1], [0], [0], [1], [0, 0, 1, 1], [], []>} : vector<16x16xbf16>, vector<16x128xbf16>, vector<16x128xf32> -> vector<16x128xf32>
    %c2_79 = arith.constant 2 : index
    %c0_80 = arith.constant 0 : index
    %c0_81 = arith.constant 0 : index
    %162 = vector.load %arg5[%c2_79, %c0_80, %c0_81] : memref<4x1x128xf32, #tpu.memory_space<vmem>>, vector<1x1x128xf32>
    %163 = vector.shape_cast %162 : vector<1x1x128xf32> to vector<1x128xf32>
    %164 = vector.broadcast %163 : vector<1x128xf32> to vector<16x128xf32>
    %165 = arith.addf %161, %164 : vector<16x128xf32>
    %166 = arith.truncf %165 : vector<16x128xf32> to vector<16x128xbf16>
    %c3 = arith.constant 3 : index
    %c0_82 = arith.constant 0 : index
    %c0_83 = arith.constant 0 : index
    %167 = vector.load %arg2[%c3, %c0_82, %c0_83] : memref<4x128x256xbf16, #tpu.memory_space<vmem>>, vector<1x128x256xbf16>
    %168 = vector.shape_cast %167 : vector<1x128x256xbf16> to vector<128x256xbf16>
    %cst_84 = arith.constant dense<0.000000e+00> : vector<16x256xf32>
    %169 = tpu.matmul %166, %168, %cst_84 {dimension_numbers = #tpu.dot_dimension_numbers<[1], [0], [0], [1], [0, 0, 1, 1], [], []>} : vector<16x128xbf16>, vector<128x256xbf16>, vector<16x256xf32> -> vector<16x256xf32>
    %c3_85 = arith.constant 3 : index
    %c0_86 = arith.constant 0 : index
    %c0_87 = arith.constant 0 : index
    %170 = vector.load %arg3[%c3_85, %c0_86, %c0_87] : memref<4x1x256xf32, #tpu.memory_space<vmem>>, vector<1x1x256xf32>
    %171 = vector.shape_cast %170 : vector<1x1x256xf32> to vector<1x256xf32>
    %172 = vector.broadcast %171 : vector<1x256xf32> to vector<16x256xf32>
    %173 = arith.addf %169, %172 : vector<16x256xf32>
    %174 = vector.extract_strided_slice %173 {offsets = [0, 0], sizes = [16, 128], strides = [1, 1]} : vector<16x256xf32> to vector<16x128xf32>
    %175 = vector.extract_strided_slice %173 {offsets = [0, 128], sizes = [16, 128], strides = [1, 1]} : vector<16x256xf32> to vector<16x128xf32>
    %176 = vector.shape_cast %175 : vector<16x128xf32> to vector<16x1x128xf32>
    %177 = vector.shape_cast %174 : vector<16x128xf32> to vector<1x16x128xf32>
    %178 = vector.broadcast %176 : vector<16x1x128xf32> to vector<16x16x128xf32>
    %179 = vector.broadcast %177 : vector<1x16x128xf32> to vector<16x16x128xf32>
    %180 = arith.addf %178, %179 : vector<16x16x128xf32>
    %c3_88 = arith.constant 3 : index
    %c0_89 = arith.constant 0 : index
    %c0_90 = arith.constant 0 : index
    %c0_91 = arith.constant 0 : index
    %181 = vector.load %arg6[%c3_88, %c0_89, %c0_90, %c0_91] : memref<4x16x16x128xbf16, #tpu.memory_space<vmem>>, vector<1x16x16x128xbf16>
    %182 = vector.shape_cast %181 : vector<1x16x16x128xbf16> to vector<16x16x128xbf16>
    %183 = arith.extf %182 : vector<16x16x128xbf16> to vector<16x16x128xf32>
    %184 = arith.addf %180, %183 : vector<16x16x128xf32>
    %cst_92 = arith.constant 0.000000e+00 : f32
    %185 = vector.broadcast %cst_92 : f32 to vector<16x16x128xf32>
    %186 = arith.cmpf oge, %184, %185 : vector<16x16x128xf32>
    %cst_93 = arith.constant 2.000000e-01 : f32
    %187 = vector.broadcast %cst_93 : f32 to vector<16x16x128xf32>
    %188 = arith.mulf %187, %184 : vector<16x16x128xf32>
    %189 = arith.select %186, %184, %188 : vector<16x16x128xi1>, vector<16x16x128xf32>
    %c3_94 = arith.constant 3 : index
    %c0_95 = arith.constant 0 : index
    %c0_96 = arith.constant 0 : index
    %190 = vector.load %arg4[%c3_94, %c0_95, %c0_96] : memref<4x1x128xf32, #tpu.memory_space<vmem>>, vector<1x1x128xf32>
    %191 = vector.shape_cast %190 : vector<1x1x128xf32> to vector<1x128xf32>
    %192 = vector.shape_cast %191 : vector<1x128xf32> to vector<1x1x128xf32>
    %193 = vector.broadcast %192 : vector<1x1x128xf32> to vector<16x16x128xf32>
    %194 = arith.mulf %189, %193 : vector<16x16x128xf32>
    %cst_97 = arith.constant dense<0.000000e+00> : vector<16x16xf32>
    %195 = vector.multi_reduction <add>, %194, %cst_97 [2] : vector<16x16x128xf32> to vector<16x16xf32>
    %196 = arith.addf %195, %5 : vector<16x16xf32>
    %cst_98 = arith.constant dense<0xFF800000> : vector<16xf32>
    %197 = vector.multi_reduction <maximumf>, %196, %cst_98 [1] : vector<16x16xf32> to vector<16xf32>
    %198 = vector.shape_cast %197 : vector<16xf32> to vector<16x1xf32>
    %199 = vector.broadcast %198 : vector<16x1xf32> to vector<16x16xf32>
    %200 = arith.subf %196, %199 : vector<16x16xf32>
    %201 = math.exp %200 : vector<16x16xf32>
    %cst_99 = arith.constant dense<0.000000e+00> : vector<16xf32>
    %202 = vector.multi_reduction <add>, %201, %cst_99 [1] : vector<16x16xf32> to vector<16xf32>
    %203 = vector.shape_cast %202 : vector<16xf32> to vector<16x1xf32>
    %204 = tpu.reciprocal %203 {approx = true} : vector<16x1xf32> -> vector<16x1xf32>
    %205 = vector.broadcast %204 : vector<16x1xf32> to vector<16x16xf32>
    %206 = arith.mulf %201, %205 : vector<16x16xf32>
    %207 = arith.truncf %206 : vector<16x16xf32> to vector<16x16xbf16>
    %208 = arith.truncf %174 : vector<16x128xf32> to vector<16x128xbf16>
    %cst_100 = arith.constant dense<0.000000e+00> : vector<16x128xf32>
    %209 = tpu.matmul %207, %208, %cst_100 {dimension_numbers = #tpu.dot_dimension_numbers<[1], [0], [0], [1], [0, 0, 1, 1], [], []>} : vector<16x16xbf16>, vector<16x128xbf16>, vector<16x128xf32> -> vector<16x128xf32>
    %c3_101 = arith.constant 3 : index
    %c0_102 = arith.constant 0 : index
    %c0_103 = arith.constant 0 : index
    %210 = vector.load %arg5[%c3_101, %c0_102, %c0_103] : memref<4x1x128xf32, #tpu.memory_space<vmem>>, vector<1x1x128xf32>
    %211 = vector.shape_cast %210 : vector<1x1x128xf32> to vector<1x128xf32>
    %212 = vector.broadcast %211 : vector<1x128xf32> to vector<16x128xf32>
    %213 = arith.addf %209, %212 : vector<16x128xf32>
    %c0_104 = arith.constant 0 : index
    %c0_105 = arith.constant 0 : index
    %214 = vector.load %arg11[%c0_104, %c0_105] : memref<16x128xf32, #tpu.memory_space<vmem>>, vector<16x128xf32>
    tpu.vector_store %arg11[%c0_104, %c0_105], %213 {strides = array<i32>} : memref<16x128xf32, #tpu.memory_space<vmem>>, vector<16x128xf32>,
    return
  }
}

</mosaic_0001>

<llo_original>
// kernel: tpu_custom_call.1
$region0: #{tpu_custom_call.1}
  #allocation0 [shape = 'u32[]', space=smem, size = 0x4, offset = 0x4, fixed_abs, tag = 'smem constant byte address 0x4 - core index']
  #allocation1 [shape = 'u32[72,128]{1,0:T(1,128)}', space=vmem, size = 0x9000, scoped, tag = 'internal scratch']
  %s0 = inlined_call_operand.hbm [shape: f32[16,128], index: 0, kind: input, shape index: {}]
  %s1 = inlined_call_operand.hbm [shape: f32[16,16], index: 1, kind: input, shape index: {}]
  %s2 = inlined_call_operand.hbm [shape: bf16[4,128,256], index: 2, kind: input, shape index: {}]
  %s3 = inlined_call_operand.hbm [shape: f32[4,1,256], index: 3, kind: input, shape index: {}]
  %s4 = inlined_call_operand.hbm [shape: f32[4,1,128], index: 4, kind: input, shape index: {}]
  %s5 = inlined_call_operand.vmem [shape: f32[4,1,128], index: 5, kind: input, shape index: {}]
  %s6 = inlined_call_operand.hbm [shape: bf16[4,16,16,128], index: 6, kind: input, shape index: {}]
  %s7 = inlined_call_operand.hbm [shape: bf16[128,256], index: 7, kind: input, shape index: {}]
  %s8 = inlined_call_operand.vmem [shape: f32[1,256], index: 8, kind: input, shape index: {}]
  %s9 = inlined_call_operand.hbm [shape: f32[16,128], index: 9, kind: input, shape index: {}]
  %s10 = inlined_call_operand.hbm [shape: f32[16,128], index: 10, kind: output, shape index: {0}]
  %s11 = inlined_call_operand.hbm [shape: f32[16,128], index: 11, kind: output, shape index: {1}]
  %12 = xla_tuple %s10, %s11
  %s13 = sld [smem:[#allocation0]]
  $region90: #{tpu_custom_call.1} parent=0
    _
  %s15 = ssub.s32 1, %s13
  %s16 = scalar_select 0, %s15, %s13
  $region1: #{tpu_custom_call.1} parent=0
    #allocation2 [shape = 'u8[8192]{0}', space=vmem, size = 0x2000, scoped, tag = 'input window, operand 0, single buffered']
    #allocation3 [shape = 's32[1]{0}', space=sflag, size = 0x4, scoped, tag = 'scoped memory for tpu_custom_call.1']
    #allocation4 [shape = 's32[1]{0}', space=sflag, size = 0x4, scoped, tag = 'scoped memory for tpu_custom_call.1']
    #allocation5 [shape = 'u8[8192]{0}', space=vmem, size = 0x2000, scoped, tag = 'input window, operand 1, single buffered']
    #allocation6 [shape = 's32[1]{0}', space=sflag, size = 0x4, scoped, tag = 'scoped memory for tpu_custom_call.1']
    #allocation7 [shape = 'u8[262144]{0}', space=vmem, size = 0x40000, scoped, tag = 'input window, operand 2, single buffered']
    #allocation8 [shape = 'u8[4096]{0}', space=vmem, size = 0x1000, scoped, tag = 'input window, operand 3, single buffered']
    #allocation9 [shape = 's32[1]{0}', space=sflag, size = 0x4, scoped, tag = 'scoped memory for tpu_custom_call.1']
    #allocation10 [shape = 'u8[2048]{0}', space=vmem, size = 0x800, scoped, tag = 'input window, operand 4, single buffered']
    #allocation11 [shape = 'u8[262144]{0}', space=vmem, size = 0x40000, scoped, tag = 'input window, operand 6, single buffered']
    #allocation12 [shape = 's32[1]{0}', space=sflag, size = 0x4, scoped, tag = 'scoped memory for tpu_custom_call.1']
    #allocation13 [shape = 'u8[65536]{0}', space=vmem, size = 0x10000, scoped, tag = 'input window, operand 7, single buffered']
    #allocation14 [shape = 'u8[8192]{0}', space=vmem, size = 0x2000, scoped, tag = 'input window, operand 9, single buffered']
    #allocation15 [shape = 's32[1]{0}', space=sflag, size = 0x4, scoped, tag = 'scoped memory for tpu_custom_call.1']
    #allocation16 [shape = 'u8[8192]{0}', space=vmem, size = 0x2000, scoped, tag = 'output window, operand 0, single buffered']
    #allocation17 [shape = 'u8[8192]{0}', space=vmem, size = 0x2000, scoped, tag = 'output window, operand 1, single buffered']
    #allocation18 [shape = 's32[1]{0}', space=sflag, size = 0x4, scoped, tag = 'scoped memory for tpu_custom_call.1']
    %17 = vsyncpa [#allocation3], 0
    %18 = vsyncpa [#allocation6], 0
    %19 = vsyncpa [#allocation9], 0
    %20 = vsyncpa [#allocation12], 0
    %21 = vsyncpa [#allocation15], 0
    %22 = vsyncpa [#allocation4], 0
    %23 = vsyncpa [#allocation18], 0
    // Predicated region
    $region2: #{tpu_custom_call.1} parent=1 // pred_check
      _
    $region3: #{tpu_custom_call.1} parent=1 // pred_check_branch
      %25 = sbr.rel (0) target = $region5
    $region4: #{tpu_custom_call.1} parent=1 // pred_region
      %27 = vsyncadd [#allocation3], 0
      %s28 = sshll.u32 %s0, 4
      %s29 = int_to_ptr.hbm [resolvable:$true] %s28
      %s30 = sshll.u32 [#allocation2], 4
      %s31 = int_to_ptr.vmem [resolvable:$true] %s30
      %36 = dma.hbm_to_vmem [thread:$0]  %s29, 256, %s31, [#allocation3], 128, 128, 8
    $region5: #{tpu_custom_call.1} parent=1 // pred_fallthru
      _
    // Predicated region
    $region6: #{tpu_custom_call.1} parent=1 // pred_check
      _
    $region7: #{tpu_custom_call.1} parent=1 // pred_check_branch
      %38 = sbr.rel (0) target = $region9
    $region8: #{tpu_custom_call.1} parent=1 // pred_region
      %40 = vsyncadd [#allocation6], 0
      %s41 = sshll.u32 %s1, 4
      %s42 = int_to_ptr.hbm [resolvable:$true] %s41
      %s43 = sshll.u32 [#allocation5], 4
      %s44 = int_to_ptr.vmem [resolvable:$true] %s43
      %49 = dma.hbm_to_vmem [thread:$0]  %s42, 256, %s44, [#allocation6], 128, 128, 8
    $region9: #{tpu_custom_call.1} parent=1 // pred_fallthru
      _
    // Predicated region
    $region10: #{tpu_custom_call.1} parent=1 // pred_check
      _
    $region11: #{tpu_custom_call.1} parent=1 // pred_check_branch
      %51 = sbr.rel (0) target = $region13
    $region12: #{tpu_custom_call.1} parent=1 // pred_region
      %53 = vsyncadd [#allocation6], 0
      %s54 = sshll.u32 %s2, 4
      %s55 = int_to_ptr.hbm [resolvable:$true] %s54
      %s56 = sshll.u32 [#allocation7], 4
      %s57 = int_to_ptr.vmem [resolvable:$true] %s56
      %62 = dma.hbm_to_vmem [thread:$0]  %s55, 8192, %s57, [#allocation6], 128, 128, 8
    $region13: #{tpu_custom_call.1} parent=1 // pred_fallthru
      _
    // Predicated region
    $region14: #{tpu_custom_call.1} parent=1 // pred_check
      _
    $region15: #{tpu_custom_call.1} parent=1 // pred_check_branch
      %64 = sbr.rel (0) target = $region17
    $region16: #{tpu_custom_call.1} parent=1 // pred_region
      %66 = vsyncadd [#allocation9], 0
      %s67 = sshll.u32 %s3, 4
      %s68 = int_to_ptr.hbm [resolvable:$true] %s67
      %s69 = sshll.u32 [#allocation8], 4
      %s70 = int_to_ptr.vmem [resolvable:$true] %s69
      %75 = dma.hbm_to_vmem [thread:$0]  %s68, 128, %s70, [#allocation9], 32, 32, 2
    $region17: #{tpu_custom_call.1} parent=1 // pred_fallthru
      _
    // Predicated region
    $region18: #{tpu_custom_call.1} parent=1 // pred_check
      _
    $region19: #{tpu_custom_call.1} parent=1 // pred_check_branch
      %77 = sbr.rel (0) target = $region21
    $region20: #{tpu_custom_call.1} parent=1 // pred_region
      %79 = vsyncadd [#allocation9], 0
      %s80 = sshll.u32 %s4, 4
      %s81 = int_to_ptr.hbm [resolvable:$true] %s80
      %s82 = sshll.u32 [#allocation10], 4
      %s83 = int_to_ptr.vmem [resolvable:$true] %s82
      %88 = dma.hbm_to_vmem [thread:$0]  %s81, 64, %s83, [#allocation9], 16, 16, 1
    $region21: #{tpu_custom_call.1} parent=1 // pred_fallthru
      _
    // Predicated region
    $region22: #{tpu_custom_call.1} parent=1 // pred_check
      _
    $region23: #{tpu_custom_call.1} parent=1 // pred_check_branch
      %90 = sbr.rel (0) target = $region25
    $region24: #{tpu_custom_call.1} parent=1 // pred_region
      _
    $region25: #{tpu_custom_call.1} parent=1 // pred_fallthru
      _
    // Predicated region
    $region26: #{tpu_custom_call.1} parent=1 // pred_check
      _
    $region27: #{tpu_custom_call.1} parent=1 // pred_check_branch
      %92 = sbr.rel (0) target = $region29
    $region28: #{tpu_custom_call.1} parent=1 // pred_region
      %94 = vsyncadd [#allocation12], 0
      %s95 = sshll.u32 %s6, 4
      %s96 = int_to_ptr.hbm [resolvable:$true] %s95
      %s97 = sshll.u32 [#allocation11], 4
      %s98 = int_to_ptr.vmem [resolvable:$true] %s97
      %103 = dma.hbm_to_vmem [thread:$0]  %s96, 8192, %s98, [#allocation12], 64, 64, 4
    $region29: #{tpu_custom_call.1} parent=1 // pred_fallthru
      _
    // Predicated region
    $region30: #{tpu_custom_call.1} parent=1 // pred_check
      _
    $region31: #{tpu_custom_call.1} parent=1 // pred_check_branch
      %105 = sbr.rel (0) target = $region33
    $region32: #{tpu_custom_call.1} parent=1 // pred_region
      %107 = vsyncadd [#allocation12], 0
      %s108 = sshll.u32 %s7, 4
      %s109 = int_to_ptr.hbm [resolvable:$true] %s108
      %s110 = sshll.u32 [#allocation13], 4
      %s111 = int_to_ptr.vmem [resolvable:$true] %s110
      %116 = dma.hbm_to_vmem [thread:$0]  %s109, 2048, %s111, [#allocation12], 128, 128, 8
    $region33: #{tpu_custom_call.1} parent=1 // pred_fallthru
      _
    // Predicated region
    $region34: #{tpu_custom_call.1} parent=1 // pred_check
      _
    $region35: #{tpu_custom_call.1} parent=1 // pred_check_branch
      %118 = sbr.rel (0) target = $region37
    $region36: #{tpu_custom_call.1} parent=1 // pred_region
      _
    $region37: #{tpu_custom_call.1} parent=1 // pred_fallthru
      _
    // Predicated region
    $region38: #{tpu_custom_call.1} parent=1 // pred_check
      _
    $region39: #{tpu_custom_call.1} parent=1 // pred_check_branch
      %120 = sbr.rel (0) target = $region41
    $region40: #{tpu_custom_call.1} parent=1 // pred_region
      %122 = vsyncadd [#allocation15], 0
      %s123 = sshll.u32 %s9, 4
      %s124 = int_to_ptr.hbm [resolvable:$true] %s123
      %s125 = sshll.u32 [#allocation14], 4
      %s126 = int_to_ptr.vmem [resolvable:$true] %s125
      %131 = dma.hbm_to_vmem [thread:$0]  %s124, 256, %s126, [#allocation15], 128, 128, 8
    $region41: #{tpu_custom_call.1} parent=1 // pred_fallthru
      _
    // Predicated region
    $region42: #{tpu_custom_call.1} parent=1 // pred_check
      _
    $region43: #{tpu_custom_call.1} parent=1 // pred_check_branch
      %133 = sbr.rel (0) target = $region45
    $region44: #{tpu_custom_call.1} parent=1 // pred_region
      %135 = dma.done [#allocation3], 256
    $region45: #{tpu_custom_call.1} parent=1 // pred_fallthru
      _
    // Predicated region
    $region46: #{tpu_custom_call.1} parent=1 // pred_check
      _
    $region47: #{tpu_custom_call.1} parent=1 // pred_check_branch
      %137 = sbr.rel (0) target = $region49
    $region48: #{tpu_custom_call.1} parent=1 // pred_region
      %139 = dma.done [#allocation6], 256
    $region49: #{tpu_custom_call.1} parent=1 // pred_fallthru
      _
    // Predicated region
    $region50: #{tpu_custom_call.1} parent=1 // pred_check
      _
    $region51: #{tpu_custom_call.1} parent=1 // pred_check_branch
      %141 = sbr.rel (0) target = $region53
    $region52: #{tpu_custom_call.1} parent=1 // pred_region
      %143 = dma.done [#allocation6], 8192
    $region53: #{tpu_custom_call.1} parent=1 // pred_fallthru
      _
    // Predicated region
    $region54: #{tpu_custom_call.1} parent=1 // pred_check
      _
    $region55: #{tpu_custom_call.1} parent=1 // pred_check_branch
      %145 = sbr.rel (0) target = $region57
    $region56: #{tpu_custom_call.1} parent=1 // pred_region
      %147 = dma.done [#allocation9], 128
    $region57: #{tpu_custom_call.1} parent=1 // pred_fallthru
      _
    // Predicated region
    $region58: #{tpu_custom_call.1} parent=1 // pred_check
      _
    $region59: #{tpu_custom_call.1} parent=1 // pred_check_branch
      %149 = sbr.rel (0) target = $region61
    $region60: #{tpu_custom_call.1} parent=1 // pred_region
      %151 = dma.done [#allocation9], 64
    $region61: #{tpu_custom_call.1} parent=1 // pred_fallthru
      _
    // Predicated region
    $region62: #{tpu_custom_call.1} parent=1 // pred_check
      _
    $region63: #{tpu_custom_call.1} parent=1 // pred_check_branch
      %153 = sbr.rel (0) target = $region65
    $region64: #{tpu_custom_call.1} parent=1 // pred_region
      %155 = dma.done [#allocation12], 8192
    $region65: #{tpu_custom_call.1} parent=1 // pred_fallthru
      _
    // Predicated region
    $region66: #{tpu_custom_call.1} parent=1 // pred_check
      _
    $region67: #{tpu_custom_call.1} parent=1 // pred_check_branch
      %157 = sbr.rel (0) target = $region69
    $region68: #{tpu_custom_call.1} parent=1 // pred_region
      %159 = dma.done [#allocation12], 2048
    $region69: #{tpu_custom_call.1} parent=1 // pred_fallthru
      _
    // Predicated region
    $region70: #{tpu_custom_call.1} parent=1 // pred_check
      _
    $region71: #{tpu_custom_call.1} parent=1 // pred_check_branch
      %161 = sbr.rel (0) target = $region73
    $region72: #{tpu_custom_call.1} parent=1 // pred_region
      %163 = dma.done [#allocation15], 256
    $region73: #{tpu_custom_call.1} parent=1 // pred_fallthru
      _
    %v165 = vld [vmem:[#allocation5] sm:$0xff]
    %v166 = vld [vmem:[#allocation5 + $0x8] sm:$0xff]
    %vm167 = vcmp.gt.f32.partialorder %v165, 0.5
    %vm168 = vcmp.gt.f32.partialorder %v166, 0.5
    %v169 = vsel %vm167, 0.0, -1e+30
    %v170 = vsel %vm168, 0.0, -1e+30
    %v171 = vld [vmem:[#allocation2] sm:$0xff]
    %v172 = vld [vmem:[#allocation2 + $0x8] sm:$0xff]
    %v173 = vpack.c.bf16 %v172, %v171
    %v174 = vld [vmem:[#allocation7] sm:$0xff]
    %v175 = vld [vmem:[#allocation7 + $0x8] sm:$0xff]
    %v176 = vld [vmem:[#allocation7 + $0x10] sm:$0xff]
    %v177 = vld [vmem:[#allocation7 + $0x18] sm:$0xff]
    %v178 = vld [vmem:[#allocation7 + $0x20] sm:$0xff]
    %v179 = vld [vmem:[#allocation7 + $0x28] sm:$0xff]
    %v180 = vld [vmem:[#allocation7 + $0x30] sm:$0xff]
    %v181 = vld [vmem:[#allocation7 + $0x38] sm:$0xff]
    %v182 = vld [vmem:[#allocation7 + $0x40] sm:$0xff]
    %v183 = vld [vmem:[#allocation7 + $0x48] sm:$0xff]
    %v184 = vld [vmem:[#allocation7 + $0x50] sm:$0xff]
    %v185 = vld [vmem:[#allocation7 + $0x58] sm:$0xff]
    %v186 = vld [vmem:[#allocation7 + $0x60] sm:$0xff]
    %v187 = vld [vmem:[#allocation7 + $0x68] sm:$0xff]
    %v188 = vld [vmem:[#allocation7 + $0x70] sm:$0xff]
    %v189 = vld [vmem:[#allocation7 + $0x78] sm:$0xff]
    %v190 = vld [vmem:[#allocation8] sm:$0x3]
    %v192 = vperm.slane %v190, 0
    %v193 = vperm.slane %v190, 1
    %v212 = vunpack.c.l.b16 %v174
    %v213 = vunpack.c.h.b16 %v174
    %v214 = vunpack.c.l.b16 %v175
    %v215 = vunpack.c.h.b16 %v175
    %v216 = vunpack.c.l.b16 %v176
    %v217 = vunpack.c.h.b16 %v176
    %v218 = vunpack.c.l.b16 %v177
    %v219 = vunpack.c.h.b16 %v177
    %v220 = vunpack.c.l.b16 %v178
    %v221 = vunpack.c.h.b16 %v178
    %v222 = vunpack.c.l.b16 %v179
    %v223 = vunpack.c.h.b16 %v179
    %v224 = vunpack.c.l.b16 %v180
    %v225 = vunpack.c.h.b16 %v180
    %v226 = vunpack.c.l.b16 %v181
    %v227 = vunpack.c.h.b16 %v181
    %v228 = vunpack.c.l.b16 %v182
    %v229 = vunpack.c.h.b16 %v182
    %v230 = vunpack.c.l.b16 %v183
    %v231 = vunpack.c.h.b16 %v183
    %v232 = vunpack.c.l.b16 %v184
    %v233 = vunpack.c.h.b16 %v184
    %v234 = vunpack.c.l.b16 %v185
    %v235 = vunpack.c.h.b16 %v185
    %v236 = vunpack.c.l.b16 %v186
    %v237 = vunpack.c.h.b16 %v186
    %v238 = vunpack.c.l.b16 %v187
    %v239 = vunpack.c.h.b16 %v187
    %v240 = vunpack.c.l.b16 %v188
    %v241 = vunpack.c.h.b16 %v188
    %v242 = vunpack.c.l.b16 %v189
    %v243 = vunpack.c.h.b16 %v189
    %v244 = vpack.c.b16 %v214, %v212
    %v245 = vpack.c.b16 %v215, %v213
    %v246 = vpack.c.b16 %v218, %v216
    %v247 = vpack.c.b16 %v219, %v217
    %v248 = vpack.c.b16 %v222, %v220
    %v249 = vpack.c.b16 %v223, %v221
    %v250 = vpack.c.b16 %v226, %v224
    %v251 = vpack.c.b16 %v227, %v225
    %v252 = vpack.c.b16 %v230, %v228
    %v253 = vpack.c.b16 %v231, %v229
    %v254 = vpack.c.b16 %v234, %v232
    %v255 = vpack.c.b16 %v235, %v233
    %v256 = vpack.c.b16 %v238, %v236
    %v257 = vpack.c.b16 %v239, %v237
    %v258 = vpack.c.b16 %v242, %v240
    %v259 = vpack.c.b16 %v243, %v241
    %276 = vmatpush.bf16.msra.mxu0 %v258
    %277 = vmatpush.bf16.msra.mxu0 %v256
    %278 = vmatpush.bf16.msra.mxu0 %v254
    %279 = vmatpush.bf16.msra.mxu0 %v252
    %280 = vmatpush.bf16.msra.mxu0 %v250
    %281 = vmatpush.bf16.msra.mxu0 %v248
    %282 = vmatpush.bf16.msra.mxu0 %v246
    %283 = vmatpush.bf16.msra.mxu0 %v244
    %284 = vmatmul.bf16.gmra.mxu0 %v173
    %v285 = vpop.f32.mrf.mxu0
    %v286 = vadd.f32 %v192, %v285
    %v287 = vpop.f32.mrf.mxu0
    %v288 = vadd.f32 %v192, %v287
    %289 = vdwg.mxu0
    %290 = vmatpush.bf16.msra.mxu0 %v259
    %291 = vmatpush.bf16.msra.mxu0 %v257
    %292 = vmatpush.bf16.msra.mxu0 %v255
    %293 = vmatpush.bf16.msra.mxu0 %v253
    %294 = vmatpush.bf16.msra.mxu0 %v251
    %295 = vmatpush.bf16.msra.mxu0 %v249
    %296 = vmatpush.bf16.msra.mxu0 %v247
    %297 = vmatpush.bf16.msra.mxu0 %v245
    %298 = vmatmul.bf16.gmra.mxu0 %v173
    %v299 = vpop.f32.mrf.mxu0
    %v300 = vadd.f32 %v193, %v299
    %v301 = vpop.f32.mrf.mxu0
    %v302 = vadd.f32 %v193, %v301
    %303 = vdwg.mxu0
    %v306 = vrot.slane %v300, 1
    %v307 = vrot.slane %v300, 2
    %v308 = vrot.slane %v300, 3
    %v309 = vrot.slane %v300, 4
    %v310 = vrot.slane %v300, 5
    %v311 = vrot.slane %v300, 6
    %v312 = vrot.slane %v300, 7
    %v313 = vrot.slane %v302, 1
    %v314 = vrot.slane %v302, 2
    %v315 = vrot.slane %v302, 3
    %v316 = vrot.slane %v302, 4
    %v317 = vrot.slane %v302, 5
    %v318 = vrot.slane %v302, 6
    %v319 = vrot.slane %v302, 7
    %v320 = vperm.slane %v300, 0
    %v321 = vperm.slane %v306, 0
    %v322 = vperm.slane %v307, 0
    %v323 = vperm.slane %v308, 0
    %v324 = vperm.slane %v309, 0
    %v325 = vperm.slane %v310, 0
    %v326 = vperm.slane %v311, 0
    %v327 = vperm.slane %v312, 0
    %v328 = vperm.slane %v302, 0
    %v329 = vperm.slane %v313, 0
    %v330 = vperm.slane %v314, 0
    %v331 = vperm.slane %v315, 0
    %v332 = vperm.slane %v316, 0
    %v333 = vperm.slane %v317, 0
    %v334 = vperm.slane %v318, 0
    %v335 = vperm.slane %v319, 0
    %v352 = vadd.f32 %v320, %v286
    %v353 = vadd.f32 %v320, %v288
    %v354 = vadd.f32 %v321, %v286
    %v355 = vadd.f32 %v321, %v288
    %v356 = vadd.f32 %v322, %v286
    %v357 = vadd.f32 %v322, %v288
    %v358 = vadd.f32 %v323, %v286
    %v359 = vadd.f32 %v323, %v288
    %v360 = vadd.f32 %v324, %v286
    %v361 = vadd.f32 %v324, %v288
    %v362 = vadd.f32 %v325, %v286
    %v363 = vadd.f32 %v325, %v288
    %v364 = vadd.f32 %v326, %v286
    %v365 = vadd.f32 %v326, %v288
    %v366 = vadd.f32 %v327, %v286
    %v367 = vadd.f32 %v327, %v288
    %v368 = vadd.f32 %v328, %v286
    %v369 = vadd.f32 %v328, %v288
    %v370 = vadd.f32 %v329, %v286
    %v371 = vadd.f32 %v329, %v288
    %v372 = vadd.f32 %v330, %v286
    %v373 = vadd.f32 %v330, %v288
    %v374 = vadd.f32 %v331, %v286
    %v375 = vadd.f32 %v331, %v288
    %v376 = vadd.f32 %v332, %v286
    %v377 = vadd.f32 %v332, %v288
    %v378 = vadd.f32 %v333, %v286
    %v379 = vadd.f32 %v333, %v288
    %v380 = vadd.f32 %v334, %v286
    %v381 = vadd.f32 %v334, %v288
    %v382 = vadd.f32 %v335, %v286
    %v383 = vadd.f32 %v335, %v288
    %v384 = vld [vmem:[#allocation11] sm:$0xf]
    %v385 = vld [vmem:[#allocation11 + $0x4] sm:$0xf]
    %v386 = vld [vmem:[#allocation11 + $0x8] sm:$0xf]
    %v387 = vld [vmem:[#allocation11 + $0xc] sm:$0xf]
    %v388 = vld [vmem:[#allocation11 + $0x10] sm:$0xf]
    %v389 = vld [vmem:[#allocation11 + $0x14] sm:$0xf]
    %v390 = vld [vmem:[#allocation11 + $0x18] sm:$0xf]
    %v391 = vld [vmem:[#allocation11 + $0x1c] sm:$0xf]
    %v392 = vld [vmem:[#allocation11 + $0x20] sm:$0xf]
    %v393 = vld [vmem:[#allocation11 + $0x24] sm:$0xf]
    %v394 = vld [vmem:[#allocation11 + $0x28] sm:$0xf]
    %v395 = vld [vmem:[#allocation11 + $0x2c] sm:$0xf]
    %v396 = vld [vmem:[#allocation11 + $0x30] sm:$0xf]
    %v397 = vld [vmem:[#allocation11 + $0x34] sm:$0xf]
    %v398 = vld [vmem:[#allocation11 + $0x38] sm:$0xf]
    %v399 = vld [vmem:[#allocation11 + $0x3c] sm:$0xf]
    %v400 = vld [vmem:[#allocation11 + $0x40] sm:$0xf]
    %v401 = vld [vmem:[#allocation11 + $0x44] sm:$0xf]
    %v402 = vld [vmem:[#allocation11 + $0x48] sm:$0xf]
    %v403 = vld [vmem:[#allocation11 + $0x4c] sm:$0xf]
    %v404 = vld [vmem:[#allocation11 + $0x50] sm:$0xf]
    %v405 = vld [vmem:[#allocation11 + $0x54] sm:$0xf]
    %v406 = vld [vmem:[#allocation11 + $0x58] sm:$0xf]
    %v407 = vld [vmem:[#allocation11 + $0x5c] sm:$0xf]
    %v408 = vld [vmem:[#allocation11 + $0x60] sm:$0xf]
    %v409 = vld [vmem:[#allocation11 + $0x64] sm:$0xf]
    %v410 = vld [vmem:[#allocation11 + $0x68] sm:$0xf]
    %v411 = vld [vmem:[#allocation11 + $0x6c] sm:$0xf]
    %v412 = vld [vmem:[#allocation11 + $0x70] sm:$0xf]
    %v413 = vld [vmem:[#allocation11 + $0x74] sm:$0xf]
    %v414 = vld [vmem:[#allocation11 + $0x78] sm:$0xf]
    %v415 = vld [vmem:[#allocation11 + $0x7c] sm:$0xf]
    %v416 = vunpack.c.l.bf16 %v384
    %v417 = vunpack.c.l.bf16 %v385
    %v418 = vunpack.c.l.bf16 %v386
    %v419 = vunpack.c.l.bf16 %v387
    %v420 = vunpack.c.l.bf16 %v388
    %v421 = vunpack.c.l.bf16 %v389
    %v422 = vunpack.c.l.bf16 %v390
    %v423 = vunpack.c.l.bf16 %v391
    %v424 = vunpack.c.l.bf16 %v392
    %v425 = vunpack.c.l.bf16 %v393
    %v426 = vunpack.c.l.bf16 %v394
    %v427 = vunpack.c.l.bf16 %v395
    %v428 = vunpack.c.l.bf16 %v396
    %v429 = vunpack.c.l.bf16 %v397
    %v430 = vunpack.c.l.bf16 %v398
    %v431 = vunpack.c.l.bf16 %v399
    %v432 = vunpack.c.l.bf16 %v400
    %v433 = vunpack.c.l.bf16 %v401
    %v434 = vunpack.c.l.bf16 %v402
    %v435 = vunpack.c.l.bf16 %v403
    %v436 = vunpack.c.l.bf16 %v404
    %v437 = vunpack.c.l.bf16 %v405
    %v438 = vunpack.c.l.bf16 %v406
    %v439 = vunpack.c.l.bf16 %v407
    %v440 = vunpack.c.l.bf16 %v408
    %v441 = vunpack.c.l.bf16 %v409
    %v442 = vunpack.c.l.bf16 %v410
    %v443 = vunpack.c.l.bf16 %v411
    %v444 = vunpack.c.l.bf16 %v412
    %v445 = vunpack.c.l.bf16 %v413
    %v446 = vunpack.c.l.bf16 %v414
    %v447 = vunpack.c.l.bf16 %v415
    %v448 = vadd.f32 %v352, %v416
    %v449 = vadd.f32 %v353, %v417
    %v450 = vadd.f32 %v354, %v418
    %v451 = vadd.f32 %v355, %v419
    %v452 = vadd.f32 %v356, %v420
    %v453 = vadd.f32 %v357, %v421
    %v454 = vadd.f32 %v358, %v422
    %v455 = vadd.f32 %v359, %v423
    %v456 = vadd.f32 %v360, %v424
    %v457 = vadd.f32 %v361, %v425
    %v458 = vadd.f32 %v362, %v426
    %v459 = vadd.f32 %v363, %v427
    %v460 = vadd.f32 %v364, %v428
    %v461 = vadd.f32 %v365, %v429
    %v462 = vadd.f32 %v366, %v430
    %v463 = vadd.f32 %v367, %v431
    %v464 = vadd.f32 %v368, %v432
    %v465 = vadd.f32 %v369, %v433
    %v466 = vadd.f32 %v370, %v434
    %v467 = vadd.f32 %v371, %v435
    %v468 = vadd.f32 %v372, %v436
    %v469 = vadd.f32 %v373, %v437
    %v470 = vadd.f32 %v374, %v438
    %v471 = vadd.f32 %v375, %v439
    %v472 = vadd.f32 %v376, %v440
    %v473 = vadd.f32 %v377, %v441
    %v474 = vadd.f32 %v378, %v442
    %v475 = vadd.f32 %v379, %v443
    %v476 = vadd.f32 %v380, %v444
    %v477 = vadd.f32 %v381, %v445
    %v478 = vadd.f32 %v382, %v446
    %v479 = vadd.f32 %v383, %v447
    %vm480 = vcmp.ge.f32.partialorder %v448, 0.0
    %vm481 = vcmp.ge.f32.partialorder %v449, 0.0
    %vm482 = vcmp.ge.f32.partialorder %v450, 0.0
    %vm483 = vcmp.ge.f32.partialorder %v451, 0.0
    %vm484 = vcmp.ge.f32.partialorder %v452, 0.0
    %vm485 = vcmp.ge.f32.partialorder %v453, 0.0
    %vm486 = vcmp.ge.f32.partialorder %v454, 0.0
    %vm487 = vcmp.ge.f32.partialorder %v455, 0.0
    %vm488 = vcmp.ge.f32.partialorder %v456, 0.0
    %vm489 = vcmp.ge.f32.partialorder %v457, 0.0
    %vm490 = vcmp.ge.f32.partialorder %v458, 0.0
    %vm491 = vcmp.ge.f32.partialorder %v459, 0.0
    %vm492 = vcmp.ge.f32.partialorder %v460, 0.0
    %vm493 = vcmp.ge.f32.partialorder %v461, 0.0
    %vm494 = vcmp.ge.f32.partialorder %v462, 0.0
    %vm495 = vcmp.ge.f32.partialorder %v463, 0.0
    %vm496 = vcmp.ge.f32.partialorder %v464, 0.0
    %vm497 = vcmp.ge.f32.partialorder %v465, 0.0
    %vm498 = vcmp.ge.f32.partialorder %v466, 0.0
    %vm499 = vcmp.ge.f32.partialorder %v467, 0.0
    %vm500 = vcmp.ge.f32.partialorder %v468, 0.0
    %vm501 = vcmp.ge.f32.partialorder %v469, 0.0
    %vm502 = vcmp.ge.f32.partialorder %v470, 0.0
    %vm503 = vcmp.ge.f32.partialorder %v471, 0.0
    %vm504 = vcmp.ge.f32.partialorder %v472, 0.0
    %vm505 = vcmp.ge.f32.partialorder %v473, 0.0
    %vm506 = vcmp.ge.f32.partialorder %v474, 0.0
    %vm507 = vcmp.ge.f32.partialorder %v475, 0.0
    %vm508 = vcmp.ge.f32.partialorder %v476, 0.0
    %vm509 = vcmp.ge.f32.partialorder %v477, 0.0
    %vm510 = vcmp.ge.f32.partialorder %v478, 0.0
    %vm511 = vcmp.ge.f32.partialorder %v479, 0.0
    %v512 = vmul.f32 %v448, 0.2
    %v513 = vmul.f32 %v449, 0.2
    %v514 = vmul.f32 %v450, 0.2
    %v515 = vmul.f32 %v451, 0.2
    %v516 = vmul.f32 %v452, 0.2
    %v517 = vmul.f32 %v453, 0.2
    %v518 = vmul.f32 %v454, 0.2
    %v519 = vmul.f32 %v455, 0.2
    %v520 = vmul.f32 %v456, 0.2
    %v521 = vmul.f32 %v457, 0.2
    %v522 = vmul.f32 %v458, 0.2
    %v523 = vmul.f32 %v459, 0.2
    %v524 = vmul.f32 %v460, 0.2
    %v525 = vmul.f32 %v461, 0.2
    %v526 = vmul.f32 %v462, 0.2
    %v527 = vmul.f32 %v463, 0.2
    %v528 = vmul.f32 %v464, 0.2
    %v529 = vmul.f32 %v465, 0.2
    %v530 = vmul.f32 %v466, 0.2
    %v531 = vmul.f32 %v467, 0.2
    %v532 = vmul.f32 %v468, 0.2
    %v533 = vmul.f32 %v469, 0.2
    %v534 = vmul.f32 %v470, 0.2
    %v535 = vmul.f32 %v471, 0.2
    %v536 = vmul.f32 %v472, 0.2
    %v537 = vmul.f32 %v473, 0.2
    %v538 = vmul.f32 %v474, 0.2
    %v539 = vmul.f32 %v475, 0.2
    %v540 = vmul.f32 %v476, 0.2
    %v541 = vmul.f32 %v477, 0.2
    %v542 = vmul.f32 %v478, 0.2
    %v543 = vmul.f32 %v479, 0.2
    %v544 = vsel %vm480, %v448, %v512
    %v545 = vsel %vm481, %v449, %v513
    %v546 = vsel %vm482, %v450, %v514
    %v547 = vsel %vm483, %v451, %v515
    %v548 = vsel %vm484, %v452, %v516
    %v549 = vsel %vm485, %v453, %v517
    %v550 = vsel %vm486, %v454, %v518
    %v551 = vsel %vm487, %v455, %v519
    %v552 = vsel %vm488, %v456, %v520
    %v553 = vsel %vm489, %v457, %v521
    %v554 = vsel %vm490, %v458, %v522
    %v555 = vsel %vm491, %v459, %v523
    %v556 = vsel %vm492, %v460, %v524
    %v557 = vsel %vm493, %v461, %v525
    %v558 = vsel %vm494, %v462, %v526
    %v559 = vsel %vm495, %v463, %v527
    %v560 = vsel %vm496, %v464, %v528
    %v561 = vsel %vm497, %v465, %v529
    %v562 = vsel %vm498, %v466, %v530
    %v563 = vsel %vm499, %v467, %v531
    %v564 = vsel %vm500, %v468, %v532
    %v565 = vsel %vm501, %v469, %v533
    %v566 = vsel %vm502, %v470, %v534
    %v567 = vsel %vm503, %v471, %v535
    %v568 = vsel %vm504, %v472, %v536
    %v569 = vsel %vm505, %v473, %v537
    %v570 = vsel %vm506, %v474, %v538
    %v571 = vsel %vm507, %v475, %v539
    %v572 = vsel %vm508, %v476, %v540
    %v573 = vsel %vm509, %v477, %v541
    %v574 = vsel %vm510, %v478, %v542
    %v575 = vsel %vm511, %v479, %v543
    %v576 = vld [vmem:[#allocation10] sm:$0x1]
    %v578 = vperm.slane %v576, 0
    %v580 = vmul.f32 %v544, %v578
    %v581 = vmul.f32 %v545, %v578
    %v582 = vmul.f32 %v546, %v578
    %v583 = vmul.f32 %v547, %v578
    %v584 = vmul.f32 %v548, %v578
    %v585 = vmul.f32 %v549, %v578
    %v586 = vmul.f32 %v550, %v578
    %v587 = vmul.f32 %v551, %v578
    %v588 = vmul.f32 %v552, %v578
    %v589 = vmul.f32 %v553, %v578
    %v590 = vmul.f32 %v554, %v578
    %v591 = vmul.f32 %v555, %v578
    %v592 = vmul.f32 %v556, %v578
    %v593 = vmul.f32 %v557, %v578
    %v594 = vmul.f32 %v558, %v578
    %v595 = vmul.f32 %v559, %v578
    %v596 = vmul.f32 %v560, %v578
    %v597 = vmul.f32 %v561, %v578
    %v598 = vmul.f32 %v562, %v578
    %v599 = vmul.f32 %v563, %v578
    %v600 = vmul.f32 %v564, %v578
    %v601 = vmul.f32 %v565, %v578
    %v602 = vmul.f32 %v566, %v578
    %v603 = vmul.f32 %v567, %v578
    %v604 = vmul.f32 %v568, %v578
    %v605 = vmul.f32 %v569, %v578
    %v606 = vmul.f32 %v570, %v578
    %v607 = vmul.f32 %v571, %v578
    %v608 = vmul.f32 %v572, %v578
    %v609 = vmul.f32 %v573, %v578
    %v610 = vmul.f32 %v574, %v578
    %v611 = vmul.f32 %v575, %v578
    %612 = vadd.xlane.f32.xlu0 %v580
    %v613 = vpop.xlane.xlu0 %612
    %614 = vadd.xlane.f32.xlu0 %v581
    %v615 = vpop.xlane.xlu0 %614
    %616 = vadd.xlane.f32.xlu0 %v582
    %v617 = vpop.xlane.xlu0 %616
    %618 = vadd.xlane.f32.xlu0 %v583
    %v619 = vpop.xlane.xlu0 %618
    %620 = vadd.xlane.f32.xlu0 %v584
    %v621 = vpop.xlane.xlu0 %620
    %622 = vadd.xlane.f32.xlu0 %v585
    %v623 = vpop.xlane.xlu0 %622
    %624 = vadd.xlane.f32.xlu0 %v586
    %v625 = vpop.xlane.xlu0 %624
    %626 = vadd.xlane.f32.xlu0 %v587
    %v627 = vpop.xlane.xlu0 %626
    %628 = vadd.xlane.f32.xlu0 %v588
    %v629 = vpop.xlane.xlu0 %628
    %630 = vadd.xlane.f32.xlu0 %v589
    %v631 = vpop.xlane.xlu0 %630
    %632 = vadd.xlane.f32.xlu0 %v590
    %v633 = vpop.xlane.xlu0 %632
    %634 = vadd.xlane.f32.xlu0 %v591
    %v635 = vpop.xlane.xlu0 %634
    %636 = vadd.xlane.f32.xlu0 %v592
    %v637 = vpop.xlane.xlu0 %636
    %638 = vadd.xlane.f32.xlu0 %v593
    %v639 = vpop.xlane.xlu0 %638
    %640 = vadd.xlane.f32.xlu0 %v594
    %v641 = vpop.xlane.xlu0 %640
    %642 = vadd.xlane.f32.xlu0 %v595
    %v643 = vpop.xlane.xlu0 %642
    %644 = vadd.xlane.f32.xlu0 %v596
    %v645 = vpop.xlane.xlu0 %644
    %646 = vadd.xlane.f32.xlu0 %v597
    %v647 = vpop.xlane.xlu0 %646
    %648 = vadd.xlane.f32.xlu0 %v598
    %v649 = vpop.xlane.xlu0 %648
    %650 = vadd.xlane.f32.xlu0 %v599
    %v651 = vpop.xlane.xlu0 %650
    %652 = vadd.xlane.f32.xlu0 %v600
    %v653 = vpop.xlane.xlu0 %652
    %654 = vadd.xlane.f32.xlu0 %v601
    %v655 = vpop.xlane.xlu0 %654
    %656 = vadd.xlane.f32.xlu0 %v602
    %v657 = vpop.xlane.xlu0 %656
    %658 = vadd.xlane.f32.xlu0 %v603
    %v659 = vpop.xlane.xlu0 %658
    %660 = vadd.xlane.f32.xlu0 %v604
    %v661 = vpop.xlane.xlu0 %660
    %662 = vadd.xlane.f32.xlu0 %v605
    %v663 = vpop.xlane.xlu0 %662
    %664 = vadd.xlane.f32.xlu0 %v606
    %v665 = vpop.xlane.xlu0 %664
    %666 = vadd.xlane.f32.xlu0 %v607
    %v667 = vpop.xlane.xlu0 %666
    %668 = vadd.xlane.f32.xlu0 %v608
    %v669 = vpop.xlane.xlu0 %668
    %670 = vadd.xlane.f32.xlu0 %v609
    %v671 = vpop.xlane.xlu0 %670
    %672 = vadd.xlane.f32.xlu0 %v610
    %v673 = vpop.xlane.xlu0 %672
    %674 = vadd.xlane.f32.xlu0 %v611
    %v675 = vpop.xlane.xlu0 %674
    %v678 = vperm.slane %v169, 0
    %v679 = vlaneseq
    %v680 = vshrl.u32 %v679, 7
    %682 = vset.pattern.permute.xlu0 %v680
    %683 = vperm.xlu0 %682, %v678
    %v684 = vpop.permute.xlu0 %683
    %v685 = vlaneseq
    %v686 = vshrl.u32 %v685, 7
    %v687 = vadd.s32 %v686, 8
    %688 = vset.pattern.permute.xlu0 %v687
    %689 = vperm.xlu0 %688, %v678
    %v690 = vpop.permute.xlu0 %689
    %v691 = vperm.slane %v169, 1
    %v692 = vlaneseq
    %v693 = vshrl.u32 %v692, 7
    %695 = vset.pattern.permute.xlu0 %v693
    %696 = vperm.xlu0 %695, %v691
    %v697 = vpop.permute.xlu0 %696
    %v698 = vlaneseq
    %v699 = vshrl.u32 %v698, 7
    %v700 = vadd.s32 %v699, 8
    %701 = vset.pattern.permute.xlu0 %v700
    %702 = vperm.xlu0 %701, %v691
    %v703 = vpop.permute.xlu0 %702
    %v704 = vperm.slane %v169, 2
    %v705 = vlaneseq
    %v706 = vshrl.u32 %v705, 7
    %708 = vset.pattern.permute.xlu0 %v706
    %709 = vperm.xlu0 %708, %v704
    %v710 = vpop.permute.xlu0 %709
    %v711 = vlaneseq
    %v712 = vshrl.u32 %v711, 7
    %v713 = vadd.s32 %v712, 8
    %714 = vset.pattern.permute.xlu0 %v713
    %715 = vperm.xlu0 %714, %v704
    %v716 = vpop.permute.xlu0 %715
    %v717 = vperm.slane %v169, 3
    %v718 = vlaneseq
    %v719 = vshrl.u32 %v718, 7
    %721 = vset.pattern.permute.xlu0 %v719
    %722 = vperm.xlu0 %721, %v717
    %v723 = vpop.permute.xlu0 %722
    %v724 = vlaneseq
    %v725 = vshrl.u32 %v724, 7
    %v726 = vadd.s32 %v725, 8
    %727 = vset.pattern.permute.xlu0 %v726
    %728 = vperm.xlu0 %727, %v717
    %v729 = vpop.permute.xlu0 %728
    %v730 = vperm.slane %v169, 4
    %v731 = vlaneseq
    %v732 = vshrl.u32 %v731, 7
    %734 = vset.pattern.permute.xlu0 %v732
    %735 = vperm.xlu0 %734, %v730
    %v736 = vpop.permute.xlu0 %735
    %v737 = vlaneseq
    %v738 = vshrl.u32 %v737, 7
    %v739 = vadd.s32 %v738, 8
    %740 = vset.pattern.permute.xlu0 %v739
    %741 = vperm.xlu0 %740, %v730
    %v742 = vpop.permute.xlu0 %741
    %v743 = vperm.slane %v169, 5
    %v744 = vlaneseq
    %v745 = vshrl.u32 %v744, 7
    %747 = vset.pattern.permute.xlu0 %v745
    %748 = vperm.xlu0 %747, %v743
    %v749 = vpop.permute.xlu0 %748
    %v750 = vlaneseq
    %v751 = vshrl.u32 %v750, 7
    %v752 = vadd.s32 %v751, 8
    %753 = vset.pattern.permute.xlu0 %v752
    %754 = vperm.xlu0 %753, %v743
    %v755 = vpop.permute.xlu0 %754
    %v756 = vperm.slane %v169, 6
    %v757 = vlaneseq
    %v758 = vshrl.u32 %v757, 7
    %760 = vset.pattern.permute.xlu0 %v758
    %761 = vperm.xlu0 %760, %v756
    %v762 = vpop.permute.xlu0 %761
    %v763 = vlaneseq
    %v764 = vshrl.u32 %v763, 7
    %v765 = vadd.s32 %v764, 8
    %766 = vset.pattern.permute.xlu0 %v765
    %767 = vperm.xlu0 %766, %v756
    %v768 = vpop.permute.xlu0 %767
    %v769 = vperm.slane %v169, 7
    %v770 = vlaneseq
    %v771 = vshrl.u32 %v770, 7
    %773 = vset.pattern.permute.xlu0 %v771
    %774 = vperm.xlu0 %773, %v769
    %v775 = vpop.permute.xlu0 %774
    %v776 = vlaneseq
    %v777 = vshrl.u32 %v776, 7
    %v778 = vadd.s32 %v777, 8
    %779 = vset.pattern.permute.xlu0 %v778
    %780 = vperm.xlu0 %779, %v769
    %v781 = vpop.permute.xlu0 %780
    %v782 = vperm.slane %v170, 0
    %v783 = vlaneseq
    %v784 = vshrl.u32 %v783, 7
    %786 = vset.pattern.permute.xlu0 %v784
    %787 = vperm.xlu0 %786, %v782
    %v788 = vpop.permute.xlu0 %787
    %v789 = vlaneseq
    %v790 = vshrl.u32 %v789, 7
    %v791 = vadd.s32 %v790, 8
    %792 = vset.pattern.permute.xlu0 %v791
    %793 = vperm.xlu0 %792, %v782
    %v794 = vpop.permute.xlu0 %793
    %v795 = vperm.slane %v170, 1
    %v796 = vlaneseq
    %v797 = vshrl.u32 %v796, 7
    %799 = vset.pattern.permute.xlu0 %v797
    %800 = vperm.xlu0 %799, %v795
    %v801 = vpop.permute.xlu0 %800
    %v802 = vlaneseq
    %v803 = vshrl.u32 %v802, 7
    %v804 = vadd.s32 %v803, 8
    %805 = vset.pattern.permute.xlu0 %v804
    %806 = vperm.xlu0 %805, %v795
    %v807 = vpop.permute.xlu0 %806
    %v808 = vperm.slane %v170, 2
    %v809 = vlaneseq
    %v810 = vshrl.u32 %v809, 7
    %812 = vset.pattern.permute.xlu0 %v810
    %813 = vperm.xlu0 %812, %v808
    %v814 = vpop.permute.xlu0 %813
    %v815 = vlaneseq
    %v816 = vshrl.u32 %v815, 7
    %v817 = vadd.s32 %v816, 8
    %818 = vset.pattern.permute.xlu0 %v817
    %819 = vperm.xlu0 %818, %v808
    %v820 = vpop.permute.xlu0 %819
    %v821 = vperm.slane %v170, 3
    %v822 = vlaneseq
    %v823 = vshrl.u32 %v822, 7
    %825 = vset.pattern.permute.xlu0 %v823
    %826 = vperm.xlu0 %825, %v821
    %v827 = vpop.permute.xlu0 %826
    %v828 = vlaneseq
    %v829 = vshrl.u32 %v828, 7
    %v830 = vadd.s32 %v829, 8
    %831 = vset.pattern.permute.xlu0 %v830
    %832 = vperm.xlu0 %831, %v821
    %v833 = vpop.permute.xlu0 %832
    %v834 = vperm.slane %v170, 4
    %v835 = vlaneseq
    %v836 = vshrl.u32 %v835, 7
    %838 = vset.pattern.permute.xlu0 %v836
    %839 = vperm.xlu0 %838, %v834
    %v840 = vpop.permute.xlu0 %839
    %v841 = vlaneseq
    %v842 = vshrl.u32 %v841, 7
    %v843 = vadd.s32 %v842, 8
    %844 = vset.pattern.permute.xlu0 %v843
    %845 = vperm.xlu0 %844, %v834
    %v846 = vpop.permute.xlu0 %845
    %v847 = vperm.slane %v170, 5
    %v848 = vlaneseq
    %v849 = vshrl.u32 %v848, 7
    %851 = vset.pattern.permute.xlu0 %v849
    %852 = vperm.xlu0 %851, %v847
    %v853 = vpop.permute.xlu0 %852
    %v854 = vlaneseq
    %v855 = vshrl.u32 %v854, 7
    %v856 = vadd.s32 %v855, 8
    %857 = vset.pattern.permute.xlu0 %v856
    %858 = vperm.xlu0 %857, %v847
    %v859 = vpop.permute.xlu0 %858
    %v860 = vperm.slane %v170, 6
    %v861 = vlaneseq
    %v862 = vshrl.u32 %v861, 7
    %864 = vset.pattern.permute.xlu0 %v862
    %865 = vperm.xlu0 %864, %v860
    %v866 = vpop.permute.xlu0 %865
    %v867 = vlaneseq
    %v868 = vshrl.u32 %v867, 7
    %v869 = vadd.s32 %v868, 8
    %870 = vset.pattern.permute.xlu0 %v869
    %871 = vperm.xlu0 %870, %v860
    %v872 = vpop.permute.xlu0 %871
    %v873 = vperm.slane %v170, 7
    %v874 = vlaneseq
    %v875 = vshrl.u32 %v874, 7
    %877 = vset.pattern.permute.xlu0 %v875
    %878 = vperm.xlu0 %877, %v873
    %v879 = vpop.permute.xlu0 %878
    %v880 = vlaneseq
    %v881 = vshrl.u32 %v880, 7
    %v882 = vadd.s32 %v881, 8
    %883 = vset.pattern.permute.xlu0 %v882
    %884 = vperm.xlu0 %883, %v873
    %v885 = vpop.permute.xlu0 %884
    %v918 = vadd.f32 %v613, %v684
    %v919 = vadd.f32 %v615, %v690
    %v920 = vadd.f32 %v617, %v697
    %v921 = vadd.f32 %v619, %v703
    %v922 = vadd.f32 %v621, %v710
    %v923 = vadd.f32 %v623, %v716
    %v924 = vadd.f32 %v625, %v723
    %v925 = vadd.f32 %v627, %v729
    %v926 = vadd.f32 %v629, %v736
    %v927 = vadd.f32 %v631, %v742
    %v928 = vadd.f32 %v633, %v749
    %v929 = vadd.f32 %v635, %v755
    %v930 = vadd.f32 %v637, %v762
    %v931 = vadd.f32 %v639, %v768
    %v932 = vadd.f32 %v641, %v775
    %v933 = vadd.f32 %v643, %v781
    %v934 = vadd.f32 %v645, %v788
    %v935 = vadd.f32 %v647, %v794
    %v936 = vadd.f32 %v649, %v801
    %v937 = vadd.f32 %v651, %v807
    %v938 = vadd.f32 %v653, %v814
    %v939 = vadd.f32 %v655, %v820
    %v940 = vadd.f32 %v657, %v827
    %v941 = vadd.f32 %v659, %v833
    %v942 = vadd.f32 %v661, %v840
    %v943 = vadd.f32 %v663, %v846
    %v944 = vadd.f32 %v665, %v853
    %v945 = vadd.f32 %v667, %v859
    %v946 = vadd.f32 %v669, %v866
    %v947 = vadd.f32 %v671, %v872
    %v948 = vadd.f32 %v673, %v879
    %v949 = vadd.f32 %v675, %v885
    %982 = vset.pattern.permute.xlu0 0
    %983 = vperm.xlu0 %982, %v918
    %v984 = vpop.permute.xlu0 %983
    %985 = vset.pattern.permute.xlu0 0
    %986 = vperm.xlu0 %985, %v919
    %v987 = vpop.permute.xlu0 %986
    %988 = vset.pattern.permute.xlu0 0
    %989 = vperm.xlu0 %988, %v920
    %v990 = vpop.permute.xlu0 %989
    %991 = vset.pattern.permute.xlu0 0
    %992 = vperm.xlu0 %991, %v921
    %v993 = vpop.permute.xlu0 %992
    %994 = vset.pattern.permute.xlu0 0
    %995 = vperm.xlu0 %994, %v922
    %v996 = vpop.permute.xlu0 %995
    %997 = vset.pattern.permute.xlu0 0
    %998 = vperm.xlu0 %997, %v923
    %v999 = vpop.permute.xlu0 %998
    %1000 = vset.pattern.permute.xlu0 0
    %1001 = vperm.xlu0 %1000, %v924
    %v1002 = vpop.permute.xlu0 %1001
    %1003 = vset.pattern.permute.xlu0 0
    %1004 = vperm.xlu0 %1003, %v925
    %v1005 = vpop.permute.xlu0 %1004
    %1006 = vset.pattern.permute.xlu0 0
    %1007 = vperm.xlu0 %1006, %v926
    %v1008 = vpop.permute.xlu0 %1007
    %1009 = vset.pattern.permute.xlu0 0
    %1010 = vperm.xlu0 %1009, %v927
    %v1011 = vpop.permute.xlu0 %1010
    %1012 = vset.pattern.permute.xlu0 0
    %1013 = vperm.xlu0 %1012, %v928
    %v1014 = vpop.permute.xlu0 %1013
    %1015 = vset.pattern.permute.xlu0 0
    %1016 = vperm.xlu0 %1015, %v929
    %v1017 = vpop.permute.xlu0 %1016
    %1018 = vset.pattern.permute.xlu0 0
    %1019 = vperm.xlu0 %1018, %v930
    %v1020 = vpop.permute.xlu0 %1019
    %1021 = vset.pattern.permute.xlu0 0
    %1022 = vperm.xlu0 %1021, %v931
    %v1023 = vpop.permute.xlu0 %1022
    %1024 = vset.pattern.permute.xlu0 0
    %1025 = vperm.xlu0 %1024, %v932
    %v1026 = vpop.permute.xlu0 %1025
    %1027 = vset.pattern.permute.xlu0 0
    %1028 = vperm.xlu0 %1027, %v933
    %v1029 = vpop.permute.xlu0 %1028
    %1030 = vset.pattern.permute.xlu0 0
    %1031 = vperm.xlu0 %1030, %v934
    %v1032 = vpop.permute.xlu0 %1031
    %1033 = vset.pattern.permute.xlu0 0
    %1034 = vperm.xlu0 %1033, %v935
    %v1035 = vpop.permute.xlu0 %1034
    %1036 = vset.pattern.permute.xlu0 0
    %1037 = vperm.xlu0 %1036, %v936
    %v1038 = vpop.permute.xlu0 %1037
    %1039 = vset.pattern.permute.xlu0 0
    %1040 = vperm.xlu0 %1039, %v937
    %v1041 = vpop.permute.xlu0 %1040
    %1042 = vset.pattern.permute.xlu0 0
    %1043 = vperm.xlu0 %1042, %v938
    %v1044 = vpop.permute.xlu0 %1043
    %1045 = vset.pattern.permute.xlu0 0
    %1046 = vperm.xlu0 %1045, %v939
    %v1047 = vpop.permute.xlu0 %1046
    %1048 = vset.pattern.permute.xlu0 0
    %1049 = vperm.xlu0 %1048, %v940
    %v1050 = vpop.permute.xlu0 %1049
    %1051 = vset.pattern.permute.xlu0 0
    %1052 = vperm.xlu0 %1051, %v941
    %v1053 = vpop.permute.xlu0 %1052
    %1054 = vset.pattern.permute.xlu0 0
    %1055 = vperm.xlu0 %1054, %v942
    %v1056 = vpop.permute.xlu0 %1055
    %1057 = vset.pattern.permute.xlu0 0
    %1058 = vperm.xlu0 %1057, %v943
    %v1059 = vpop.permute.xlu0 %1058
    %1060 = vset.pattern.permute.xlu0 0
    %1061 = vperm.xlu0 %1060, %v944
    %v1062 = vpop.permute.xlu0 %1061
    %1063 = vset.pattern.permute.xlu0 0
    %1064 = vperm.xlu0 %1063, %v945
    %v1065 = vpop.permute.xlu0 %1064
    %1066 = vset.pattern.permute.xlu0 0
    %1067 = vperm.xlu0 %1066, %v946
    %v1068 = vpop.permute.xlu0 %1067
    %1069 = vset.pattern.permute.xlu0 0
    %1070 = vperm.xlu0 %1069, %v947
    %v1071 = vpop.permute.xlu0 %1070
    %1072 = vset.pattern.permute.xlu0 0
    %1073 = vperm.xlu0 %1072, %v948
    %v1074 = vpop.permute.xlu0 %1073
    %1075 = vset.pattern.permute.xlu0 0
    %1076 = vperm.xlu0 %1075, %v949
    %v1077 = vpop.permute.xlu0 %1076
    %v1078 = vlaneseq
    %v1079 = vand.u32 %v1078, 127
    %v1080 = vperm.slane %v984, %v1079
    %v1081 = vadd.s32 %v1079, 4294967288
    %v1082 = vperm.slane %v987, %v1081
    %vm1083 = vcmask 130112
    %v1084 = vsel %vm1083, %v1082, %v1080
    %v1085 = vperm.slane %v990, %v1079
    %v1086 = vperm.slane %v993, %v1081
    %v1087 = vsel %vm1083, %v1086, %v1085
    %v1088 = vperm.slane %v996, %v1079
    %v1089 = vperm.slane %v999, %v1081
    %v1090 = vsel %vm1083, %v1089, %v1088
    %v1091 = vperm.slane %v1002, %v1079
    %v1092 = vperm.slane %v1005, %v1081
    %v1093 = vsel %vm1083, %v1092, %v1091
    %v1094 = vperm.slane %v1008, %v1079
    %v1095 = vperm.slane %v1011, %v1081
    %v1096 = vsel %vm1083, %v1095, %v1094
    %v1097 = vperm.slane %v1014, %v1079
    %v1098 = vperm.slane %v1017, %v1081
    %v1099 = vsel %vm1083, %v1098, %v1097
    %v1100 = vperm.slane %v1020, %v1079
    %v1101 = vperm.slane %v1023, %v1081
    %v1102 = vsel %vm1083, %v1101, %v1100
    %v1103 = vperm.slane %v1026, %v1079
    %v1104 = vperm.slane %v1029, %v1081
    %v1105 = vsel %vm1083, %v1104, %v1103
    %v1106 = vperm.slane %v1032, %v1079
    %v1107 = vperm.slane %v1035, %v1081
    %v1108 = vsel %vm1083, %v1107, %v1106
    %v1109 = vperm.slane %v1038, %v1079
    %v1110 = vperm.slane %v1041, %v1081
    %v1111 = vsel %vm1083, %v1110, %v1109
    %v1112 = vperm.slane %v1044, %v1079
    %v1113 = vperm.slane %v1047, %v1081
    %v1114 = vsel %vm1083, %v1113, %v1112
    %v1115 = vperm.slane %v1050, %v1079
    %v1116 = vperm.slane %v1053, %v1081
    %v1117 = vsel %vm1083, %v1116, %v1115
    %v1118 = vperm.slane %v1056, %v1079
    %v1119 = vperm.slane %v1059, %v1081
    %v1120 = vsel %vm1083, %v1119, %v1118
    %v1121 = vperm.slane %v1062, %v1079
    %v1122 = vperm.slane %v1065, %v1081
    %v1123 = vsel %vm1083, %v1122, %v1121
    %v1124 = vperm.slane %v1068, %v1079
    %v1125 = vperm.slane %v1071, %v1081
    %v1126 = vsel %vm1083, %v1125, %v1124
    %v1127 = vperm.slane %v1074, %v1079
    %v1128 = vperm.slane %v1077, %v1081
    %v1129 = vsel %vm1083, %v1128, %v1127
    %vm1130 = vcmask 1041409
    %v1131 = vsel %vm1130, %v1087, %v1084
    %vm1132 = vcmask 1042434
    %v1133 = vsel %vm1132, %v1090, %v1131
    %vm1134 = vcmask 1043459
    %v1135 = vsel %vm1134, %v1093, %v1133
    %vm1136 = vcmask 1044484
    %v1137 = vsel %vm1136, %v1096, %v1135
    %vm1138 = vcmask 1045509
    %v1139 = vsel %vm1138, %v1099, %v1137
    %vm1140 = vcmask 1046534
    %v1141 = vsel %vm1140, %v1102, %v1139
    %vm1142 = vcmask 1047559
    %v1143 = vsel %vm1142, %v1105, %v1141
    %v1144 = vsel %vm1130, %v1111, %v1108
    %v1145 = vsel %vm1132, %v1114, %v1144
    %v1146 = vsel %vm1134, %v1117, %v1145
    %v1147 = vsel %vm1136, %v1120, %v1146
    %v1148 = vsel %vm1138, %v1123, %v1147
    %v1149 = vsel %vm1140, %v1126, %v1148
    %v1150 = vsel %vm1142, %v1129, %v1149
    %vm1153 = vcmask 130048
    %v1154 = vsel %vm1153, %v1143, -inf
    %1155 = vmax.xlane.f32.xlu0 %v1154
    %v1156 = vpop.xlane.xlu0 %1155
    %v1157 = vsel %vm1153, %v1150, -inf
    %1158 = vmax.xlane.f32.xlu0 %v1157
    %v1159 = vpop.xlane.xlu0 %1158
    %v1162 = vperm.slane %v1156, 0
    %v1163 = vperm.slane %v1156, 1
    %v1164 = vperm.slane %v1156, 2
    %v1165 = vperm.slane %v1156, 3
    %v1166 = vperm.slane %v1156, 4
    %v1167 = vperm.slane %v1156, 5
    %v1168 = vperm.slane %v1156, 6
    %v1169 = vperm.slane %v1156, 7
    %v1170 = vperm.slane %v1159, 0
    %v1171 = vperm.slane %v1159, 1
    %v1172 = vperm.slane %v1159, 2
    %v1173 = vperm.slane %v1159, 3
    %v1174 = vperm.slane %v1159, 4
    %v1175 = vperm.slane %v1159, 5
    %v1176 = vperm.slane %v1159, 6
    %v1177 = vperm.slane %v1159, 7
    %v1194 = vsub.f32 %v918, %v1162
    %v1195 = vsub.f32 %v919, %v1162
    %v1196 = vsub.f32 %v920, %v1163
    %v1197 = vsub.f32 %v921, %v1163
    %v1198 = vsub.f32 %v922, %v1164
    %v1199 = vsub.f32 %v923, %v1164
    %v1200 = vsub.f32 %v924, %v1165
    %v1201 = vsub.f32 %v925, %v1165
    %v1202 = vsub.f32 %v926, %v1166
    %v1203 = vsub.f32 %v927, %v1166
    %v1204 = vsub.f32 %v928, %v1167
    %v1205 = vsub.f32 %v929, %v1167
    %v1206 = vsub.f32 %v930, %v1168
    %v1207 = vsub.f32 %v931, %v1168
    %v1208 = vsub.f32 %v932, %v1169
    %v1209 = vsub.f32 %v933, %v1169
    %v1210 = vsub.f32 %v934, %v1170
    %v1211 = vsub.f32 %v935, %v1170
    %v1212 = vsub.f32 %v936, %v1171
    %v1213 = vsub.f32 %v937, %v1171
    %v1214 = vsub.f32 %v938, %v1172
    %v1215 = vsub.f32 %v939, %v1172
    %v1216 = vsub.f32 %v940, %v1173
    %v1217 = vsub.f32 %v941, %v1173
    %v1218 = vsub.f32 %v942, %v1174
    %v1219 = vsub.f32 %v943, %v1174
    %v1220 = vsub.f32 %v944, %v1175
    %v1221 = vsub.f32 %v945, %v1175
    %v1222 = vsub.f32 %v946, %v1176
    %v1223 = vsub.f32 %v947, %v1176
    %v1224 = vsub.f32 %v948, %v1177
    %v1225 = vsub.f32 %v949, %v1177
    %v1226 = vmul.f32 %v1194, 1.442695
    %v1227 = vpow.pop %v1226
    %v1228 = vmul.f32 %v1195, 1.442695
    %v1229 = vpow.pop %v1228
    %v1230 = vmul.f32 %v1196, 1.442695
    %v1231 = vpow.pop %v1230
    %v1232 = vmul.f32 %v1197, 1.442695
    %v1233 = vpow.pop %v1232
    %v1234 = vmul.f32 %v1198, 1.442695
    %v1235 = vpow.pop %v1234
    %v1236 = vmul.f32 %v1199, 1.442695
    %v1237 = vpow.pop %v1236
    %v1238 = vmul.f32 %v1200, 1.442695
    %v1239 = vpow.pop %v1238
    %v1240 = vmul.f32 %v1201, 1.442695
    %v1241 = vpow.pop %v1240
    %v1242 = vmul.f32 %v1202, 1.442695
    %v1243 = vpow.pop %v1242
    %v1244 = vmul.f32 %v1203, 1.442695
    %v1245 = vpow.pop %v1244
    %v1246 = vmul.f32 %v1204, 1.442695
    %v1247 = vpow.pop %v1246
    %v1248 = vmul.f32 %v1205, 1.442695
    %v1249 = vpow.pop %v1248
    %v1250 = vmul.f32 %v1206, 1.442695
    %v1251 = vpow.pop %v1250
    %v1252 = vmul.f32 %v1207, 1.442695
    %v1253 = vpow.pop %v1252
    %v1254 = vmul.f32 %v1208, 1.442695
    %v1255 = vpow.pop %v1254
    %v1256 = vmul.f32 %v1209, 1.442695
    %v1257 = vpow.pop %v1256
    %v1258 = vmul.f32 %v1210, 1.442695
    %v1259 = vpow.pop %v1258
    %v1260 = vmul.f32 %v1211, 1.442695
    %v1261 = vpow.pop %v1260
    %v1262 = vmul.f32 %v1212, 1.442695
    %v1263 = vpow.pop %v1262
    %v1264 = vmul.f32 %v1213, 1.442695
    %v1265 = vpow.pop %v1264
    %v1266 = vmul.f32 %v1214, 1.442695
    %v1267 = vpow.pop %v1266
    %v1268 = vmul.f32 %v1215, 1.442695
    %v1269 = vpow.pop %v1268
    %v1270 = vmul.f32 %v1216, 1.442695
    %v1271 = vpow.pop %v1270
    %v1272 = vmul.f32 %v1217, 1.442695
    %v1273 = vpow.pop %v1272
    %v1274 = vmul.f32 %v1218, 1.442695
    %v1275 = vpow.pop %v1274
    %v1276 = vmul.f32 %v1219, 1.442695
    %v1277 = vpow.pop %v1276
    %v1278 = vmul.f32 %v1220, 1.442695
    %v1279 = vpow.pop %v1278
    %v1280 = vmul.f32 %v1221, 1.442695
    %v1281 = vpow.pop %v1280
    %v1282 = vmul.f32 %v1222, 1.442695
    %v1283 = vpow.pop %v1282
    %v1284 = vmul.f32 %v1223, 1.442695
    %v1285 = vpow.pop %v1284
    %v1286 = vmul.f32 %v1224, 1.442695
    %v1287 = vpow.pop %v1286
    %v1288 = vmul.f32 %v1225, 1.442695
    %v1289 = vpow.pop %v1288
    %1322 = vset.pattern.permute.xlu0 0
    %1323 = vperm.xlu0 %1322, %v1227
    %v1324 = vpop.permute.xlu0 %1323
    %1325 = vset.pattern.permute.xlu0 0
    %1326 = vperm.xlu0 %1325, %v1229
    %v1327 = vpop.permute.xlu0 %1326
    %1328 = vset.pattern.permute.xlu0 0
    %1329 = vperm.xlu0 %1328, %v1231
    %v1330 = vpop.permute.xlu0 %1329
    %1331 = vset.pattern.permute.xlu0 0
    %1332 = vperm.xlu0 %1331, %v1233
    %v1333 = vpop.permute.xlu0 %1332
    %1334 = vset.pattern.permute.xlu0 0
    %1335 = vperm.xlu0 %1334, %v1235
    %v1336 = vpop.permute.xlu0 %1335
    %1337 = vset.pattern.permute.xlu0 0
    %1338 = vperm.xlu0 %1337, %v1237
    %v1339 = vpop.permute.xlu0 %1338
    %1340 = vset.pattern.permute.xlu0 0
    %1341 = vperm.xlu0 %1340, %v1239
    %v1342 = vpop.permute.xlu0 %1341
    %1343 = vset.pattern.permute.xlu0 0
    %1344 = vperm.xlu0 %1343, %v1241
    %v1345 = vpop.permute.xlu0 %1344
    %1346 = vset.pattern.permute.xlu0 0
    %1347 = vperm.xlu0 %1346, %v1243
    %v1348 = vpop.permute.xlu0 %1347
    %1349 = vset.pattern.permute.xlu0 0
    %1350 = vperm.xlu0 %1349, %v1245
    %v1351 = vpop.permute.xlu0 %1350
    %1352 = vset.pattern.permute.xlu0 0
    %1353 = vperm.xlu0 %1352, %v1247
    %v1354 = vpop.permute.xlu0 %1353
    %1355 = vset.pattern.permute.xlu0 0
    %1356 = vperm.xlu0 %1355, %v1249
    %v1357 = vpop.permute.xlu0 %1356
    %1358 = vset.pattern.permute.xlu0 0
    %1359 = vperm.xlu0 %1358, %v1251
    %v1360 = vpop.permute.xlu0 %1359
    %1361 = vset.pattern.permute.xlu0 0
    %1362 = vperm.xlu0 %1361, %v1253
    %v1363 = vpop.permute.xlu0 %1362
    %1364 = vset.pattern.permute.xlu0 0
    %1365 = vperm.xlu0 %1364, %v1255
    %v1366 = vpop.permute.xlu0 %1365
    %1367 = vset.pattern.permute.xlu0 0
    %1368 = vperm.xlu0 %1367, %v1257
    %v1369 = vpop.permute.xlu0 %1368
    %1370 = vset.pattern.permute.xlu0 0
    %1371 = vperm.xlu0 %1370, %v1259
    %v1372 = vpop.permute.xlu0 %1371
    %1373 = vset.pattern.permute.xlu0 0
    %1374 = vperm.xlu0 %1373, %v1261
    %v1375 = vpop.permute.xlu0 %1374
    %1376 = vset.pattern.permute.xlu0 0
    %1377 = vperm.xlu0 %1376, %v1263
    %v1378 = vpop.permute.xlu0 %1377
    %1379 = vset.pattern.permute.xlu0 0
    %1380 = vperm.xlu0 %1379, %v1265
    %v1381 = vpop.permute.xlu0 %1380
    %1382 = vset.pattern.permute.xlu0 0
    %1383 = vperm.xlu0 %1382, %v1267
    %v1384 = vpop.permute.xlu0 %1383
    %1385 = vset.pattern.permute.xlu0 0
    %1386 = vperm.xlu0 %1385, %v1269
    %v1387 = vpop.permute.xlu0 %1386
    %1388 = vset.pattern.permute.xlu0 0
    %1389 = vperm.xlu0 %1388, %v1271
    %v1390 = vpop.permute.xlu0 %1389
    %1391 = vset.pattern.permute.xlu0 0
    %1392 = vperm.xlu0 %1391, %v1273
    %v1393 = vpop.permute.xlu0 %1392
    %1394 = vset.pattern.permute.xlu0 0
    %1395 = vperm.xlu0 %1394, %v1275
    %v1396 = vpop.permute.xlu0 %1395
    %1397 = vset.pattern.permute.xlu0 0
    %1398 = vperm.xlu0 %1397, %v1277
    %v1399 = vpop.permute.xlu0 %1398
    %1400 = vset.pattern.permute.xlu0 0
    %1401 = vperm.xlu0 %1400, %v1279
    %v1402 = vpop.permute.xlu0 %1401
    %1403 = vset.pattern.permute.xlu0 0
    %1404 = vperm.xlu0 %1403, %v1281
    %v1405 = vpop.permute.xlu0 %1404
    %1406 = vset.pattern.permute.xlu0 0
    %1407 = vperm.xlu0 %1406, %v1283
    %v1408 = vpop.permute.xlu0 %1407
    %1409 = vset.pattern.permute.xlu0 0
    %1410 = vperm.xlu0 %1409, %v1285
    %v1411 = vpop.permute.xlu0 %1410
    %1412 = vset.pattern.permute.xlu0 0
    %1413 = vperm.xlu0 %1412, %v1287
    %v1414 = vpop.permute.xlu0 %1413
    %1415 = vset.pattern.permute.xlu0 0
    %1416 = vperm.xlu0 %1415, %v1289
    %v1417 = vpop.permute.xlu0 %1416
    %v1418 = vperm.slane %v1324, %v1079
    %v1419 = vperm.slane %v1327, %v1081
    %v1420 = vsel %vm1083, %v1419, %v1418
    %v1421 = vperm.slane %v1330, %v1079
    %v1422 = vperm.slane %v1333, %v1081
    %v1423 = vsel %vm1083, %v1422, %v1421
    %v1424 = vperm.slane %v1336, %v1079
    %v1425 = vperm.slane %v1339, %v1081
    %v1426 = vsel %vm1083, %v1425, %v1424
    %v1427 = vperm.slane %v1342, %v1079
    %v1428 = vperm.slane %v1345, %v1081
    %v1429 = vsel %vm1083, %v1428, %v1427
    %v1430 = vperm.slane %v1348, %v1079
    %v1431 = vperm.slane %v1351, %v1081
    %v1432 = vsel %vm1083, %v1431, %v1430
    %v1433 = vperm.slane %v1354, %v1079
    %v1434 = vperm.slane %v1357, %v1081
    %v1435 = vsel %vm1083, %v1434, %v1433
    %v1436 = vperm.slane %v1360, %v1079
    %v1437 = vperm.slane %v1363, %v1081
    %v1438 = vsel %vm1083, %v1437, %v1436
    %v1439 = vperm.slane %v1366, %v1079
    %v1440 = vperm.slane %v1369, %v1081
    %v1441 = vsel %vm1083, %v1440, %v1439
    %v1442 = vperm.slane %v1372, %v1079
    %v1443 = vperm.slane %v1375, %v1081
    %v1444 = vsel %vm1083, %v1443, %v1442
    %v1445 = vperm.slane %v1378, %v1079
    %v1446 = vperm.slane %v1381, %v1081
    %v1447 = vsel %vm1083, %v1446, %v1445
    %v1448 = vperm.slane %v1384, %v1079
    %v1449 = vperm.slane %v1387, %v1081
    %v1450 = vsel %vm1083, %v1449, %v1448
    %v1451 = vperm.slane %v1390, %v1079
    %v1452 = vperm.slane %v1393, %v1081
    %v1453 = vsel %vm1083, %v1452, %v1451
    %v1454 = vperm.slane %v1396, %v1079
    %v1455 = vperm.slane %v1399, %v1081
    %v1456 = vsel %vm1083, %v1455, %v1454
    %v1457 = vperm.slane %v1402, %v1079
    %v1458 = vperm.slane %v1405, %v1081
    %v1459 = vsel %vm1083, %v1458, %v1457
    %v1460 = vperm.slane %v1408, %v1079
    %v1461 = vperm.slane %v1411, %v1081
    %v1462 = vsel %vm1083, %v1461, %v1460
    %v1463 = vperm.slane %v1414, %v1079
    %v1464 = vperm.slane %v1417, %v1081
    %v1465 = vsel %vm1083, %v1464, %v1463
    %v1466 = vsel %vm1130, %v1423, %v1420
    %v1467 = vsel %vm1132, %v1426, %v1466
    %v1468 = vsel %vm1134, %v1429, %v1467
    %v1469 = vsel %vm1136, %v1432, %v1468
    %v1470 = vsel %vm1138, %v1435, %v1469
    %v1471 = vsel %vm1140, %v1438, %v1470
    %v1472 = vsel %vm1142, %v1441, %v1471
    %v1473 = vsel %vm1130, %v1447, %v1444
    %v1474 = vsel %vm1132, %v1450, %v1473
    %v1475 = vsel %vm1134, %v1453, %v1474
    %v1476 = vsel %vm1136, %v1456, %v1475
    %v1477 = vsel %vm1138, %v1459, %v1476
    %v1478 = vsel %vm1140, %v1462, %v1477
    %v1479 = vsel %vm1142, %v1465, %v1478
    %v1482 = vsel %vm1153, %v1472, 0.0
    %1483 = vadd.xlane.f32.xlu0 %v1482
    %v1484 = vpop.xlane.xlu0 %1483
    %v1485 = vsel %vm1153, %v1479, 0.0
    %1486 = vadd.xlane.f32.xlu0 %v1485
    %v1487 = vpop.xlane.xlu0 %1486
    %v1488 = vrcp.pop %v1484
    %v1489 = vrcp.pop %v1487
    %v1492 = vperm.slane %v1488, 0
    %v1493 = vperm.slane %v1488, 1
    %v1494 = vperm.slane %v1488, 2
    %v1495 = vperm.slane %v1488, 3
    %v1496 = vperm.slane %v1488, 4
    %v1497 = vperm.slane %v1488, 5
    %v1498 = vperm.slane %v1488, 6
    %v1499 = vperm.slane %v1488, 7
    %v1500 = vperm.slane %v1489, 0
    %v1501 = vperm.slane %v1489, 1
    %v1502 = vperm.slane %v1489, 2
    %v1503 = vperm.slane %v1489, 3
    %v1504 = vperm.slane %v1489, 4
    %v1505 = vperm.slane %v1489, 5
    %v1506 = vperm.slane %v1489, 6
    %v1507 = vperm.slane %v1489, 7
    %v1524 = vmul.f32 %v1227, %v1492
    %v1525 = vmul.f32 %v1229, %v1492
    %v1526 = vmul.f32 %v1231, %v1493
    %v1527 = vmul.f32 %v1233, %v1493
    %v1528 = vmul.f32 %v1235, %v1494
    %v1529 = vmul.f32 %v1237, %v1494
    %v1530 = vmul.f32 %v1239, %v1495
    %v1531 = vmul.f32 %v1241, %v1495
    %v1532 = vmul.f32 %v1243, %v1496
    %v1533 = vmul.f32 %v1245, %v1496
    %v1534 = vmul.f32 %v1247, %v1497
    %v1535 = vmul.f32 %v1249, %v1497
    %v1536 = vmul.f32 %v1251, %v1498
    %v1537 = vmul.f32 %v1253, %v1498
    %v1538 = vmul.f32 %v1255, %v1499
    %v1539 = vmul.f32 %v1257, %v1499
    %v1540 = vmul.f32 %v1259, %v1500
    %v1541 = vmul.f32 %v1261, %v1500
    %v1542 = vmul.f32 %v1263, %v1501
    %v1543 = vmul.f32 %v1265, %v1501
    %v1544 = vmul.f32 %v1267, %v1502
    %v1545 = vmul.f32 %v1269, %v1502
    %v1546 = vmul.f32 %v1271, %v1503
    %v1547 = vmul.f32 %v1273, %v1503
    %v1548 = vmul.f32 %v1275, %v1504
    %v1549 = vmul.f32 %v1277, %v1504
    %v1550 = vmul.f32 %v1279, %v1505
    %v1551 = vmul.f32 %v1281, %v1505
    %v1552 = vmul.f32 %v1283, %v1506
    %v1553 = vmul.f32 %v1285, %v1506
    %v1554 = vmul.f32 %v1287, %v1507
    %v1555 = vmul.f32 %v1289, %v1507
    %v1556 = vpack.c.bf16 %v1525, %v1524
    %v1557 = vpack.c.bf16 %v1527, %v1526
    %v1558 = vpack.c.bf16 %v1529, %v1528
    %v1559 = vpack.c.bf16 %v1531, %v1530
    %v1560 = vpack.c.bf16 %v1533, %v1532
    %v1561 = vpack.c.bf16 %v1535, %v1534
    %v1562 = vpack.c.bf16 %v1537, %v1536
    %v1563 = vpack.c.bf16 %v1539, %v1538
    %v1564 = vpack.c.bf16 %v1541, %v1540
    %v1565 = vpack.c.bf16 %v1543, %v1542
    %v1566 = vpack.c.bf16 %v1545, %v1544
    %v1567 = vpack.c.bf16 %v1547, %v1546
    %v1568 = vpack.c.bf16 %v1549, %v1548
    %v1569 = vpack.c.bf16 %v1551, %v1550
    %v1570 = vpack.c.bf16 %v1553, %v1552
    %v1571 = vpack.c.bf16 %v1555, %v1554
    %v1572 = vpack.c.bf16 %v288, %v286
    %v1573 = vld [vmem:[%s5] sm:$0x1]
    %v1575 = vperm.slane %v1573, 0
    %v1593 = vunpack.c.l.b16 %v1556
    %v1594 = vunpack.c.h.b16 %v1556
    %v1595 = vunpack.c.l.b16 %v1557
    %v1596 = vunpack.c.h.b16 %v1557
    %v1597 = vunpack.c.l.b16 %v1558
    %v1598 = vunpack.c.h.b16 %v1558
    %v1599 = vunpack.c.l.b16 %v1559
    %v1600 = vunpack.c.h.b16 %v1559
    %v1601 = vunpack.c.l.b16 %v1560
    %v1602 = vunpack.c.h.b16 %v1560
    %v1603 = vunpack.c.l.b16 %v1561
    %v1604 = vunpack.c.h.b16 %v1561
    %v1605 = vunpack.c.l.b16 %v1562
    %v1606 = vunpack.c.h.b16 %v1562
    %v1607 = vunpack.c.l.b16 %v1563
    %v1608 = vunpack.c.h.b16 %v1563
    %v1609 = vunpack.c.l.b16 %v1564
    %v1610 = vunpack.c.h.b16 %v1564
    %v1611 = vunpack.c.l.b16 %v1565
    %v1612 = vunpack.c.h.b16 %v1565
    %v1613 = vunpack.c.l.b16 %v1566
    %v1614 = vunpack.c.h.b16 %v1566
    %v1615 = vunpack.c.l.b16 %v1567
    %v1616 = vunpack.c.h.b16 %v1567
    %v1617 = vunpack.c.l.b16 %v1568
    %v1618 = vunpack.c.h.b16 %v1568
    %v1619 = vunpack.c.l.b16 %v1569
    %v1620 = vunpack.c.h.b16 %v1569
    %v1621 = vunpack.c.l.b16 %v1570
    %v1622 = vunpack.c.h.b16 %v1570
    %v1623 = vunpack.c.l.b16 %v1571
    %v1624 = vunpack.c.h.b16 %v1571
    %1625 = vset.pattern.permute.xlu0 0
    %1626 = vperm.xlu0 %1625, %v1593
    %v1627 = vpop.permute.xlu0 %1626
    %1628 = vset.pattern.permute.xlu0 0
    %1629 = vperm.xlu0 %1628, %v1594
    %v1630 = vpop.permute.xlu0 %1629
    %1631 = vset.pattern.permute.xlu0 0
    %1632 = vperm.xlu0 %1631, %v1595
    %v1633 = vpop.permute.xlu0 %1632
    %1634 = vset.pattern.permute.xlu0 0
    %1635 = vperm.xlu0 %1634, %v1596
    %v1636 = vpop.permute.xlu0 %1635
    %1637 = vset.pattern.permute.xlu0 0
    %1638 = vperm.xlu0 %1637, %v1597
    %v1639 = vpop.permute.xlu0 %1638
    %1640 = vset.pattern.permute.xlu0 0
    %1641 = vperm.xlu0 %1640, %v1598
    %v1642 = vpop.permute.xlu0 %1641
    %1643 = vset.pattern.permute.xlu0 0
    %1644 = vperm.xlu0 %1643, %v1599
    %v1645 = vpop.permute.xlu0 %1644
    %1646 = vset.pattern.permute.xlu0 0
    %1647 = vperm.xlu0 %1646, %v1600
    %v1648 = vpop.permute.xlu0 %1647
    %1649 = vset.pattern.permute.xlu0 0
    %1650 = vperm.xlu0 %1649, %v1601
    %v1651 = vpop.permute.xlu0 %1650
    %1652 = vset.pattern.permute.xlu0 0
    %1653 = vperm.xlu0 %1652, %v1602
    %v1654 = vpop.permute.xlu0 %1653
    %1655 = vset.pattern.permute.xlu0 0
    %1656 = vperm.xlu0 %1655, %v1603
    %v1657 = vpop.permute.xlu0 %1656
    %1658 = vset.pattern.permute.xlu0 0
    %1659 = vperm.xlu0 %1658, %v1604
    %v1660 = vpop.permute.xlu0 %1659
    %1661 = vset.pattern.permute.xlu0 0
    %1662 = vperm.xlu0 %1661, %v1605
    %v1663 = vpop.permute.xlu0 %1662
    %1664 = vset.pattern.permute.xlu0 0
    %1665 = vperm.xlu0 %1664, %v1606
    %v1666 = vpop.permute.xlu0 %1665
    %1667 = vset.pattern.permute.xlu0 0
    %1668 = vperm.xlu0 %1667, %v1607
    %v1669 = vpop.permute.xlu0 %1668
    %1670 = vset.pattern.permute.xlu0 0
    %1671 = vperm.xlu0 %1670, %v1608
    %v1672 = vpop.permute.xlu0 %1671
    %1673 = vset.pattern.permute.xlu0 0
    %1674 = vperm.xlu0 %1673, %v1609
    %v1675 = vpop.permute.xlu0 %1674
    %1676 = vset.pattern.permute.xlu0 0
    %1677 = vperm.xlu0 %1676, %v1610
    %v1678 = vpop.permute.xlu0 %1677
    %1679 = vset.pattern.permute.xlu0 0
    %1680 = vperm.xlu0 %1679, %v1611
    %v1681 = vpop.permute.xlu0 %1680
    %1682 = vset.pattern.permute.xlu0 0
    %1683 = vperm.xlu0 %1682, %v1612
    %v1684 = vpop.permute.xlu0 %1683
    %1685 = vset.pattern.permute.xlu0 0
    %1686 = vperm.xlu0 %1685, %v1613
    %v1687 = vpop.permute.xlu0 %1686
    %1688 = vset.pattern.permute.xlu0 0
    %1689 = vperm.xlu0 %1688, %v1614
    %v1690 = vpop.permute.xlu0 %1689
    %1691 = vset.pattern.permute.xlu0 0
    %1692 = vperm.xlu0 %1691, %v1615
    %v1693 = vpop.permute.xlu0 %1692
    %1694 = vset.pattern.permute.xlu0 0
    %1695 = vperm.xlu0 %1694, %v1616
    %v1696 = vpop.permute.xlu0 %1695
    %1697 = vset.pattern.permute.xlu0 0
    %1698 = vperm.xlu0 %1697, %v1617
    %v1699 = vpop.permute.xlu0 %1698
    %1700 = vset.pattern.permute.xlu0 0
    %1701 = vperm.xlu0 %1700, %v1618
    %v1702 = vpop.permute.xlu0 %1701
    %1703 = vset.pattern.permute.xlu0 0
    %1704 = vperm.xlu0 %1703, %v1619
    %v1705 = vpop.permute.xlu0 %1704
    %1706 = vset.pattern.permute.xlu0 0
    %1707 = vperm.xlu0 %1706, %v1620
    %v1708 = vpop.permute.xlu0 %1707
    %1709 = vset.pattern.permute.xlu0 0
    %1710 = vperm.xlu0 %1709, %v1621
    %v1711 = vpop.permute.xlu0 %1710
    %1712 = vset.pattern.permute.xlu0 0
    %1713 = vperm.xlu0 %1712, %v1622
    %v1714 = vpop.permute.xlu0 %1713
    %1715 = vset.pattern.permute.xlu0 0
    %1716 = vperm.xlu0 %1715, %v1623
    %v1717 = vpop.permute.xlu0 %1716
    %1718 = vset.pattern.permute.xlu0 0
    %1719 = vperm.xlu0 %1718, %v1624
    %v1720 = vpop.permute.xlu0 %1719
    %v1721 = vperm.slane %v1627, %v1079
    %v1722 = vperm.slane %v1630, %v1081
    %v1723 = vsel %vm1083, %v1722, %v1721
    %v1724 = vperm.slane %v1633, %v1079
    %v1725 = vperm.slane %v1636, %v1081
    %v1726 = vsel %vm1083, %v1725, %v1724
    %v1727 = vperm.slane %v1639, %v1079
    %v1728 = vperm.slane %v1642, %v1081
    %v1729 = vsel %vm1083, %v1728, %v1727
    %v1730 = vperm.slane %v1645, %v1079
    %v1731 = vperm.slane %v1648, %v1081
    %v1732 = vsel %vm1083, %v1731, %v1730
    %v1733 = vperm.slane %v1651, %v1079
    %v1734 = vperm.slane %v1654, %v1081
    %v1735 = vsel %vm1083, %v1734, %v1733
    %v1736 = vperm.slane %v1657, %v1079
    %v1737 = vperm.slane %v1660, %v1081
    %v1738 = vsel %vm1083, %v1737, %v1736
    %v1739 = vperm.slane %v1663, %v1079
    %v1740 = vperm.slane %v1666, %v1081
    %v1741 = vsel %vm1083, %v1740, %v1739
    %v1742 = vperm.slane %v1669, %v1079
    %v1743 = vperm.slane %v1672, %v1081
    %v1744 = vsel %vm1083, %v1743, %v1742
    %v1745 = vperm.slane %v1675, %v1079
    %v1746 = vperm.slane %v1678, %v1081
    %v1747 = vsel %vm1083, %v1746, %v1745
    %v1748 = vperm.slane %v1681, %v1079
    %v1749 = vperm.slane %v1684, %v1081
    %v1750 = vsel %vm1083, %v1749, %v1748
    %v1751 = vperm.slane %v1687, %v1079
    %v1752 = vperm.slane %v1690, %v1081
    %v1753 = vsel %vm1083, %v1752, %v1751
    %v1754 = vperm.slane %v1693, %v1079
    %v1755 = vperm.slane %v1696, %v1081
    %v1756 = vsel %vm1083, %v1755, %v1754
    %v1757 = vperm.slane %v1699, %v1079
    %v1758 = vperm.slane %v1702, %v1081
    %v1759 = vsel %vm1083, %v1758, %v1757
    %v1760 = vperm.slane %v1705, %v1079
    %v1761 = vperm.slane %v1708, %v1081
    %v1762 = vsel %vm1083, %v1761, %v1760
    %v1763 = vperm.slane %v1711, %v1079
    %v1764 = vperm.slane %v1714, %v1081
    %v1765 = vsel %vm1083, %v1764, %v1763
    %v1766 = vperm.slane %v1717, %v1079
    %v1767 = vperm.slane %v1720, %v1081
    %v1768 = vsel %vm1083, %v1767, %v1766
    %v1769 = vsel %vm1130, %v1726, %v1723
    %v1770 = vsel %vm1132, %v1729, %v1769
    %v1771 = vsel %vm1134, %v1732, %v1770
    %v1772 = vsel %vm1136, %v1735, %v1771
    %v1773 = vsel %vm1138, %v1738, %v1772
    %v1774 = vsel %vm1140, %v1741, %v1773
    %v1775 = vsel %vm1142, %v1744, %v1774
    %v1776 = vsel %vm1130, %v1750, %v1747
    %v1777 = vsel %vm1132, %v1753, %v1776
    %v1778 = vsel %vm1134, %v1756, %v1777
    %v1779 = vsel %vm1136, %v1759, %v1778
    %v1780 = vsel %vm1138, %v1762, %v1779
    %v1781 = vsel %vm1140, %v1765, %v1780
    %v1782 = vsel %vm1142, %v1768, %v1781
    %v1783 = vpack.c.b16 %v1782, %v1775
    %v1785 = vsel %vm1153, %v1783, 0
    %1787 = vmatpush.bf16.msra.mxu0 0
    %1788 = vmatpush.bf16.msra.mxu0 0
    %1789 = vmatpush.bf16.msra.mxu0 0
    %1790 = vmatpush.bf16.msra.mxu0 0
    %1791 = vmatpush.bf16.msra.mxu0 0
    %1792 = vmatpush.bf16.msra.mxu0 0
    %1793 = vmatpush.bf16.msra.mxu0 0
    %1794 = vmatpush.bf16.msra.mxu0 %v1572
    %1795 = vmatmul.bf16.gmra.mxu0 %v1785
    %v1796 = vpop.f32.mrf.mxu0
    %v1797 = vadd.f32 %v1575, %v1796
    %v1798 = vpop.f32.mrf.mxu0
    %v1799 = vadd.f32 %v1575, %v1798
    %1800 = vdwg.mxu0
    %v1801 = vpack.c.bf16 %v1799, %v1797
    %s1802 = scalar_lea.vmem [#allocation7], 128
    %v1803 = vld [vmem:[%s1802] sm:$0xff]
    %v1804 = vld [vmem:[%s1802 + $0x8] sm:$0xff]
    %v1805 = vld [vmem:[%s1802 + $0x10] sm:$0xff]
    %v1806 = vld [vmem:[%s1802 + $0x18] sm:$0xff]
    %v1807 = vld [vmem:[%s1802 + $0x20] sm:$0xff]
    %v1808 = vld [vmem:[%s1802 + $0x28] sm:$0xff]
    %v1809 = vld [vmem:[%s1802 + $0x30] sm:$0xff]
    %v1810 = vld [vmem:[%s1802 + $0x38] sm:$0xff]
    %v1811 = vld [vmem:[%s1802 + $0x40] sm:$0xff]
    %v1812 = vld [vmem:[%s1802 + $0x48] sm:$0xff]
    %v1813 = vld [vmem:[%s1802 + $0x50] sm:$0xff]
    %v1814 = vld [vmem:[%s1802 + $0x58] sm:$0xff]
    %v1815 = vld [vmem:[%s1802 + $0x60] sm:$0xff]
    %v1816 = vld [vmem:[%s1802 + $0x68] sm:$0xff]
    %v1817 = vld [vmem:[%s1802 + $0x70] sm:$0xff]
    %v1818 = vld [vmem:[%s1802 + $0x78] sm:$0xff]
    %s1819 = scalar_lea.vmem [#allocation8], 2
    %v1820 = vld [vmem:[%s1819] sm:$0x3]
    %v1822 = vperm.slane %v1820, 0
    %v1823 = vperm.slane %v1820, 1
    %v1842 = vunpack.c.l.b16 %v1803
    %v1843 = vunpack.c.h.b16 %v1803
    %v1844 = vunpack.c.l.b16 %v1804
    %v1845 = vunpack.c.h.b16 %v1804
    %v1846 = vunpack.c.l.b16 %v1805
    %v1847 = vunpack.c.h.b16 %v1805
    %v1848 = vunpack.c.l.b16 %v1806
    %v1849 = vunpack.c.h.b16 %v1806
    %v1850 = vunpack.c.l.b16 %v1807
    %v1851 = vunpack.c.h.b16 %v1807
    %v1852 = vunpack.c.l.b16 %v1808
    %v1853 = vunpack.c.h.b16 %v1808
    %v1854 = vunpack.c.l.b16 %v1809
    %v1855 = vunpack.c.h.b16 %v1809
    %v1856 = vunpack.c.l.b16 %v1810
    %v1857 = vunpack.c.h.b16 %v1810
    %v1858 = vunpack.c.l.b16 %v1811
    %v1859 = vunpack.c.h.b16 %v1811
    %v1860 = vunpack.c.l.b16 %v1812
    %v1861 = vunpack.c.h.b16 %v1812
    %v1862 = vunpack.c.l.b16 %v1813
    %v1863 = vunpack.c.h.b16 %v1813
    %v1864 = vunpack.c.l.b16 %v1814
    %v1865 = vunpack.c.h.b16 %v1814
    %v1866 = vunpack.c.l.b16 %v1815
    %v1867 = vunpack.c.h.b16 %v1815
    %v1868 = vunpack.c.l.b16 %v1816
    %v1869 = vunpack.c.h.b16 %v1816
    %v1870 = vunpack.c.l.b16 %v1817
    %v1871 = vunpack.c.h.b16 %v1817
    %v1872 = vunpack.c.l.b16 %v1818
    %v1873 = vunpack.c.h.b16 %v1818
    %v1874 = vpack.c.b16 %v1844, %v1842
    %v1875 = vpack.c.b16 %v1845, %v1843
    %v1876 = vpack.c.b16 %v1848, %v1846
    %v1877 = vpack.c.b16 %v1849, %v1847
    %v1878 = vpack.c.b16 %v1852, %v1850
    %v1879 = vpack.c.b16 %v1853, %v1851
    %v1880 = vpack.c.b16 %v1856, %v1854
    %v1881 = vpack.c.b16 %v1857, %v1855
    %v1882 = vpack.c.b16 %v1860, %v1858
    %v1883 = vpack.c.b16 %v1861, %v1859
    %v1884 = vpack.c.b16 %v1864, %v1862
    %v1885 = vpack.c.b16 %v1865, %v1863
    %v1886 = vpack.c.b16 %v1868, %v1866
    %v1887 = vpack.c.b16 %v1869, %v1867
    %v1888 = vpack.c.b16 %v1872, %v1870
    %v1889 = vpack.c.b16 %v1873, %v1871
    %1906 = vmatpush.bf16.msra.mxu0 %v1888
    %1907 = vmatpush.bf16.msra.mxu0 %v1886
    %1908 = vmatpush.bf16.msra.mxu0 %v1884
    %1909 = vmatpush.bf16.msra.mxu0 %v1882
    %1910 = vmatpush.bf16.msra.mxu0 %v1880
    %1911 = vmatpush.bf16.msra.mxu0 %v1878
    %1912 = vmatpush.bf16.msra.mxu0 %v1876
    %1913 = vmatpush.bf16.msra.mxu0 %v1874
    %1914 = vmatmul.bf16.gmra.mxu0 %v1801
    %v1915 = vpop.f32.mrf.mxu0
    %v1916 = vadd.f32 %v1822, %v1915
    %v1917 = vpop.f32.mrf.mxu0
    %v1918 = vadd.f32 %v1822, %v1917
    %1919 = vdwg.mxu0
    %1920 = vmatpush.bf16.msra.mxu0 %v1889
    %1921 = vmatpush.bf16.msra.mxu0 %v1887
    %1922 = vmatpush.bf16.msra.mxu0 %v1885
    %1923 = vmatpush.bf16.msra.mxu0 %v1883
    %1924 = vmatpush.bf16.msra.mxu0 %v1881
    %1925 = vmatpush.bf16.msra.mxu0 %v1879
    %1926 = vmatpush.bf16.msra.mxu0 %v1877
    %1927 = vmatpush.bf16.msra.mxu0 %v1875
    %1928 = vmatmul.bf16.gmra.mxu0 %v1801
    %v1929 = vpop.f32.mrf.mxu0
    %v1930 = vadd.f32 %v1823, %v1929
    %v1931 = vpop.f32.mrf.mxu0
    %v1932 = vadd.f32 %v1823, %v1931
    %1933 = vdwg.mxu0
    %v1936 = vrot.slane %v1930, 1
    %v1937 = vrot.slane %v1930, 2
    %v1938 = vrot.slane %v1930, 3
    %v1939 = vrot.slane %v1930, 4
    %v1940 = vrot.slane %v1930, 5
    %v1941 = vrot.slane %v1930, 6
    %v1942 = vrot.slane %v1930, 7
    %v1943 = vrot.slane %v1932, 1
    %v1944 = vrot.slane %v1932, 2
    %v1945 = vrot.slane %v1932, 3
    %v1946 = vrot.slane %v1932, 4
    %v1947 = vrot.slane %v1932, 5
    %v1948 = vrot.slane %v1932, 6
    %v1949 = vrot.slane %v1932, 7
    %v1950 = vperm.slane %v1930, 0
    %v1951 = vperm.slane %v1936, 0
    %v1952 = vperm.slane %v1937, 0
    %v1953 = vperm.slane %v1938, 0
    %v1954 = vperm.slane %v1939, 0
    %v1955 = vperm.slane %v1940, 0
    %v1956 = vperm.slane %v1941, 0
    %v1957 = vperm.slane %v1942, 0
    %v1958 = vperm.slane %v1932, 0
    %v1959 = vperm.slane %v1943, 0
    %v1960 = vperm.slane %v1944, 0
    %v1961 = vperm.slane %v1945, 0
    %v1962 = vperm.slane %v1946, 0
    %v1963 = vperm.slane %v1947, 0
    %v1964 = vperm.slane %v1948, 0
    %v1965 = vperm.slane %v1949, 0
    %v1982 = vadd.f32 %v1950, %v1916
    %v1983 = vadd.f32 %v1950, %v1918
    %v1984 = vadd.f32 %v1951, %v1916
    %v1985 = vadd.f32 %v1951, %v1918
    %v1986 = vadd.f32 %v1952, %v1916
    %v1987 = vadd.f32 %v1952, %v1918
    %v1988 = vadd.f32 %v1953, %v1916
    %v1989 = vadd.f32 %v1953, %v1918
    %v1990 = vadd.f32 %v1954, %v1916
    %v1991 = vadd.f32 %v1954, %v1918
    %v1992 = vadd.f32 %v1955, %v1916
    %v1993 = vadd.f32 %v1955, %v1918
    %v1994 = vadd.f32 %v1956, %v1916
    %v1995 = vadd.f32 %v1956, %v1918
    %v1996 = vadd.f32 %v1957, %v1916
    %v1997 = vadd.f32 %v1957, %v1918
    %v1998 = vadd.f32 %v1958, %v1916
    %v1999 = vadd.f32 %v1958, %v1918
    %v2000 = vadd.f32 %v1959, %v1916
    %v2001 = vadd.f32 %v1959, %v1918
    %v2002 = vadd.f32 %v1960, %v1916
    %v2003 = vadd.f32 %v1960, %v1918
    %v2004 = vadd.f32 %v1961, %v1916
    %v2005 = vadd.f32 %v1961, %v1918
    %v2006 = vadd.f32 %v1962, %v1916
    %v2007 = vadd.f32 %v1962, %v1918
    %v2008 = vadd.f32 %v1963, %v1916
    %v2009 = vadd.f32 %v1963, %v1918
    %v2010 = vadd.f32 %v1964, %v1916
    %v2011 = vadd.f32 %v1964, %v1918
    %v2012 = vadd.f32 %v1965, %v1916
    %v2013 = vadd.f32 %v1965, %v1918
    %s2014 = scalar_lea.vmem [#allocation11], 128
    %v2015 = vld [vmem:[%s2014] sm:$0xf]
    %v2016 = vld [vmem:[%s2014 + $0x4] sm:$0xf]
    %v2017 = vld [vmem:[%s2014 + $0x8] sm:$0xf]
    %v2018 = vld [vmem:[%s2014 + $0xc] sm:$0xf]
    %v2019 = vld [vmem:[%s2014 + $0x10] sm:$0xf]
    %v2020 = vld [vmem:[%s2014 + $0x14] sm:$0xf]
    %v2021 = vld [vmem:[%s2014 + $0x18] sm:$0xf]
    %v2022 = vld [vmem:[%s2014 + $0x1c] sm:$0xf]
    %v2023 = vld [vmem:[%s2014 + $0x20] sm:$0xf]
    %v2024 = vld [vmem:[%s2014 + $0x24] sm:$0xf]
    %v2025 = vld [vmem:[%s2014 + $0x28] sm:$0xf]
    %v2026 = vld [vmem:[%s2014 + $0x2c] sm:$0xf]
    %v2027 = vld [vmem:[%s2014 + $0x30] sm:$0xf]
    %v2028 = vld [vmem:[%s2014 + $0x34] sm:$0xf]
    %v2029 = vld [vmem:[%s2014 + $0x38] sm:$0xf]
    %v2030 = vld [vmem:[%s2014 + $0x3c] sm:$0xf]
    %v2031 = vld [vmem:[%s2014 + $0x40] sm:$0xf]
    %v2032 = vld [vmem:[%s2014 + $0x44] sm:$0xf]
    %v2033 = vld [vmem:[%s2014 + $0x48] sm:$0xf]
    %v2034 = vld [vmem:[%s2014 + $0x4c] sm:$0xf]
    %v2035 = vld [vmem:[%s2014 + $0x50] sm:$0xf]
    %v2036 = vld [vmem:[%s2014 + $0x54] sm:$0xf]
    %v2037 = vld [vmem:[%s2014 + $0x58] sm:$0xf]
    %v2038 = vld [vmem:[%s2014 + $0x5c] sm:$0xf]
    %v2039 = vld [vmem:[%s2014 + $0x60] sm:$0xf]
    %v2040 = vld [vmem:[%s2014 + $0x64] sm:$0xf]
    %v2041 = vld [vmem:[%s2014 + $0x68] sm:$0xf]
    %v2042 = vld [vmem:[%s2014 + $0x6c] sm:$0xf]
    %v2043 = vld [vmem:[%s2014 + $0x70] sm:$0xf]
    %v2044 = vld [vmem:[%s2014 + $0x74] sm:$0xf]
    %v2045 = vld [vmem:[%s2014 + $0x78] sm:$0xf]
    %v2046 = vld [vmem:[%s2014 + $0x7c] sm:$0xf]
    %v2047 = vunpack.c.l.bf16 %v2015
    %v2048 = vunpack.c.l.bf16 %v2016
    %v2049 = vunpack.c.l.bf16 %v2017
    %v2050 = vunpack.c.l.bf16 %v2018
    %v2051 = vunpack.c.l.bf16 %v2019
    %v2052 = vunpack.c.l.bf16 %v2020
    %v2053 = vunpack.c.l.bf16 %v2021
    %v2054 = vunpack.c.l.bf16 %v2022
    %v2055 = vunpack.c.l.bf16 %v2023
    %v2056 = vunpack.c.l.bf16 %v2024
    %v2057 = vunpack.c.l.bf16 %v2025
    %v2058 = vunpack.c.l.bf16 %v2026
    %v2059 = vunpack.c.l.bf16 %v2027
    %v2060 = vunpack.c.l.bf16 %v2028
    %v2061 = vunpack.c.l.bf16 %v2029
    %v2062 = vunpack.c.l.bf16 %v2030
    %v2063 = vunpack.c.l.bf16 %v2031
    %v2064 = vunpack.c.l.bf16 %v2032
    %v2065 = vunpack.c.l.bf16 %v2033
    %v2066 = vunpack.c.l.bf16 %v2034
    %v2067 = vunpack.c.l.bf16 %v2035
    %v2068 = vunpack.c.l.bf16 %v2036
    %v2069 = vunpack.c.l.bf16 %v2037
    %v2070 = vunpack.c.l.bf16 %v2038
    %v2071 = vunpack.c.l.bf16 %v2039
    %v2072 = vunpack.c.l.bf16 %v2040
    %v2073 = vunpack.c.l.bf16 %v2041
    %v2074 = vunpack.c.l.bf16 %v2042
    %v2075 = vunpack.c.l.bf16 %v2043
    %v2076 = vunpack.c.l.bf16 %v2044
    %v2077 = vunpack.c.l.bf16 %v2045
    %v2078 = vunpack.c.l.bf16 %v2046
    %v2079 = vadd.f32 %v1982, %v2047
    %v2080 = vadd.f32 %v1983, %v2048
    %v2081 = vadd.f32 %v1984, %v2049
    %v2082 = vadd.f32 %v1985, %v2050
    %v2083 = vadd.f32 %v1986, %v2051
    %v2084 = vadd.f32 %v1987, %v2052
    %v2085 = vadd.f32 %v1988, %v2053
    %v2086 = vadd.f32 %v1989, %v2054
    %v2087 = vadd.f32 %v1990, %v2055
    %v2088 = vadd.f32 %v1991, %v2056
    %v2089 = vadd.f32 %v1992, %v2057
    %v2090 = vadd.f32 %v1993, %v2058
    %v2091 = vadd.f32 %v1994, %v2059
    %v2092 = vadd.f32 %v1995, %v2060
    %v2093 = vadd.f32 %v1996, %v2061
    %v2094 = vadd.f32 %v1997, %v2062
    %v2095 = vadd.f32 %v1998, %v2063
    %v2096 = vadd.f32 %v1999, %v2064
    %v2097 = vadd.f32 %v2000, %v2065
    %v2098 = vadd.f32 %v2001, %v2066
    %v2099 = vadd.f32 %v2002, %v2067
    %v2100 = vadd.f32 %v2003, %v2068
    %v2101 = vadd.f32 %v2004, %v2069
    %v2102 = vadd.f32 %v2005, %v2070
    %v2103 = vadd.f32 %v2006, %v2071
    %v2104 = vadd.f32 %v2007, %v2072
    %v2105 = vadd.f32 %v2008, %v2073
    %v2106 = vadd.f32 %v2009, %v2074
    %v2107 = vadd.f32 %v2010, %v2075
    %v2108 = vadd.f32 %v2011, %v2076
    %v2109 = vadd.f32 %v2012, %v2077
    %v2110 = vadd.f32 %v2013, %v2078
    %vm2111 = vcmp.ge.f32.partialorder %v2079, 0.0
    %vm2112 = vcmp.ge.f32.partialorder %v2080, 0.0
    %vm2113 = vcmp.ge.f32.partialorder %v2081, 0.0
    %vm2114 = vcmp.ge.f32.partialorder %v2082, 0.0
    %vm2115 = vcmp.ge.f32.partialorder %v2083, 0.0
    %vm2116 = vcmp.ge.f32.partialorder %v2084, 0.0
    %vm2117 = vcmp.ge.f32.partialorder %v2085, 0.0
    %vm2118 = vcmp.ge.f32.partialorder %v2086, 0.0
    %vm2119 = vcmp.ge.f32.partialorder %v2087, 0.0
    %vm2120 = vcmp.ge.f32.partialorder %v2088, 0.0
    %vm2121 = vcmp.ge.f32.partialorder %v2089, 0.0
    %vm2122 = vcmp.ge.f32.partialorder %v2090, 0.0
    %vm2123 = vcmp.ge.f32.partialorder %v2091, 0.0
    %vm2124 = vcmp.ge.f32.partialorder %v2092, 0.0
    %vm2125 = vcmp.ge.f32.partialorder %v2093, 0.0
    %vm2126 = vcmp.ge.f32.partialorder %v2094, 0.0
    %vm2127 = vcmp.ge.f32.partialorder %v2095, 0.0
    %vm2128 = vcmp.ge.f32.partialorder %v2096, 0.0
    %vm2129 = vcmp.ge.f32.partialorder %v2097, 0.0
    %vm2130 = vcmp.ge.f32.partialorder %v2098, 0.0
    %vm2131 = vcmp.ge.f32.partialorder %v2099, 0.0
    %vm2132 = vcmp.ge.f32.partialorder %v2100, 0.0
    %vm2133 = vcmp.ge.f32.partialorder %v2101, 0.0
    %vm2134 = vcmp.ge.f32.partialorder %v2102, 0.0
    %vm2135 = vcmp.ge.f32.partialorder %v2103, 0.0
    %vm2136 = vcmp.ge.f32.partialorder %v2104, 0.0
    %vm2137 = vcmp.ge.f32.partialorder %v2105, 0.0
    %vm2138 = vcmp.ge.f32.partialorder %v2106, 0.0
    %vm2139 = vcmp.ge.f32.partialorder %v2107, 0.0
    %vm2140 = vcmp.ge.f32.partialorder %v2108, 0.0
    %vm2141 = vcmp.ge.f32.partialorder %v2109, 0.0
    %vm2142 = vcmp.ge.f32.partialorder %v2110, 0.0
    %v2143 = vmul.f32 %v2079, 0.2
    %v2144 = vmul.f32 %v2080, 0.2
    %v2145 = vmul.f32 %v2081, 0.2
    %v2146 = vmul.f32 %v2082, 0.2
    %v2147 = vmul.f32 %v2083, 0.2
    %v2148 = vmul.f32 %v2084, 0.2
    %v2149 = vmul.f32 %v2085, 0.2
    %v2150 = vmul.f32 %v2086, 0.2
    %v2151 = vmul.f32 %v2087, 0.2
    %v2152 = vmul.f32 %v2088, 0.2
    %v2153 = vmul.f32 %v2089, 0.2
    %v2154 = vmul.f32 %v2090, 0.2
    %v2155 = vmul.f32 %v2091, 0.2
    %v2156 = vmul.f32 %v2092, 0.2
    %v2157 = vmul.f32 %v2093, 0.2
    %v2158 = vmul.f32 %v2094, 0.2
    %v2159 = vmul.f32 %v2095, 0.2
    %v2160 = vmul.f32 %v2096, 0.2
    %v2161 = vmul.f32 %v2097, 0.2
    %v2162 = vmul.f32 %v2098, 0.2
    %v2163 = vmul.f32 %v2099, 0.2
    %v2164 = vmul.f32 %v2100, 0.2
    %v2165 = vmul.f32 %v2101, 0.2
    %v2166 = vmul.f32 %v2102, 0.2
    %v2167 = vmul.f32 %v2103, 0.2
    %v2168 = vmul.f32 %v2104, 0.2
    %v2169 = vmul.f32 %v2105, 0.2
    %v2170 = vmul.f32 %v2106, 0.2
    %v2171 = vmul.f32 %v2107, 0.2
    %v2172 = vmul.f32 %v2108, 0.2
    %v2173 = vmul.f32 %v2109, 0.2
    %v2174 = vmul.f32 %v2110, 0.2
    %v2175 = vsel %vm2111, %v2079, %v2143
    %v2176 = vsel %vm2112, %v2080, %v2144
    %v2177 = vsel %vm2113, %v2081, %v2145
    %v2178 = vsel %vm2114, %v2082, %v2146
    %v2179 = vsel %vm2115, %v2083, %v2147
    %v2180 = vsel %vm2116, %v2084, %v2148
    %v2181 = vsel %vm2117, %v2085, %v2149
    %v2182 = vsel %vm2118, %v2086, %v2150
    %v2183 = vsel %vm2119, %v2087, %v2151
    %v2184 = vsel %vm2120, %v2088, %v2152
    %v2185 = vsel %vm2121, %v2089, %v2153
    %v2186 = vsel %vm2122, %v2090, %v2154
    %v2187 = vsel %vm2123, %v2091, %v2155
    %v2188 = vsel %vm2124, %v2092, %v2156
    %v2189 = vsel %vm2125, %v2093, %v2157
    %v2190 = vsel %vm2126, %v2094, %v2158
    %v2191 = vsel %vm2127, %v2095, %v2159
    %v2192 = vsel %vm2128, %v2096, %v2160
    %v2193 = vsel %vm2129, %v2097, %v2161
    %v2194 = vsel %vm2130, %v2098, %v2162
    %v2195 = vsel %vm2131, %v2099, %v2163
    %v2196 = vsel %vm2132, %v2100, %v2164
    %v2197 = vsel %vm2133, %v2101, %v2165
    %v2198 = vsel %vm2134, %v2102, %v2166
    %v2199 = vsel %vm2135, %v2103, %v2167
    %v2200 = vsel %vm2136, %v2104, %v2168
    %v2201 = vsel %vm2137, %v2105, %v2169
    %v2202 = vsel %vm2138, %v2106, %v2170
    %v2203 = vsel %vm2139, %v2107, %v2171
    %v2204 = vsel %vm2140, %v2108, %v2172
    %v2205 = vsel %vm2141, %v2109, %v2173
    %v2206 = vsel %vm2142, %v2110, %v2174
    %s2207 = scalar_lea.vmem [#allocation10], 1
    %v2208 = vld [vmem:[%s2207] sm:$0x1]
    %v2210 = vperm.slane %v2208, 0
    %v2212 = vmul.f32 %v2175, %v2210
    %v2213 = vmul.f32 %v2176, %v2210
    %v2214 = vmul.f32 %v2177, %v2210
    %v2215 = vmul.f32 %v2178, %v2210
    %v2216 = vmul.f32 %v2179, %v2210
    %v2217 = vmul.f32 %v2180, %v2210
    %v2218 = vmul.f32 %v2181, %v2210
    %v2219 = vmul.f32 %v2182, %v2210
    %v2220 = vmul.f32 %v2183, %v2210
    %v2221 = vmul.f32 %v2184, %v2210
    %v2222 = vmul.f32 %v2185, %v2210
    %v2223 = vmul.f32 %v2186, %v2210
    %v2224 = vmul.f32 %v2187, %v2210
    %v2225 = vmul.f32 %v2188, %v2210
    %v2226 = vmul.f32 %v2189, %v2210
    %v2227 = vmul.f32 %v2190, %v2210
    %v2228 = vmul.f32 %v2191, %v2210
    %v2229 = vmul.f32 %v2192, %v2210
    %v2230 = vmul.f32 %v2193, %v2210
    %v2231 = vmul.f32 %v2194, %v2210
    %v2232 = vmul.f32 %v2195, %v2210
    %v2233 = vmul.f32 %v2196, %v2210
    %v2234 = vmul.f32 %v2197, %v2210
    %v2235 = vmul.f32 %v2198, %v2210
    %v2236 = vmul.f32 %v2199, %v2210
    %v2237 = vmul.f32 %v2200, %v2210
    %v2238 = vmul.f32 %v2201, %v2210
    %v2239 = vmul.f32 %v2202, %v2210
    %v2240 = vmul.f32 %v2203, %v2210
    %v2241 = vmul.f32 %v2204, %v2210
    %v2242 = vmul.f32 %v2205, %v2210
    %v2243 = vmul.f32 %v2206, %v2210
    %2244 = vadd.xlane.f32.xlu0 %v2212
    %v2245 = vpop.xlane.xlu0 %2244
    %2246 = vadd.xlane.f32.xlu0 %v2213
    %v2247 = vpop.xlane.xlu0 %2246
    %2248 = vadd.xlane.f32.xlu0 %v2214
    %v2249 = vpop.xlane.xlu0 %2248
    %2250 = vadd.xlane.f32.xlu0 %v2215
    %v2251 = vpop.xlane.xlu0 %2250
    %2252 = vadd.xlane.f32.xlu0 %v2216
    %v2253 = vpop.xlane.xlu0 %2252
    %2254 = vadd.xlane.f32.xlu0 %v2217
    %v2255 = vpop.xlane.xlu0 %2254
    %2256 = vadd.xlane.f32.xlu0 %v2218
    %v2257 = vpop.xlane.xlu0 %2256
    %2258 = vadd.xlane.f32.xlu0 %v2219
    %v2259 = vpop.xlane.xlu0 %2258
    %2260 = vadd.xlane.f32.xlu0 %v2220
    %v2261 = vpop.xlane.xlu0 %2260
    %2262 = vadd.xlane.f32.xlu0 %v2221
    %v2263 = vpop.xlane.xlu0 %2262
    %2264 = vadd.xlane.f32.xlu0 %v2222
    %v2265 = vpop.xlane.xlu0 %2264
    %2266 = vadd.xlane.f32.xlu0 %v2223
    %v2267 = vpop.xlane.xlu0 %2266
    %2268 = vadd.xlane.f32.xlu0 %v2224
    %v2269 = vpop.xlane.xlu0 %2268
    %2270 = vadd.xlane.f32.xlu0 %v2225
    %v2271 = vpop.xlane.xlu0 %2270
    %2272 = vadd.xlane.f32.xlu0 %v2226
    %v2273 = vpop.xlane.xlu0 %2272
    %2274 = vadd.xlane.f32.xlu0 %v2227
    %v2275 = vpop.xlane.xlu0 %2274
    %2276 = vadd.xlane.f32.xlu0 %v2228
    %v2277 = vpop.xlane.xlu0 %2276
    %2278 = vadd.xlane.f32.xlu0 %v2229
    %v2279 = vpop.xlane.xlu0 %2278
    %2280 = vadd.xlane.f32.xlu0 %v2230
    %v2281 = vpop.xlane.xlu0 %2280
    %2282 = vadd.xlane.f32.xlu0 %v2231
    %v2283 = vpop.xlane.xlu0 %2282
    %2284 = vadd.xlane.f32.xlu0 %v2232
    %v2285 = vpop.xlane.xlu0 %2284
    %2286 = vadd.xlane.f32.xlu0 %v2233
    %v2287 = vpop.xlane.xlu0 %2286
    %2288 = vadd.xlane.f32.xlu0 %v2234
    %v2289 = vpop.xlane.xlu0 %2288
    %2290 = vadd.xlane.f32.xlu0 %v2235
    %v2291 = vpop.xlane.xlu0 %2290
    %2292 = vadd.xlane.f32.xlu0 %v2236
    %v2293 = vpop.xlane.xlu0 %2292
    %2294 = vadd.xlane.f32.xlu0 %v2237
    %v2295 = vpop.xlane.xlu0 %2294
    %2296 = vadd.xlane.f32.xlu0 %v2238
    %v2297 = vpop.xlane.xlu0 %2296
    %2298 = vadd.xlane.f32.xlu0 %v2239
    %v2299 = vpop.xlane.xlu0 %2298
    %2300 = vadd.xlane.f32.xlu0 %v2240
    %v2301 = vpop.xlane.xlu0 %2300
    %2302 = vadd.xlane.f32.xlu0 %v2241
    %v2303 = vpop.xlane.xlu0 %2302
    %2304 = vadd.xlane.f32.xlu0 %v2242
    %v2305 = vpop.xlane.xlu0 %2304
    %2306 = vadd.xlane.f32.xlu0 %v2243
    %v2307 = vpop.xlane.xlu0 %2306
    %v2308 = vadd.f32 %v2245, %v684
    %v2309 = vadd.f32 %v2247, %v690
    %v2310 = vadd.f32 %v2249, %v697
    %v2311 = vadd.f32 %v2251, %v703
    %v2312 = vadd.f32 %v2253, %v710
    %v2313 = vadd.f32 %v2255, %v716
    %v2314 = vadd.f32 %v2257, %v723
    %v2315 = vadd.f32 %v2259, %v729
    %v2316 = vadd.f32 %v2261, %v736
    %v2317 = vadd.f32 %v2263, %v742
    %v2318 = vadd.f32 %v2265, %v749
    %v2319 = vadd.f32 %v2267, %v755
    %v2320 = vadd.f32 %v2269, %v762
    %v2321 = vadd.f32 %v2271, %v768
    %v2322 = vadd.f32 %v2273, %v775
    %v2323 = vadd.f32 %v2275, %v781
    %v2324 = vadd.f32 %v2277, %v788
    %v2325 = vadd.f32 %v2279, %v794
    %v2326 = vadd.f32 %v2281, %v801
    %v2327 = vadd.f32 %v2283, %v807
    %v2328 = vadd.f32 %v2285, %v814
    %v2329 = vadd.f32 %v2287, %v820
    %v2330 = vadd.f32 %v2289, %v827
    %v2331 = vadd.f32 %v2291, %v833
    %v2332 = vadd.f32 %v2293, %v840
    %v2333 = vadd.f32 %v2295, %v846
    %v2334 = vadd.f32 %v2297, %v853
    %v2335 = vadd.f32 %v2299, %v859
    %v2336 = vadd.f32 %v2301, %v866
    %v2337 = vadd.f32 %v2303, %v872
    %v2338 = vadd.f32 %v2305, %v879
    %v2339 = vadd.f32 %v2307, %v885
    %2372 = vset.pattern.permute.xlu0 0
    %2373 = vperm.xlu0 %2372, %v2308
    %v2374 = vpop.permute.xlu0 %2373
    %2375 = vset.pattern.permute.xlu0 0
    %2376 = vperm.xlu0 %2375, %v2309
    %v2377 = vpop.permute.xlu0 %2376
    %2378 = vset.pattern.permute.xlu0 0
    %2379 = vperm.xlu0 %2378, %v2310
    %v2380 = vpop.permute.xlu0 %2379
    %2381 = vset.pattern.permute.xlu0 0
    %2382 = vperm.xlu0 %2381, %v2311
    %v2383 = vpop.permute.xlu0 %2382
    %2384 = vset.pattern.permute.xlu0 0
    %2385 = vperm.xlu0 %2384, %v2312
    %v2386 = vpop.permute.xlu0 %2385
    %2387 = vset.pattern.permute.xlu0 0
    %2388 = vperm.xlu0 %2387, %v2313
    %v2389 = vpop.permute.xlu0 %2388
    %2390 = vset.pattern.permute.xlu0 0
    %2391 = vperm.xlu0 %2390, %v2314
    %v2392 = vpop.permute.xlu0 %2391
    %2393 = vset.pattern.permute.xlu0 0
    %2394 = vperm.xlu0 %2393, %v2315
    %v2395 = vpop.permute.xlu0 %2394
    %2396 = vset.pattern.permute.xlu0 0
    %2397 = vperm.xlu0 %2396, %v2316
    %v2398 = vpop.permute.xlu0 %2397
    %2399 = vset.pattern.permute.xlu0 0
    %2400 = vperm.xlu0 %2399, %v2317
    %v2401 = vpop.permute.xlu0 %2400
    %2402 = vset.pattern.permute.xlu0 0
    %2403 = vperm.xlu0 %2402, %v2318
    %v2404 = vpop.permute.xlu0 %2403
    %2405 = vset.pattern.permute.xlu0 0
    %2406 = vperm.xlu0 %2405, %v2319
    %v2407 = vpop.permute.xlu0 %2406
    %2408 = vset.pattern.permute.xlu0 0
    %2409 = vperm.xlu0 %2408, %v2320
    %v2410 = vpop.permute.xlu0 %2409
    %2411 = vset.pattern.permute.xlu0 0
    %2412 = vperm.xlu0 %2411, %v2321
    %v2413 = vpop.permute.xlu0 %2412
    %2414 = vset.pattern.permute.xlu0 0
    %2415 = vperm.xlu0 %2414, %v2322
    %v2416 = vpop.permute.xlu0 %2415
    %2417 = vset.pattern.permute.xlu0 0
    %2418 = vperm.xlu0 %2417, %v2323
    %v2419 = vpop.permute.xlu0 %2418
    %2420 = vset.pattern.permute.xlu0 0
    %2421 = vperm.xlu0 %2420, %v2324
    %v2422 = vpop.permute.xlu0 %2421
    %2423 = vset.pattern.permute.xlu0 0
    %2424 = vperm.xlu0 %2423, %v2325
    %v2425 = vpop.permute.xlu0 %2424
    %2426 = vset.pattern.permute.xlu0 0
    %2427 = vperm.xlu0 %2426, %v2326
    %v2428 = vpop.permute.xlu0 %2427
    %2429 = vset.pattern.permute.xlu0 0
    %2430 = vperm.xlu0 %2429, %v2327
    %v2431 = vpop.permute.xlu0 %2430
    %2432 = vset.pattern.permute.xlu0 0
    %2433 = vperm.xlu0 %2432, %v2328
    %v2434 = vpop.permute.xlu0 %2433
    %2435 = vset.pattern.permute.xlu0 0
    %2436 = vperm.xlu0 %2435, %v2329
    %v2437 = vpop.permute.xlu0 %2436
    %2438 = vset.pattern.permute.xlu0 0
    %2439 = vperm.xlu0 %2438, %v2330
    %v2440 = vpop.permute.xlu0 %2439
    %2441 = vset.pattern.permute.xlu0 0
    %2442 = vperm.xlu0 %2441, %v2331
    %v2443 = vpop.permute.xlu0 %2442
    %2444 = vset.pattern.permute.xlu0 0
    %2445 = vperm.xlu0 %2444, %v2332
    %v2446 = vpop.permute.xlu0 %2445
    %2447 = vset.pattern.permute.xlu0 0
    %2448 = vperm.xlu0 %2447, %v2333
    %v2449 = vpop.permute.xlu0 %2448
    %2450 = vset.pattern.permute.xlu0 0
    %2451 = vperm.xlu0 %2450, %v2334
    %v2452 = vpop.permute.xlu0 %2451
    %2453 = vset.pattern.permute.xlu0 0
    %2454 = vperm.xlu0 %2453, %v2335
    %v2455 = vpop.permute.xlu0 %2454
    %2456 = vset.pattern.permute.xlu0 0
    %2457 = vperm.xlu0 %2456, %v2336
    %v2458 = vpop.permute.xlu0 %2457
    %2459 = vset.pattern.permute.xlu0 0
    %2460 = vperm.xlu0 %2459, %v2337
    %v2461 = vpop.permute.xlu0 %2460
    %2462 = vset.pattern.permute.xlu0 0
    %2463 = vperm.xlu0 %2462, %v2338
    %v2464 = vpop.permute.xlu0 %2463
    %2465 = vset.pattern.permute.xlu0 0
    %2466 = vperm.xlu0 %2465, %v2339
    %v2467 = vpop.permute.xlu0 %2466
    %v2468 = vperm.slane %v2374, %v1079
    %v2469 = vperm.slane %v2377, %v1081
    %v2470 = vsel %vm1083, %v2469, %v2468
    %v2471 = vperm.slane %v2380, %v1079
    %v2472 = vperm.slane %v2383, %v1081
    %v2473 = vsel %vm1083, %v2472, %v2471
    %v2474 = vperm.slane %v2386, %v1079
    %v2475 = vperm.slane %v2389, %v1081
    %v2476 = vsel %vm1083, %v2475, %v2474
    %v2477 = vperm.slane %v2392, %v1079
    %v2478 = vperm.slane %v2395, %v1081
    %v2479 = vsel %vm1083, %v2478, %v2477
    %v2480 = vperm.slane %v2398, %v1079
    %v2481 = vperm.slane %v2401, %v1081
    %v2482 = vsel %vm1083, %v2481, %v2480
    %v2483 = vperm.slane %v2404, %v1079
    %v2484 = vperm.slane %v2407, %v1081
    %v2485 = vsel %vm1083, %v2484, %v2483
    %v2486 = vperm.slane %v2410, %v1079
    %v2487 = vperm.slane %v2413, %v1081
    %v2488 = vsel %vm1083, %v2487, %v2486
    %v2489 = vperm.slane %v2416, %v1079
    %v2490 = vperm.slane %v2419, %v1081
    %v2491 = vsel %vm1083, %v2490, %v2489
    %v2492 = vperm.slane %v2422, %v1079
    %v2493 = vperm.slane %v2425, %v1081
    %v2494 = vsel %vm1083, %v2493, %v2492
    %v2495 = vperm.slane %v2428, %v1079
    %v2496 = vperm.slane %v2431, %v1081
    %v2497 = vsel %vm1083, %v2496, %v2495
    %v2498 = vperm.slane %v2434, %v1079
    %v2499 = vperm.slane %v2437, %v1081
    %v2500 = vsel %vm1083, %v2499, %v2498
    %v2501 = vperm.slane %v2440, %v1079
    %v2502 = vperm.slane %v2443, %v1081
    %v2503 = vsel %vm1083, %v2502, %v2501
    %v2504 = vperm.slane %v2446, %v1079
    %v2505 = vperm.slane %v2449, %v1081
    %v2506 = vsel %vm1083, %v2505, %v2504
    %v2507 = vperm.slane %v2452, %v1079
    %v2508 = vperm.slane %v2455, %v1081
    %v2509 = vsel %vm1083, %v2508, %v2507
    %v2510 = vperm.slane %v2458, %v1079
    %v2511 = vperm.slane %v2461, %v1081
    %v2512 = vsel %vm1083, %v2511, %v2510
    %v2513 = vperm.slane %v2464, %v1079
    %v2514 = vperm.slane %v2467, %v1081
    %v2515 = vsel %vm1083, %v2514, %v2513
    %v2516 = vsel %vm1130, %v2473, %v2470
    %v2517 = vsel %vm1132, %v2476, %v2516
    %v2518 = vsel %vm1134, %v2479, %v2517
    %v2519 = vsel %vm1136, %v2482, %v2518
    %v2520 = vsel %vm1138, %v2485, %v2519
    %v2521 = vsel %vm1140, %v2488, %v2520
    %v2522 = vsel %vm1142, %v2491, %v2521
    %v2523 = vsel %vm1130, %v2497, %v2494
    %v2524 = vsel %vm1132, %v2500, %v2523
    %v2525 = vsel %vm1134, %v2503, %v2524
    %v2526 = vsel %vm1136, %v2506, %v2525
    %v2527 = vsel %vm1138, %v2509, %v2526
    %v2528 = vsel %vm1140, %v2512, %v2527
    %v2529 = vsel %vm1142, %v2515, %v2528
    %v2532 = vsel %vm1153, %v2522, -inf
    %2533 = vmax.xlane.f32.xlu0 %v2532
    %v2534 = vpop.xlane.xlu0 %2533
    %v2535 = vsel %vm1153, %v2529, -inf
    %2536 = vmax.xlane.f32.xlu0 %v2535
    %v2537 = vpop.xlane.xlu0 %2536
    %v2540 = vperm.slane %v2534, 0
    %v2541 = vperm.slane %v2534, 1
    %v2542 = vperm.slane %v2534, 2
    %v2543 = vperm.slane %v2534, 3
    %v2544 = vperm.slane %v2534, 4
    %v2545 = vperm.slane %v2534, 5
    %v2546 = vperm.slane %v2534, 6
    %v2547 = vperm.slane %v2534, 7
    %v2548 = vperm.slane %v2537, 0
    %v2549 = vperm.slane %v2537, 1
    %v2550 = vperm.slane %v2537, 2
    %v2551 = vperm.slane %v2537, 3
    %v2552 = vperm.slane %v2537, 4
    %v2553 = vperm.slane %v2537, 5
    %v2554 = vperm.slane %v2537, 6
    %v2555 = vperm.slane %v2537, 7
    %v2572 = vsub.f32 %v2308, %v2540
    %v2573 = vsub.f32 %v2309, %v2540
    %v2574 = vsub.f32 %v2310, %v2541
    %v2575 = vsub.f32 %v2311, %v2541
    %v2576 = vsub.f32 %v2312, %v2542
    %v2577 = vsub.f32 %v2313, %v2542
    %v2578 = vsub.f32 %v2314, %v2543
    %v2579 = vsub.f32 %v2315, %v2543
    %v2580 = vsub.f32 %v2316, %v2544
    %v2581 = vsub.f32 %v2317, %v2544
    %v2582 = vsub.f32 %v2318, %v2545
    %v2583 = vsub.f32 %v2319, %v2545
    %v2584 = vsub.f32 %v2320, %v2546
    %v2585 = vsub.f32 %v2321, %v2546
    %v2586 = vsub.f32 %v2322, %v2547
    %v2587 = vsub.f32 %v2323, %v2547
    %v2588 = vsub.f32 %v2324, %v2548
    %v2589 = vsub.f32 %v2325, %v2548
    %v2590 = vsub.f32 %v2326, %v2549
    %v2591 = vsub.f32 %v2327, %v2549
    %v2592 = vsub.f32 %v2328, %v2550
    %v2593 = vsub.f32 %v2329, %v2550
    %v2594 = vsub.f32 %v2330, %v2551
    %v2595 = vsub.f32 %v2331, %v2551
    %v2596 = vsub.f32 %v2332, %v2552
    %v2597 = vsub.f32 %v2333, %v2552
    %v2598 = vsub.f32 %v2334, %v2553
    %v2599 = vsub.f32 %v2335, %v2553
    %v2600 = vsub.f32 %v2336, %v2554
    %v2601 = vsub.f32 %v2337, %v2554
    %v2602 = vsub.f32 %v2338, %v2555
    %v2603 = vsub.f32 %v2339, %v2555
    %v2604 = vmul.f32 %v2572, 1.442695
    %v2605 = vpow.pop %v2604
    %v2606 = vmul.f32 %v2573, 1.442695
    %v2607 = vpow.pop %v2606
    %v2608 = vmul.f32 %v2574, 1.442695
    %v2609 = vpow.pop %v2608
    %v2610 = vmul.f32 %v2575, 1.442695
    %v2611 = vpow.pop %v2610
    %v2612 = vmul.f32 %v2576, 1.442695
    %v2613 = vpow.pop %v2612
    %v2614 = vmul.f32 %v2577, 1.442695
    %v2615 = vpow.pop %v2614
    %v2616 = vmul.f32 %v2578, 1.442695
    %v2617 = vpow.pop %v2616
    %v2618 = vmul.f32 %v2579, 1.442695
    %v2619 = vpow.pop %v2618
    %v2620 = vmul.f32 %v2580, 1.442695
    %v2621 = vpow.pop %v2620
    %v2622 = vmul.f32 %v2581, 1.442695
    %v2623 = vpow.pop %v2622
    %v2624 = vmul.f32 %v2582, 1.442695
    %v2625 = vpow.pop %v2624
    %v2626 = vmul.f32 %v2583, 1.442695
    %v2627 = vpow.pop %v2626
    %v2628 = vmul.f32 %v2584, 1.442695
    %v2629 = vpow.pop %v2628
    %v2630 = vmul.f32 %v2585, 1.442695
    %v2631 = vpow.pop %v2630
    %v2632 = vmul.f32 %v2586, 1.442695
    %v2633 = vpow.pop %v2632
    %v2634 = vmul.f32 %v2587, 1.442695
    %v2635 = vpow.pop %v2634
    %v2636 = vmul.f32 %v2588, 1.442695
    %v2637 = vpow.pop %v2636
    %v2638 = vmul.f32 %v2589, 1.442695
    %v2639 = vpow.pop %v2638
    %v2640 = vmul.f32 %v2590, 1.442695
    %v2641 = vpow.pop %v2640
    %v2642 = vmul.f32 %v2591, 1.442695
    %v2643 = vpow.pop %v2642
    %v2644 = vmul.f32 %v2592, 1.442695
    %v2645 = vpow.pop %v2644
    %v2646 = vmul.f32 %v2593, 1.442695
    %v2647 = vpow.pop %v2646
    %v2648 = vmul.f32 %v2594, 1.442695
    %v2649 = vpow.pop %v2648
    %v2650 = vmul.f32 %v2595, 1.442695
    %v2651 = vpow.pop %v2650
    %v2652 = vmul.f32 %v2596, 1.442695
    %v2653 = vpow.pop %v2652
    %v2654 = vmul.f32 %v2597, 1.442695
    %v2655 = vpow.pop %v2654
    %v2656 = vmul.f32 %v2598, 1.442695
    %v2657 = vpow.pop %v2656
    %v2658 = vmul.f32 %v2599, 1.442695
    %v2659 = vpow.pop %v2658
    %v2660 = vmul.f32 %v2600, 1.442695
    %v2661 = vpow.pop %v2660
    %v2662 = vmul.f32 %v2601, 1.442695
    %v2663 = vpow.pop %v2662
    %v2664 = vmul.f32 %v2602, 1.442695
    %v2665 = vpow.pop %v2664
    %v2666 = vmul.f32 %v2603, 1.442695
    %v2667 = vpow.pop %v2666
    %2700 = vset.pattern.permute.xlu0 0
    %2701 = vperm.xlu0 %2700, %v2605
    %v2702 = vpop.permute.xlu0 %2701
    %2703 = vset.pattern.permute.xlu0 0
    %2704 = vperm.xlu0 %2703, %v2607
    %v2705 = vpop.permute.xlu0 %2704
    %2706 = vset.pattern.permute.xlu0 0
    %2707 = vperm.xlu0 %2706, %v2609
    %v2708 = vpop.permute.xlu0 %2707
    %2709 = vset.pattern.permute.xlu0 0
    %2710 = vperm.xlu0 %2709, %v2611
    %v2711 = vpop.permute.xlu0 %2710
    %2712 = vset.pattern.permute.xlu0 0
    %2713 = vperm.xlu0 %2712, %v2613
    %v2714 = vpop.permute.xlu0 %2713
    %2715 = vset.pattern.permute.xlu0 0
    %2716 = vperm.xlu0 %2715, %v2615
    %v2717 = vpop.permute.xlu0 %2716
    %2718 = vset.pattern.permute.xlu0 0
    %2719 = vperm.xlu0 %2718, %v2617
    %v2720 = vpop.permute.xlu0 %2719
    %2721 = vset.pattern.permute.xlu0 0
    %2722 = vperm.xlu0 %2721, %v2619
    %v2723 = vpop.permute.xlu0 %2722
    %2724 = vset.pattern.permute.xlu0 0
    %2725 = vperm.xlu0 %2724, %v2621
    %v2726 = vpop.permute.xlu0 %2725
    %2727 = vset.pattern.permute.xlu0 0
    %2728 = vperm.xlu0 %2727, %v2623
    %v2729 = vpop.permute.xlu0 %2728
    %2730 = vset.pattern.permute.xlu0 0
    %2731 = vperm.xlu0 %2730, %v2625
    %v2732 = vpop.permute.xlu0 %2731
    %2733 = vset.pattern.permute.xlu0 0
    %2734 = vperm.xlu0 %2733, %v2627
    %v2735 = vpop.permute.xlu0 %2734
    %2736 = vset.pattern.permute.xlu0 0
    %2737 = vperm.xlu0 %2736, %v2629
    %v2738 = vpop.permute.xlu0 %2737
    %2739 = vset.pattern.permute.xlu0 0
    %2740 = vperm.xlu0 %2739, %v2631
    %v2741 = vpop.permute.xlu0 %2740
    %2742 = vset.pattern.permute.xlu0 0
    %2743 = vperm.xlu0 %2742, %v2633
    %v2744 = vpop.permute.xlu0 %2743
    %2745 = vset.pattern.permute.xlu0 0
    %2746 = vperm.xlu0 %2745, %v2635
    %v2747 = vpop.permute.xlu0 %2746
    %2748 = vset.pattern.permute.xlu0 0
    %2749 = vperm.xlu0 %2748, %v2637
    %v2750 = vpop.permute.xlu0 %2749
    %2751 = vset.pattern.permute.xlu0 0
    %2752 = vperm.xlu0 %2751, %v2639
    %v2753 = vpop.permute.xlu0 %2752
    %2754 = vset.pattern.permute.xlu0 0
    %2755 = vperm.xlu0 %2754, %v2641
    %v2756 = vpop.permute.xlu0 %2755
    %2757 = vset.pattern.permute.xlu0 0
    %2758 = vperm.xlu0 %2757, %v2643
    %v2759 = vpop.permute.xlu0 %2758
    %2760 = vset.pattern.permute.xlu0 0
    %2761 = vperm.xlu0 %2760, %v2645
    %v2762 = vpop.permute.xlu0 %2761
    %2763 = vset.pattern.permute.xlu0 0
    %2764 = vperm.xlu0 %2763, %v2647
    %v2765 = vpop.permute.xlu0 %2764
    %2766 = vset.pattern.permute.xlu0 0
    %2767 = vperm.xlu0 %2766, %v2649
    %v2768 = vpop.permute.xlu0 %2767
    %2769 = vset.pattern.permute.xlu0 0
    %2770 = vperm.xlu0 %2769, %v2651
    %v2771 = vpop.permute.xlu0 %2770
    %2772 = vset.pattern.permute.xlu0 0
    %2773 = vperm.xlu0 %2772, %v2653
    %v2774 = vpop.permute.xlu0 %2773
    %2775 = vset.pattern.permute.xlu0 0
    %2776 = vperm.xlu0 %2775, %v2655
    %v2777 = vpop.permute.xlu0 %2776
    %2778 = vset.pattern.permute.xlu0 0
    %2779 = vperm.xlu0 %2778, %v2657
    %v2780 = vpop.permute.xlu0 %2779
    %2781 = vset.pattern.permute.xlu0 0
    %2782 = vperm.xlu0 %2781, %v2659
    %v2783 = vpop.permute.xlu0 %2782
    %2784 = vset.pattern.permute.xlu0 0
    %2785 = vperm.xlu0 %2784, %v2661
    %v2786 = vpop.permute.xlu0 %2785
    %2787 = vset.pattern.permute.xlu0 0
    %2788 = vperm.xlu0 %2787, %v2663
    %v2789 = vpop.permute.xlu0 %2788
    %2790 = vset.pattern.permute.xlu0 0
    %2791 = vperm.xlu0 %2790, %v2665
    %v2792 = vpop.permute.xlu0 %2791
    %2793 = vset.pattern.permute.xlu0 0
    %2794 = vperm.xlu0 %2793, %v2667
    %v2795 = vpop.permute.xlu0 %2794
    %v2796 = vperm.slane %v2702, %v1079
    %v2797 = vperm.slane %v2705, %v1081
    %v2798 = vsel %vm1083, %v2797, %v2796
    %v2799 = vperm.slane %v2708, %v1079
    %v2800 = vperm.slane %v2711, %v1081
    %v2801 = vsel %vm1083, %v2800, %v2799
    %v2802 = vperm.slane %v2714, %v1079
    %v2803 = vperm.slane %v2717, %v1081
    %v2804 = vsel %vm1083, %v2803, %v2802
    %v2805 = vperm.slane %v2720, %v1079
    %v2806 = vperm.slane %v2723, %v1081
    %v2807 = vsel %vm1083, %v2806, %v2805
    %v2808 = vperm.slane %v2726, %v1079
    %v2809 = vperm.slane %v2729, %v1081
    %v2810 = vsel %vm1083, %v2809, %v2808
    %v2811 = vperm.slane %v2732, %v1079
    %v2812 = vperm.slane %v2735, %v1081
    %v2813 = vsel %vm1083, %v2812, %v2811
    %v2814 = vperm.slane %v2738, %v1079
    %v2815 = vperm.slane %v2741, %v1081
    %v2816 = vsel %vm1083, %v2815, %v2814
    %v2817 = vperm.slane %v2744, %v1079
    %v2818 = vperm.slane %v2747, %v1081
    %v2819 = vsel %vm1083, %v2818, %v2817
    %v2820 = vperm.slane %v2750, %v1079
    %v2821 = vperm.slane %v2753, %v1081
    %v2822 = vsel %vm1083, %v2821, %v2820
    %v2823 = vperm.slane %v2756, %v1079
    %v2824 = vperm.slane %v2759, %v1081
    %v2825 = vsel %vm1083, %v2824, %v2823
    %v2826 = vperm.slane %v2762, %v1079
    %v2827 = vperm.slane %v2765, %v1081
    %v2828 = vsel %vm1083, %v2827, %v2826
    %v2829 = vperm.slane %v2768, %v1079
    %v2830 = vperm.slane %v2771, %v1081
    %v2831 = vsel %vm1083, %v2830, %v2829
    %v2832 = vperm.slane %v2774, %v1079
    %v2833 = vperm.slane %v2777, %v1081
    %v2834 = vsel %vm1083, %v2833, %v2832
    %v2835 = vperm.slane %v2780, %v1079
    %v2836 = vperm.slane %v2783, %v1081
    %v2837 = vsel %vm1083, %v2836, %v2835
    %v2838 = vperm.slane %v2786, %v1079
    %v2839 = vperm.slane %v2789, %v1081
    %v2840 = vsel %vm1083, %v2839, %v2838
    %v2841 = vperm.slane %v2792, %v1079
    %v2842 = vperm.slane %v2795, %v1081
    %v2843 = vsel %vm1083, %v2842, %v2841
    %v2844 = vsel %vm1130, %v2801, %v2798
    %v2845 = vsel %vm1132, %v2804, %v2844
    %v2846 = vsel %vm1134, %v2807, %v2845
    %v2847 = vsel %vm1136, %v2810, %v2846
    %v2848 = vsel %vm1138, %v2813, %v2847
    %v2849 = vsel %vm1140, %v2816, %v2848
    %v2850 = vsel %vm1142, %v2819, %v2849
    %v2851 = vsel %vm1130, %v2825, %v2822
    %v2852 = vsel %vm1132, %v2828, %v2851
    %v2853 = vsel %vm1134, %v2831, %v2852
    %v2854 = vsel %vm1136, %v2834, %v2853
    %v2855 = vsel %vm1138, %v2837, %v2854
    %v2856 = vsel %vm1140, %v2840, %v2855
    %v2857 = vsel %vm1142, %v2843, %v2856
    %v2860 = vsel %vm1153, %v2850, 0.0
    %2861 = vadd.xlane.f32.xlu0 %v2860
    %v2862 = vpop.xlane.xlu0 %2861
    %v2863 = vsel %vm1153, %v2857, 0.0
    %2864 = vadd.xlane.f32.xlu0 %v2863
    %v2865 = vpop.xlane.xlu0 %2864
    %v2866 = vrcp.pop %v2862
    %v2867 = vrcp.pop %v2865
    %v2870 = vperm.slane %v2866, 0
    %v2871 = vperm.slane %v2866, 1
    %v2872 = vperm.slane %v2866, 2
    %v2873 = vperm.slane %v2866, 3
    %v2874 = vperm.slane %v2866, 4
    %v2875 = vperm.slane %v2866, 5
    %v2876 = vperm.slane %v2866, 6
    %v2877 = vperm.slane %v2866, 7
    %v2878 = vperm.slane %v2867, 0
    %v2879 = vperm.slane %v2867, 1
    %v2880 = vperm.slane %v2867, 2
    %v2881 = vperm.slane %v2867, 3
    %v2882 = vperm.slane %v2867, 4
    %v2883 = vperm.slane %v2867, 5
    %v2884 = vperm.slane %v2867, 6
    %v2885 = vperm.slane %v2867, 7
    %v2902 = vmul.f32 %v2605, %v2870
    %v2903 = vmul.f32 %v2607, %v2870
    %v2904 = vmul.f32 %v2609, %v2871
    %v2905 = vmul.f32 %v2611, %v2871
    %v2906 = vmul.f32 %v2613, %v2872
    %v2907 = vmul.f32 %v2615, %v2872
    %v2908 = vmul.f32 %v2617, %v2873
    %v2909 = vmul.f32 %v2619, %v2873
    %v2910 = vmul.f32 %v2621, %v2874
    %v2911 = vmul.f32 %v2623, %v2874
    %v2912 = vmul.f32 %v2625, %v2875
    %v2913 = vmul.f32 %v2627, %v2875
    %v2914 = vmul.f32 %v2629, %v2876
    %v2915 = vmul.f32 %v2631, %v2876
    %v2916 = vmul.f32 %v2633, %v2877
    %v2917 = vmul.f32 %v2635, %v2877
    %v2918 = vmul.f32 %v2637, %v2878
    %v2919 = vmul.f32 %v2639, %v2878
    %v2920 = vmul.f32 %v2641, %v2879
    %v2921 = vmul.f32 %v2643, %v2879
    %v2922 = vmul.f32 %v2645, %v2880
    %v2923 = vmul.f32 %v2647, %v2880
    %v2924 = vmul.f32 %v2649, %v2881
    %v2925 = vmul.f32 %v2651, %v2881
    %v2926 = vmul.f32 %v2653, %v2882
    %v2927 = vmul.f32 %v2655, %v2882
    %v2928 = vmul.f32 %v2657, %v2883
    %v2929 = vmul.f32 %v2659, %v2883
    %v2930 = vmul.f32 %v2661, %v2884
    %v2931 = vmul.f32 %v2663, %v2884
    %v2932 = vmul.f32 %v2665, %v2885
    %v2933 = vmul.f32 %v2667, %v2885
    %v2934 = vpack.c.bf16 %v2903, %v2902
    %v2935 = vpack.c.bf16 %v2905, %v2904
    %v2936 = vpack.c.bf16 %v2907, %v2906
    %v2937 = vpack.c.bf16 %v2909, %v2908
    %v2938 = vpack.c.bf16 %v2911, %v2910
    %v2939 = vpack.c.bf16 %v2913, %v2912
    %v2940 = vpack.c.bf16 %v2915, %v2914
    %v2941 = vpack.c.bf16 %v2917, %v2916
    %v2942 = vpack.c.bf16 %v2919, %v2918
    %v2943 = vpack.c.bf16 %v2921, %v2920
    %v2944 = vpack.c.bf16 %v2923, %v2922
    %v2945 = vpack.c.bf16 %v2925, %v2924
    %v2946 = vpack.c.bf16 %v2927, %v2926
    %v2947 = vpack.c.bf16 %v2929, %v2928
    %v2948 = vpack.c.bf16 %v2931, %v2930
    %v2949 = vpack.c.bf16 %v2933, %v2932
    %v2950 = vpack.c.bf16 %v1918, %v1916
    %s2951 = scalar_lea.vmem %s5, 1
    %v2952 = vld [vmem:[%s2951] sm:$0x1]
    %v2954 = vperm.slane %v2952, 0
    %v2972 = vunpack.c.l.b16 %v2934
    %v2973 = vunpack.c.h.b16 %v2934
    %v2974 = vunpack.c.l.b16 %v2935
    %v2975 = vunpack.c.h.b16 %v2935
    %v2976 = vunpack.c.l.b16 %v2936
    %v2977 = vunpack.c.h.b16 %v2936
    %v2978 = vunpack.c.l.b16 %v2937
    %v2979 = vunpack.c.h.b16 %v2937
    %v2980 = vunpack.c.l.b16 %v2938
    %v2981 = vunpack.c.h.b16 %v2938
    %v2982 = vunpack.c.l.b16 %v2939
    %v2983 = vunpack.c.h.b16 %v2939
    %v2984 = vunpack.c.l.b16 %v2940
    %v2985 = vunpack.c.h.b16 %v2940
    %v2986 = vunpack.c.l.b16 %v2941
    %v2987 = vunpack.c.h.b16 %v2941
    %v2988 = vunpack.c.l.b16 %v2942
    %v2989 = vunpack.c.h.b16 %v2942
    %v2990 = vunpack.c.l.b16 %v2943
    %v2991 = vunpack.c.h.b16 %v2943
    %v2992 = vunpack.c.l.b16 %v2944
    %v2993 = vunpack.c.h.b16 %v2944
    %v2994 = vunpack.c.l.b16 %v2945
    %v2995 = vunpack.c.h.b16 %v2945
    %v2996 = vunpack.c.l.b16 %v2946
    %v2997 = vunpack.c.h.b16 %v2946
    %v2998 = vunpack.c.l.b16 %v2947
    %v2999 = vunpack.c.h.b16 %v2947
    %v3000 = vunpack.c.l.b16 %v2948
    %v3001 = vunpack.c.h.b16 %v2948
    %v3002 = vunpack.c.l.b16 %v2949
    %v3003 = vunpack.c.h.b16 %v2949
    %3004 = vset.pattern.permute.xlu0 0
    %3005 = vperm.xlu0 %3004, %v2972
    %v3006 = vpop.permute.xlu0 %3005
    %3007 = vset.pattern.permute.xlu0 0
    %3008 = vperm.xlu0 %3007, %v2973
    %v3009 = vpop.permute.xlu0 %3008
    %3010 = vset.pattern.permute.xlu0 0
    %3011 = vperm.xlu0 %3010, %v2974
    %v3012 = vpop.permute.xlu0 %3011
    %3013 = vset.pattern.permute.xlu0 0
    %3014 = vperm.xlu0 %3013, %v2975
    %v3015 = vpop.permute.xlu0 %3014
    %3016 = vset.pattern.permute.xlu0 0
    %3017 = vperm.xlu0 %3016, %v2976
    %v3018 = vpop.permute.xlu0 %3017
    %3019 = vset.pattern.permute.xlu0 0
    %3020 = vperm.xlu0 %3019, %v2977
    %v3021 = vpop.permute.xlu0 %3020
    %3022 = vset.pattern.permute.xlu0 0
    %3023 = vperm.xlu0 %3022, %v2978
    %v3024 = vpop.permute.xlu0 %3023
    %3025 = vset.pattern.permute.xlu0 0
    %3026 = vperm.xlu0 %3025, %v2979
    %v3027 = vpop.permute.xlu0 %3026
    %3028 = vset.pattern.permute.xlu0 0
    %3029 = vperm.xlu0 %3028, %v2980
    %v3030 = vpop.permute.xlu0 %3029
    %3031 = vset.pattern.permute.xlu0 0
    %3032 = vperm.xlu0 %3031, %v2981
    %v3033 = vpop.permute.xlu0 %3032
    %3034 = vset.pattern.permute.xlu0 0
    %3035 = vperm.xlu0 %3034, %v2982
    %v3036 = vpop.permute.xlu0 %3035
    %3037 = vset.pattern.permute.xlu0 0
    %3038 = vperm.xlu0 %3037, %v2983
    %v3039 = vpop.permute.xlu0 %3038
    %3040 = vset.pattern.permute.xlu0 0
    %3041 = vperm.xlu0 %3040, %v2984
    %v3042 = vpop.permute.xlu0 %3041
    %3043 = vset.pattern.permute.xlu0 0
    %3044 = vperm.xlu0 %3043, %v2985
    %v3045 = vpop.permute.xlu0 %3044
    %3046 = vset.pattern.permute.xlu0 0
    %3047 = vperm.xlu0 %3046, %v2986
    %v3048 = vpop.permute.xlu0 %3047
    %3049 = vset.pattern.permute.xlu0 0
    %3050 = vperm.xlu0 %3049, %v2987
    %v3051 = vpop.permute.xlu0 %3050
    %3052 = vset.pattern.permute.xlu0 0
    %3053 = vperm.xlu0 %3052, %v2988
    %v3054 = vpop.permute.xlu0 %3053
    %3055 = vset.pattern.permute.xlu0 0
    %3056 = vperm.xlu0 %3055, %v2989
    %v3057 = vpop.permute.xlu0 %3056
    %3058 = vset.pattern.permute.xlu0 0
    %3059 = vperm.xlu0 %3058, %v2990
    %v3060 = vpop.permute.xlu0 %3059
    %3061 = vset.pattern.permute.xlu0 0
    %3062 = vperm.xlu0 %3061, %v2991
    %v3063 = vpop.permute.xlu0 %3062
    %3064 = vset.pattern.permute.xlu0 0
    %3065 = vperm.xlu0 %3064, %v2992
    %v3066 = vpop.permute.xlu0 %3065
    %3067 = vset.pattern.permute.xlu0 0
    %3068 = vperm.xlu0 %3067, %v2993
    %v3069 = vpop.permute.xlu0 %3068
    %3070 = vset.pattern.permute.xlu0 0
    %3071 = vperm.xlu0 %3070, %v2994
    %v3072 = vpop.permute.xlu0 %3071
    %3073 = vset.pattern.permute.xlu0 0
    %3074 = vperm.xlu0 %3073, %v2995
    %v3075 = vpop.permute.xlu0 %3074
    %3076 = vset.pattern.permute.xlu0 0
    %3077 = vperm.xlu0 %3076, %v2996
    %v3078 = vpop.permute.xlu0 %3077
    %3079 = vset.pattern.permute.xlu0 0
    %3080 = vperm.xlu0 %3079, %v2997
    %v3081 = vpop.permute.xlu0 %3080
    %3082 = vset.pattern.permute.xlu0 0
    %3083 = vperm.xlu0 %3082, %v2998
    %v3084 = vpop.permute.xlu0 %3083
    %3085 = vset.pattern.permute.xlu0 0
    %3086 = vperm.xlu0 %3085, %v2999
    %v3087 = vpop.permute.xlu0 %3086
    %3088 = vset.pattern.permute.xlu0 0
    %3089 = vperm.xlu0 %3088, %v3000
    %v3090 = vpop.permute.xlu0 %3089
    %3091 = vset.pattern.permute.xlu0 0
    %3092 = vperm.xlu0 %3091, %v3001
    %v3093 = vpop.permute.xlu0 %3092
    %3094 = vset.pattern.permute.xlu0 0
    %3095 = vperm.xlu0 %3094, %v3002
    %v3096 = vpop.permute.xlu0 %3095
    %3097 = vset.pattern.permute.xlu0 0
    %3098 = vperm.xlu0 %3097, %v3003
    %v3099 = vpop.permute.xlu0 %3098
    %v3100 = vperm.slane %v3006, %v1079
    %v3101 = vperm.slane %v3009, %v1081
    %v3102 = vsel %vm1083, %v3101, %v3100
    %v3103 = vperm.slane %v3012, %v1079
    %v3104 = vperm.slane %v3015, %v1081
    %v3105 = vsel %vm1083, %v3104, %v3103
    %v3106 = vperm.slane %v3018, %v1079
    %v3107 = vperm.slane %v3021, %v1081
    %v3108 = vsel %vm1083, %v3107, %v3106
    %v3109 = vperm.slane %v3024, %v1079
    %v3110 = vperm.slane %v3027, %v1081
    %v3111 = vsel %vm1083, %v3110, %v3109
    %v3112 = vperm.slane %v3030, %v1079
    %v3113 = vperm.slane %v3033, %v1081
    %v3114 = vsel %vm1083, %v3113, %v3112
    %v3115 = vperm.slane %v3036, %v1079
    %v3116 = vperm.slane %v3039, %v1081
    %v3117 = vsel %vm1083, %v3116, %v3115
    %v3118 = vperm.slane %v3042, %v1079
    %v3119 = vperm.slane %v3045, %v1081
    %v3120 = vsel %vm1083, %v3119, %v3118
    %v3121 = vperm.slane %v3048, %v1079
    %v3122 = vperm.slane %v3051, %v1081
    %v3123 = vsel %vm1083, %v3122, %v3121
    %v3124 = vperm.slane %v3054, %v1079
    %v3125 = vperm.slane %v3057, %v1081
    %v3126 = vsel %vm1083, %v3125, %v3124
    %v3127 = vperm.slane %v3060, %v1079
    %v3128 = vperm.slane %v3063, %v1081
    %v3129 = vsel %vm1083, %v3128, %v3127
    %v3130 = vperm.slane %v3066, %v1079
    %v3131 = vperm.slane %v3069, %v1081
    %v3132 = vsel %vm1083, %v3131, %v3130
    %v3133 = vperm.slane %v3072, %v1079
    %v3134 = vperm.slane %v3075, %v1081
    %v3135 = vsel %vm1083, %v3134, %v3133
    %v3136 = vperm.slane %v3078, %v1079
    %v3137 = vperm.slane %v3081, %v1081
    %v3138 = vsel %vm1083, %v3137, %v3136
    %v3139 = vperm.slane %v3084, %v1079
    %v3140 = vperm.slane %v3087, %v1081
    %v3141 = vsel %vm1083, %v3140, %v3139
    %v3142 = vperm.slane %v3090, %v1079
    %v3143 = vperm.slane %v3093, %v1081
    %v3144 = vsel %vm1083, %v3143, %v3142
    %v3145 = vperm.slane %v3096, %v1079
    %v3146 = vperm.slane %v3099, %v1081
    %v3147 = vsel %vm1083, %v3146, %v3145
    %v3148 = vsel %vm1130, %v3105, %v3102
    %v3149 = vsel %vm1132, %v3108, %v3148
    %v3150 = vsel %vm1134, %v3111, %v3149
    %v3151 = vsel %vm1136, %v3114, %v3150
    %v3152 = vsel %vm1138, %v3117, %v3151
    %v3153 = vsel %vm1140, %v3120, %v3152
    %v3154 = vsel %vm1142, %v3123, %v3153
    %v3155 = vsel %vm1130, %v3129, %v3126
    %v3156 = vsel %vm1132, %v3132, %v3155
    %v3157 = vsel %vm1134, %v3135, %v3156
    %v3158 = vsel %vm1136, %v3138, %v3157
    %v3159 = vsel %vm1138, %v3141, %v3158
    %v3160 = vsel %vm1140, %v3144, %v3159
    %v3161 = vsel %vm1142, %v3147, %v3160
    %v3162 = vpack.c.b16 %v3161, %v3154
    %v3164 = vsel %vm1153, %v3162, 0
    %3166 = vmatpush.bf16.msra.mxu0 0
    %3167 = vmatpush.bf16.msra.mxu0 0
    %3168 = vmatpush.bf16.msra.mxu0 0
    %3169 = vmatpush.bf16.msra.mxu0 0
    %3170 = vmatpush.bf16.msra.mxu0 0
    %3171 = vmatpush.bf16.msra.mxu0 0
    %3172 = vmatpush.bf16.msra.mxu0 0
    %3173 = vmatpush.bf16.msra.mxu0 %v2950
    %3174 = vmatmul.bf16.gmra.mxu0 %v3164
    %v3175 = vpop.f32.mrf.mxu0
    %v3176 = vadd.f32 %v2954, %v3175
    %v3177 = vpop.f32.mrf.mxu0
    %v3178 = vadd.f32 %v2954, %v3177
    %3179 = vdwg.mxu0
    %v3180 = vpack.c.bf16 %v3178, %v3176
    %v3181 = vld [vmem:[#allocation13] sm:$0xff]
    %v3182 = vld [vmem:[#allocation13 + $0x8] sm:$0xff]
    %v3183 = vld [vmem:[#allocation13 + $0x10] sm:$0xff]
    %v3184 = vld [vmem:[#allocation13 + $0x18] sm:$0xff]
    %v3185 = vld [vmem:[#allocation13 + $0x20] sm:$0xff]
    %v3186 = vld [vmem:[#allocation13 + $0x28] sm:$0xff]
    %v3187 = vld [vmem:[#allocation13 + $0x30] sm:$0xff]
    %v3188 = vld [vmem:[#allocation13 + $0x38] sm:$0xff]
    %v3189 = vld [vmem:[#allocation13 + $0x40] sm:$0xff]
    %v3190 = vld [vmem:[#allocation13 + $0x48] sm:$0xff]
    %v3191 = vld [vmem:[#allocation13 + $0x50] sm:$0xff]
    %v3192 = vld [vmem:[#allocation13 + $0x58] sm:$0xff]
    %v3193 = vld [vmem:[#allocation13 + $0x60] sm:$0xff]
    %v3194 = vld [vmem:[#allocation13 + $0x68] sm:$0xff]
    %v3195 = vld [vmem:[#allocation13 + $0x70] sm:$0xff]
    %v3196 = vld [vmem:[#allocation13 + $0x78] sm:$0xff]
    %v3197 = vld [vmem:[%s8] sm:$0x3]
    %v3199 = vperm.slane %v3197, 0
    %v3200 = vperm.slane %v3197, 1
    %v3219 = vunpack.c.l.b16 %v3181
    %v3220 = vunpack.c.h.b16 %v3181
    %v3221 = vunpack.c.l.b16 %v3182
    %v3222 = vunpack.c.h.b16 %v3182
    %v3223 = vunpack.c.l.b16 %v3183
    %v3224 = vunpack.c.h.b16 %v3183
    %v3225 = vunpack.c.l.b16 %v3184
    %v3226 = vunpack.c.h.b16 %v3184
    %v3227 = vunpack.c.l.b16 %v3185
    %v3228 = vunpack.c.h.b16 %v3185
    %v3229 = vunpack.c.l.b16 %v3186
    %v3230 = vunpack.c.h.b16 %v3186
    %v3231 = vunpack.c.l.b16 %v3187
    %v3232 = vunpack.c.h.b16 %v3187
    %v3233 = vunpack.c.l.b16 %v3188
    %v3234 = vunpack.c.h.b16 %v3188
    %v3235 = vunpack.c.l.b16 %v3189
    %v3236 = vunpack.c.h.b16 %v3189
    %v3237 = vunpack.c.l.b16 %v3190
    %v3238 = vunpack.c.h.b16 %v3190
    %v3239 = vunpack.c.l.b16 %v3191
    %v3240 = vunpack.c.h.b16 %v3191
    %v3241 = vunpack.c.l.b16 %v3192
    %v3242 = vunpack.c.h.b16 %v3192
    %v3243 = vunpack.c.l.b16 %v3193
    %v3244 = vunpack.c.h.b16 %v3193
    %v3245 = vunpack.c.l.b16 %v3194
    %v3246 = vunpack.c.h.b16 %v3194
    %v3247 = vunpack.c.l.b16 %v3195
    %v3248 = vunpack.c.h.b16 %v3195
    %v3249 = vunpack.c.l.b16 %v3196
    %v3250 = vunpack.c.h.b16 %v3196
    %v3251 = vpack.c.b16 %v3221, %v3219
    %v3252 = vpack.c.b16 %v3222, %v3220
    %v3253 = vpack.c.b16 %v3225, %v3223
    %v3254 = vpack.c.b16 %v3226, %v3224
    %v3255 = vpack.c.b16 %v3229, %v3227
    %v3256 = vpack.c.b16 %v3230, %v3228
    %v3257 = vpack.c.b16 %v3233, %v3231
    %v3258 = vpack.c.b16 %v3234, %v3232
    %v3259 = vpack.c.b16 %v3237, %v3235
    %v3260 = vpack.c.b16 %v3238, %v3236
    %v3261 = vpack.c.b16 %v3241, %v3239
    %v3262 = vpack.c.b16 %v3242, %v3240
    %v3263 = vpack.c.b16 %v3245, %v3243
    %v3264 = vpack.c.b16 %v3246, %v3244
    %v3265 = vpack.c.b16 %v3249, %v3247
    %v3266 = vpack.c.b16 %v3250, %v3248
    %3283 = vmatpush.bf16.msra.mxu0 %v3265
    %3284 = vmatpush.bf16.msra.mxu0 %v3263
    %3285 = vmatpush.bf16.msra.mxu0 %v3261
    %3286 = vmatpush.bf16.msra.mxu0 %v3259
    %3287 = vmatpush.bf16.msra.mxu0 %v3257
    %3288 = vmatpush.bf16.msra.mxu0 %v3255
    %3289 = vmatpush.bf16.msra.mxu0 %v3253
    %3290 = vmatpush.bf16.msra.mxu0 %v3251
    %3291 = vmatmul.bf16.gmra.mxu0 %v3180
    %v3292 = vpop.f32.mrf.mxu0
    %v3293 = vadd.f32 %v3199, %v3292
    %v3294 = vpop.f32.mrf.mxu0
    %v3295 = vadd.f32 %v3199, %v3294
    %3296 = vdwg.mxu0
    %3297 = vmatpush.bf16.msra.mxu0 %v3266
    %3298 = vmatpush.bf16.msra.mxu0 %v3264
    %3299 = vmatpush.bf16.msra.mxu0 %v3262
    %3300 = vmatpush.bf16.msra.mxu0 %v3260
    %3301 = vmatpush.bf16.msra.mxu0 %v3258
    %3302 = vmatpush.bf16.msra.mxu0 %v3256
    %3303 = vmatpush.bf16.msra.mxu0 %v3254
    %3304 = vmatpush.bf16.msra.mxu0 %v3252
    %3305 = vmatmul.bf16.gmra.mxu0 %v3180
    %v3306 = vpop.f32.mrf.mxu0
    %v3307 = vadd.f32 %v3200, %v3306
    %v3308 = vpop.f32.mrf.mxu0
    %v3309 = vadd.f32 %v3200, %v3308
    %3310 = vdwg.mxu0
    %v3311 = vmul.f32 %v3307, 1.442695
    %v3312 = vpow.pop %v3311
    %v3313 = vmul.f32 %v3309, 1.442695
    %v3314 = vpow.pop %v3313
    %v3315 = vmul.f32 %v3312, 0.5
    %v3316 = vmul.f32 %v3314, 0.5
    %v3317 = vld [vmem:[#allocation14] sm:$0xff]
    %v3318 = vld [vmem:[#allocation14 + $0x8] sm:$0xff]
    %v3319 = vmul.f32 %v3315, %v3317
    %v3320 = vmul.f32 %v3316, %v3318
    %v3321 = vadd.f32 %v3293, %v3319
    %v3322 = vadd.f32 %v3295, %v3320
    %3323 = vst [vmem:[#allocation16] sm:$0xff] %v3321
    %3324 = vst [vmem:[#allocation16 + $0x8] sm:$0xff] %v3322
    %v3325 = vpack.c.bf16 %v3322, %v3321
    %s3326 = scalar_lea.vmem [#allocation7], 256
    %v3327 = vld [vmem:[%s3326] sm:$0xff]
    %v3328 = vld [vmem:[%s3326 + $0x8] sm:$0xff]
    %v3329 = vld [vmem:[%s3326 + $0x10] sm:$0xff]
    %v3330 = vld [vmem:[%s3326 + $0x18] sm:$0xff]
    %v3331 = vld [vmem:[%s3326 + $0x20] sm:$0xff]
    %v3332 = vld [vmem:[%s3326 + $0x28] sm:$0xff]
    %v3333 = vld [vmem:[%s3326 + $0x30] sm:$0xff]
    %v3334 = vld [vmem:[%s3326 + $0x38] sm:$0xff]
    %v3335 = vld [vmem:[%s3326 + $0x40] sm:$0xff]
    %v3336 = vld [vmem:[%s3326 + $0x48] sm:$0xff]
    %v3337 = vld [vmem:[%s3326 + $0x50] sm:$0xff]
    %v3338 = vld [vmem:[%s3326 + $0x58] sm:$0xff]
    %v3339 = vld [vmem:[%s3326 + $0x60] sm:$0xff]
    %v3340 = vld [vmem:[%s3326 + $0x68] sm:$0xff]
    %v3341 = vld [vmem:[%s3326 + $0x70] sm:$0xff]
    %v3342 = vld [vmem:[%s3326 + $0x78] sm:$0xff]
    %s3343 = scalar_lea.vmem [#allocation8], 4
    %v3344 = vld [vmem:[%s3343] sm:$0x3]
    %v3346 = vperm.slane %v3344, 0
    %v3347 = vperm.slane %v3344, 1
    %v3366 = vunpack.c.l.b16 %v3327
    %v3367 = vunpack.c.h.b16 %v3327
    %v3368 = vunpack.c.l.b16 %v3328
    %v3369 = vunpack.c.h.b16 %v3328
    %v3370 = vunpack.c.l.b16 %v3329
    %v3371 = vunpack.c.h.b16 %v3329
    %v3372 = vunpack.c.l.b16 %v3330
    %v3373 = vunpack.c.h.b16 %v3330
    %v3374 = vunpack.c.l.b16 %v3331
    %v3375 = vunpack.c.h.b16 %v3331
    %v3376 = vunpack.c.l.b16 %v3332
    %v3377 = vunpack.c.h.b16 %v3332
    %v3378 = vunpack.c.l.b16 %v3333
    %v3379 = vunpack.c.h.b16 %v3333
    %v3380 = vunpack.c.l.b16 %v3334
    %v3381 = vunpack.c.h.b16 %v3334
    %v3382 = vunpack.c.l.b16 %v3335
    %v3383 = vunpack.c.h.b16 %v3335
    %v3384 = vunpack.c.l.b16 %v3336
    %v3385 = vunpack.c.h.b16 %v3336
    %v3386 = vunpack.c.l.b16 %v3337
    %v3387 = vunpack.c.h.b16 %v3337
    %v3388 = vunpack.c.l.b16 %v3338
    %v3389 = vunpack.c.h.b16 %v3338
    %v3390 = vunpack.c.l.b16 %v3339
    %v3391 = vunpack.c.h.b16 %v3339
    %v3392 = vunpack.c.l.b16 %v3340
    %v3393 = vunpack.c.h.b16 %v3340
    %v3394 = vunpack.c.l.b16 %v3341
    %v3395 = vunpack.c.h.b16 %v3341
    %v3396 = vunpack.c.l.b16 %v3342
    %v3397 = vunpack.c.h.b16 %v3342
    %v3398 = vpack.c.b16 %v3368, %v3366
    %v3399 = vpack.c.b16 %v3369, %v3367
    %v3400 = vpack.c.b16 %v3372, %v3370
    %v3401 = vpack.c.b16 %v3373, %v3371
    %v3402 = vpack.c.b16 %v3376, %v3374
    %v3403 = vpack.c.b16 %v3377, %v3375
    %v3404 = vpack.c.b16 %v3380, %v3378
    %v3405 = vpack.c.b16 %v3381, %v3379
    %v3406 = vpack.c.b16 %v3384, %v3382
    %v3407 = vpack.c.b16 %v3385, %v3383
    %v3408 = vpack.c.b16 %v3388, %v3386
    %v3409 = vpack.c.b16 %v3389, %v3387
    %v3410 = vpack.c.b16 %v3392, %v3390
    %v3411 = vpack.c.b16 %v3393, %v3391
    %v3412 = vpack.c.b16 %v3396, %v3394
    %v3413 = vpack.c.b16 %v3397, %v3395
    %3430 = vmatpush.bf16.msra.mxu0 %v3412
    %3431 = vmatpush.bf16.msra.mxu0 %v3410
    %3432 = vmatpush.bf16.msra.mxu0 %v3408
    %3433 = vmatpush.bf16.msra.mxu0 %v3406
    %3434 = vmatpush.bf16.msra.mxu0 %v3404
    %3435 = vmatpush.bf16.msra.mxu0 %v3402
    %3436 = vmatpush.bf16.msra.mxu0 %v3400
    %3437 = vmatpush.bf16.msra.mxu0 %v3398
    %3438 = vmatmul.bf16.gmra.mxu0 %v3325
    %v3439 = vpop.f32.mrf.mxu0
    %v3440 = vadd.f32 %v3346, %v3439
    %v3441 = vpop.f32.mrf.mxu0
    %v3442 = vadd.f32 %v3346, %v3441
    %3443 = vdwg.mxu0
    %3444 = vmatpush.bf16.msra.mxu0 %v3413
    %3445 = vmatpush.bf16.msra.mxu0 %v3411
    %3446 = vmatpush.bf16.msra.mxu0 %v3409
    %3447 = vmatpush.bf16.msra.mxu0 %v3407
    %3448 = vmatpush.bf16.msra.mxu0 %v3405
    %3449 = vmatpush.bf16.msra.mxu0 %v3403
    %3450 = vmatpush.bf16.msra.mxu0 %v3401
    %3451 = vmatpush.bf16.msra.mxu0 %v3399
    %3452 = vmatmul.bf16.gmra.mxu0 %v3325
    %v3453 = vpop.f32.mrf.mxu0
    %v3454 = vadd.f32 %v3347, %v3453
    %v3455 = vpop.f32.mrf.mxu0
    %v3456 = vadd.f32 %v3347, %v3455
    %3457 = vdwg.mxu0
    %v3460 = vrot.slane %v3454, 1
    %v3461 = vrot.slane %v3454, 2
    %v3462 = vrot.slane %v3454, 3
    %v3463 = vrot.slane %v3454, 4
    %v3464 = vrot.slane %v3454, 5
    %v3465 = vrot.slane %v3454, 6
    %v3466 = vrot.slane %v3454, 7
    %v3467 = vrot.slane %v3456, 1
    %v3468 = vrot.slane %v3456, 2
    %v3469 = vrot.slane %v3456, 3
    %v3470 = vrot.slane %v3456, 4
    %v3471 = vrot.slane %v3456, 5
    %v3472 = vrot.slane %v3456, 6
    %v3473 = vrot.slane %v3456, 7
    %v3474 = vperm.slane %v3454, 0
    %v3475 = vperm.slane %v3460, 0
    %v3476 = vperm.slane %v3461, 0
    %v3477 = vperm.slane %v3462, 0
    %v3478 = vperm.slane %v3463, 0
    %v3479 = vperm.slane %v3464, 0
    %v3480 = vperm.slane %v3465, 0
    %v3481 = vperm.slane %v3466, 0
    %v3482 = vperm.slane %v3456, 0
    %v3483 = vperm.slane %v3467, 0
    %v3484 = vperm.slane %v3468, 0
    %v3485 = vperm.slane %v3469, 0
    %v3486 = vperm.slane %v3470, 0
    %v3487 = vperm.slane %v3471, 0
    %v3488 = vperm.slane %v3472, 0
    %v3489 = vperm.slane %v3473, 0
    %v3506 = vadd.f32 %v3474, %v3440
    %v3507 = vadd.f32 %v3474, %v3442
    %v3508 = vadd.f32 %v3475, %v3440
    %v3509 = vadd.f32 %v3475, %v3442
    %v3510 = vadd.f32 %v3476, %v3440
    %v3511 = vadd.f32 %v3476, %v3442
    %v3512 = vadd.f32 %v3477, %v3440
    %v3513 = vadd.f32 %v3477, %v3442
    %v3514 = vadd.f32 %v3478, %v3440
    %v3515 = vadd.f32 %v3478, %v3442
    %v3516 = vadd.f32 %v3479, %v3440
    %v3517 = vadd.f32 %v3479, %v3442
    %v3518 = vadd.f32 %v3480, %v3440
    %v3519 = vadd.f32 %v3480, %v3442
    %v3520 = vadd.f32 %v3481, %v3440
    %v3521 = vadd.f32 %v3481, %v3442
    %v3522 = vadd.f32 %v3482, %v3440
    %v3523 = vadd.f32 %v3482, %v3442
    %v3524 = vadd.f32 %v3483, %v3440
    %v3525 = vadd.f32 %v3483, %v3442
    %v3526 = vadd.f32 %v3484, %v3440
    %v3527 = vadd.f32 %v3484, %v3442
    %v3528 = vadd.f32 %v3485, %v3440
    %v3529 = vadd.f32 %v3485, %v3442
    %v3530 = vadd.f32 %v3486, %v3440
    %v3531 = vadd.f32 %v3486, %v3442
    %v3532 = vadd.f32 %v3487, %v3440
    %v3533 = vadd.f32 %v3487, %v3442
    %v3534 = vadd.f32 %v3488, %v3440
    %v3535 = vadd.f32 %v3488, %v3442
    %v3536 = vadd.f32 %v3489, %v3440
    %v3537 = vadd.f32 %v3489, %v3442
    %s3538 = scalar_lea.vmem [#allocation11], 256
    %v3539 = vld [vmem:[%s3538] sm:$0xf]
    %v3540 = vld [vmem:[%s3538 + $0x4] sm:$0xf]
    %v3541 = vld [vmem:[%s3538 + $0x8] sm:$0xf]
    %v3542 = vld [vmem:[%s3538 + $0xc] sm:$0xf]
    %v3543 = vld [vmem:[%s3538 + $0x10] sm:$0xf]
    %v3544 = vld [vmem:[%s3538 + $0x14] sm:$0xf]
    %v3545 = vld [vmem:[%s3538 + $0x18] sm:$0xf]
    %v3546 = vld [vmem:[%s3538 + $0x1c] sm:$0xf]
    %v3547 = vld [vmem:[%s3538 + $0x20] sm:$0xf]
    %v3548 = vld [vmem:[%s3538 + $0x24] sm:$0xf]
    %v3549 = vld [vmem:[%s3538 + $0x28] sm:$0xf]
    %v3550 = vld [vmem:[%s3538 + $0x2c] sm:$0xf]
    %v3551 = vld [vmem:[%s3538 + $0x30] sm:$0xf]
    %v3552 = vld [vmem:[%s3538 + $0x34] sm:$0xf]
    %v3553 = vld [vmem:[%s3538 + $0x38] sm:$0xf]
    %v3554 = vld [vmem:[%s3538 + $0x3c] sm:$0xf]
    %v3555 = vld [vmem:[%s3538 + $0x40] sm:$0xf]
    %v3556 = vld [vmem:[%s3538 + $0x44] sm:$0xf]
    %v3557 = vld [vmem:[%s3538 + $0x48] sm:$0xf]
    %v3558 = vld [vmem:[%s3538 + $0x4c] sm:$0xf]
    %v3559 = vld [vmem:[%s3538 + $0x50] sm:$0xf]
    %v3560 = vld [vmem:[%s3538 + $0x54] sm:$0xf]
    %v3561 = vld [vmem:[%s3538 + $0x58] sm:$0xf]
    %v3562 = vld [vmem:[%s3538 + $0x5c] sm:$0xf]
    %v3563 = vld [vmem:[%s3538 + $0x60] sm:$0xf]
    %v3564 = vld [vmem:[%s3538 + $0x64] sm:$0xf]
    %v3565 = vld [vmem:[%s3538 + $0x68] sm:$0xf]
    %v3566 = vld [vmem:[%s3538 + $0x6c] sm:$0xf]
    %v3567 = vld [vmem:[%s3538 + $0x70] sm:$0xf]
    %v3568 = vld [vmem:[%s3538 + $0x74] sm:$0xf]
    %v3569 = vld [vmem:[%s3538 + $0x78] sm:$0xf]
    %v3570 = vld [vmem:[%s3538 + $0x7c] sm:$0xf]
    %v3571 = vunpack.c.l.bf16 %v3539
    %v3572 = vunpack.c.l.bf16 %v3540
    %v3573 = vunpack.c.l.bf16 %v3541
    %v3574 = vunpack.c.l.bf16 %v3542
    %v3575 = vunpack.c.l.bf16 %v3543
    %v3576 = vunpack.c.l.bf16 %v3544
    %v3577 = vunpack.c.l.bf16 %v3545
    %v3578 = vunpack.c.l.bf16 %v3546
    %v3579 = vunpack.c.l.bf16 %v3547
    %v3580 = vunpack.c.l.bf16 %v3548
    %v3581 = vunpack.c.l.bf16 %v3549
    %v3582 = vunpack.c.l.bf16 %v3550
    %v3583 = vunpack.c.l.bf16 %v3551
    %v3584 = vunpack.c.l.bf16 %v3552
    %v3585 = vunpack.c.l.bf16 %v3553
    %v3586 = vunpack.c.l.bf16 %v3554
    %v3587 = vunpack.c.l.bf16 %v3555
    %v3588 = vunpack.c.l.bf16 %v3556
    %v3589 = vunpack.c.l.bf16 %v3557
    %v3590 = vunpack.c.l.bf16 %v3558
    %v3591 = vunpack.c.l.bf16 %v3559
    %v3592 = vunpack.c.l.bf16 %v3560
    %v3593 = vunpack.c.l.bf16 %v3561
    %v3594 = vunpack.c.l.bf16 %v3562
    %v3595 = vunpack.c.l.bf16 %v3563
    %v3596 = vunpack.c.l.bf16 %v3564
    %v3597 = vunpack.c.l.bf16 %v3565
    %v3598 = vunpack.c.l.bf16 %v3566
    %v3599 = vunpack.c.l.bf16 %v3567
    %v3600 = vunpack.c.l.bf16 %v3568
    %v3601 = vunpack.c.l.bf16 %v3569
    %v3602 = vunpack.c.l.bf16 %v3570
    %v3603 = vadd.f32 %v3506, %v3571
    %v3604 = vadd.f32 %v3507, %v3572
    %v3605 = vadd.f32 %v3508, %v3573
    %v3606 = vadd.f32 %v3509, %v3574
    %v3607 = vadd.f32 %v3510, %v3575
    %v3608 = vadd.f32 %v3511, %v3576
    %v3609 = vadd.f32 %v3512, %v3577
    %v3610 = vadd.f32 %v3513, %v3578
    %v3611 = vadd.f32 %v3514, %v3579
    %v3612 = vadd.f32 %v3515, %v3580
    %v3613 = vadd.f32 %v3516, %v3581
    %v3614 = vadd.f32 %v3517, %v3582
    %v3615 = vadd.f32 %v3518, %v3583
    %v3616 = vadd.f32 %v3519, %v3584
    %v3617 = vadd.f32 %v3520, %v3585
    %v3618 = vadd.f32 %v3521, %v3586
    %v3619 = vadd.f32 %v3522, %v3587
    %v3620 = vadd.f32 %v3523, %v3588
    %v3621 = vadd.f32 %v3524, %v3589
    %v3622 = vadd.f32 %v3525, %v3590
    %v3623 = vadd.f32 %v3526, %v3591
    %v3624 = vadd.f32 %v3527, %v3592
    %v3625 = vadd.f32 %v3528, %v3593
    %v3626 = vadd.f32 %v3529, %v3594
    %v3627 = vadd.f32 %v3530, %v3595
    %v3628 = vadd.f32 %v3531, %v3596
    %v3629 = vadd.f32 %v3532, %v3597
    %v3630 = vadd.f32 %v3533, %v3598
    %v3631 = vadd.f32 %v3534, %v3599
    %v3632 = vadd.f32 %v3535, %v3600
    %v3633 = vadd.f32 %v3536, %v3601
    %v3634 = vadd.f32 %v3537, %v3602
    %vm3635 = vcmp.ge.f32.partialorder %v3603, 0.0
    %vm3636 = vcmp.ge.f32.partialorder %v3604, 0.0
    %vm3637 = vcmp.ge.f32.partialorder %v3605, 0.0
    %vm3638 = vcmp.ge.f32.partialorder %v3606, 0.0
    %vm3639 = vcmp.ge.f32.partialorder %v3607, 0.0
    %vm3640 = vcmp.ge.f32.partialorder %v3608, 0.0
    %vm3641 = vcmp.ge.f32.partialorder %v3609, 0.0
    %vm3642 = vcmp.ge.f32.partialorder %v3610, 0.0
    %vm3643 = vcmp.ge.f32.partialorder %v3611, 0.0
    %vm3644 = vcmp.ge.f32.partialorder %v3612, 0.0
    %vm3645 = vcmp.ge.f32.partialorder %v3613, 0.0
    %vm3646 = vcmp.ge.f32.partialorder %v3614, 0.0
    %vm3647 = vcmp.ge.f32.partialorder %v3615, 0.0
    %vm3648 = vcmp.ge.f32.partialorder %v3616, 0.0
    %vm3649 = vcmp.ge.f32.partialorder %v3617, 0.0
    %vm3650 = vcmp.ge.f32.partialorder %v3618, 0.0
    %vm3651 = vcmp.ge.f32.partialorder %v3619, 0.0
    %vm3652 = vcmp.ge.f32.partialorder %v3620, 0.0
    %vm3653 = vcmp.ge.f32.partialorder %v3621, 0.0
    %vm3654 = vcmp.ge.f32.partialorder %v3622, 0.0
    %vm3655 = vcmp.ge.f32.partialorder %v3623, 0.0
    %vm3656 = vcmp.ge.f32.partialorder %v3624, 0.0
    %vm3657 = vcmp.ge.f32.partialorder %v3625, 0.0
    %vm3658 = vcmp.ge.f32.partialorder %v3626, 0.0
    %vm3659 = vcmp.ge.f32.partialorder %v3627, 0.0
    %vm3660 = vcmp.ge.f32.partialorder %v3628, 0.0
    %vm3661 = vcmp.ge.f32.partialorder %v3629, 0.0
    %vm3662 = vcmp.ge.f32.partialorder %v3630, 0.0
    %vm3663 = vcmp.ge.f32.partialorder %v3631, 0.0
    %vm3664 = vcmp.ge.f32.partialorder %v3632, 0.0
    %vm3665 = vcmp.ge.f32.partialorder %v3633, 0.0
    %vm3666 = vcmp.ge.f32.partialorder %v3634, 0.0
    %v3667 = vmul.f32 %v3603, 0.2
    %v3668 = vmul.f32 %v3604, 0.2
    %v3669 = vmul.f32 %v3605, 0.2
    %v3670 = vmul.f32 %v3606, 0.2
    %v3671 = vmul.f32 %v3607, 0.2
    %v3672 = vmul.f32 %v3608, 0.2
    %v3673 = vmul.f32 %v3609, 0.2
    %v3674 = vmul.f32 %v3610, 0.2
    %v3675 = vmul.f32 %v3611, 0.2
    %v3676 = vmul.f32 %v3612, 0.2
    %v3677 = vmul.f32 %v3613, 0.2
    %v3678 = vmul.f32 %v3614, 0.2
    %v3679 = vmul.f32 %v3615, 0.2
    %v3680 = vmul.f32 %v3616, 0.2
    %v3681 = vmul.f32 %v3617, 0.2
    %v3682 = vmul.f32 %v3618, 0.2
    %v3683 = vmul.f32 %v3619, 0.2
    %v3684 = vmul.f32 %v3620, 0.2
    %v3685 = vmul.f32 %v3621, 0.2
    %v3686 = vmul.f32 %v3622, 0.2
    %v3687 = vmul.f32 %v3623, 0.2
    %v3688 = vmul.f32 %v3624, 0.2
    %v3689 = vmul.f32 %v3625, 0.2
    %v3690 = vmul.f32 %v3626, 0.2
    %v3691 = vmul.f32 %v3627, 0.2
    %v3692 = vmul.f32 %v3628, 0.2
    %v3693 = vmul.f32 %v3629, 0.2
    %v3694 = vmul.f32 %v3630, 0.2
    %v3695 = vmul.f32 %v3631, 0.2
    %v3696 = vmul.f32 %v3632, 0.2
    %v3697 = vmul.f32 %v3633, 0.2
    %v3698 = vmul.f32 %v3634, 0.2
    %v3699 = vsel %vm3635, %v3603, %v3667
    %v3700 = vsel %vm3636, %v3604, %v3668
    %v3701 = vsel %vm3637, %v3605, %v3669
    %v3702 = vsel %vm3638, %v3606, %v3670
    %v3703 = vsel %vm3639, %v3607, %v3671
    %v3704 = vsel %vm3640, %v3608, %v3672
    %v3705 = vsel %vm3641, %v3609, %v3673
    %v3706 = vsel %vm3642, %v3610, %v3674
    %v3707 = vsel %vm3643, %v3611, %v3675
    %v3708 = vsel %vm3644, %v3612, %v3676
    %v3709 = vsel %vm3645, %v3613, %v3677
    %v3710 = vsel %vm3646, %v3614, %v3678
    %v3711 = vsel %vm3647, %v3615, %v3679
    %v3712 = vsel %vm3648, %v3616, %v3680
    %v3713 = vsel %vm3649, %v3617, %v3681
    %v3714 = vsel %vm3650, %v3618, %v3682
    %v3715 = vsel %vm3651, %v3619, %v3683
    %v3716 = vsel %vm3652, %v3620, %v3684
    %v3717 = vsel %vm3653, %v3621, %v3685
    %v3718 = vsel %vm3654, %v3622, %v3686
    %v3719 = vsel %vm3655, %v3623, %v3687
    %v3720 = vsel %vm3656, %v3624, %v3688
    %v3721 = vsel %vm3657, %v3625, %v3689
    %v3722 = vsel %vm3658, %v3626, %v3690
    %v3723 = vsel %vm3659, %v3627, %v3691
    %v3724 = vsel %vm3660, %v3628, %v3692
    %v3725 = vsel %vm3661, %v3629, %v3693
    %v3726 = vsel %vm3662, %v3630, %v3694
    %v3727 = vsel %vm3663, %v3631, %v3695
    %v3728 = vsel %vm3664, %v3632, %v3696
    %v3729 = vsel %vm3665, %v3633, %v3697
    %v3730 = vsel %vm3666, %v3634, %v3698
    %s3731 = scalar_lea.vmem [#allocation10], 2
    %v3732 = vld [vmem:[%s3731] sm:$0x1]
    %v3734 = vperm.slane %v3732, 0
    %v3736 = vmul.f32 %v3699, %v3734
    %v3737 = vmul.f32 %v3700, %v3734
    %v3738 = vmul.f32 %v3701, %v3734
    %v3739 = vmul.f32 %v3702, %v3734
    %v3740 = vmul.f32 %v3703, %v3734
    %v3741 = vmul.f32 %v3704, %v3734
    %v3742 = vmul.f32 %v3705, %v3734
    %v3743 = vmul.f32 %v3706, %v3734
    %v3744 = vmul.f32 %v3707, %v3734
    %v3745 = vmul.f32 %v3708, %v3734
    %v3746 = vmul.f32 %v3709, %v3734
    %v3747 = vmul.f32 %v3710, %v3734
    %v3748 = vmul.f32 %v3711, %v3734
    %v3749 = vmul.f32 %v3712, %v3734
    %v3750 = vmul.f32 %v3713, %v3734
    %v3751 = vmul.f32 %v3714, %v3734
    %v3752 = vmul.f32 %v3715, %v3734
    %v3753 = vmul.f32 %v3716, %v3734
    %v3754 = vmul.f32 %v3717, %v3734
    %v3755 = vmul.f32 %v3718, %v3734
    %v3756 = vmul.f32 %v3719, %v3734
    %v3757 = vmul.f32 %v3720, %v3734
    %v3758 = vmul.f32 %v3721, %v3734
    %v3759 = vmul.f32 %v3722, %v3734
    %v3760 = vmul.f32 %v3723, %v3734
    %v3761 = vmul.f32 %v3724, %v3734
    %v3762 = vmul.f32 %v3725, %v3734
    %v3763 = vmul.f32 %v3726, %v3734
    %v3764 = vmul.f32 %v3727, %v3734
    %v3765 = vmul.f32 %v3728, %v3734
    %v3766 = vmul.f32 %v3729, %v3734
    %v3767 = vmul.f32 %v3730, %v3734
    %3768 = vadd.xlane.f32.xlu0 %v3736
    %v3769 = vpop.xlane.xlu0 %3768
    %3770 = vadd.xlane.f32.xlu0 %v3737
    %v3771 = vpop.xlane.xlu0 %3770
    %3772 = vadd.xlane.f32.xlu0 %v3738
    %v3773 = vpop.xlane.xlu0 %3772
    %3774 = vadd.xlane.f32.xlu0 %v3739
    %v3775 = vpop.xlane.xlu0 %3774
    %3776 = vadd.xlane.f32.xlu0 %v3740
    %v3777 = vpop.xlane.xlu0 %3776
    %3778 = vadd.xlane.f32.xlu0 %v3741
    %v3779 = vpop.xlane.xlu0 %3778
    %3780 = vadd.xlane.f32.xlu0 %v3742
    %v3781 = vpop.xlane.xlu0 %3780
    %3782 = vadd.xlane.f32.xlu0 %v3743
    %v3783 = vpop.xlane.xlu0 %3782
    %3784 = vadd.xlane.f32.xlu0 %v3744
    %v3785 = vpop.xlane.xlu0 %3784
    %3786 = vadd.xlane.f32.xlu0 %v3745
    %v3787 = vpop.xlane.xlu0 %3786
    %3788 = vadd.xlane.f32.xlu0 %v3746
    %v3789 = vpop.xlane.xlu0 %3788
    %3790 = vadd.xlane.f32.xlu0 %v3747
    %v3791 = vpop.xlane.xlu0 %3790
    %3792 = vadd.xlane.f32.xlu0 %v3748
    %v3793 = vpop.xlane.xlu0 %3792
    %3794 = vadd.xlane.f32.xlu0 %v3749
    %v3795 = vpop.xlane.xlu0 %3794
    %3796 = vadd.xlane.f32.xlu0 %v3750
    %v3797 = vpop.xlane.xlu0 %3796
    %3798 = vadd.xlane.f32.xlu0 %v3751
    %v3799 = vpop.xlane.xlu0 %3798
    %3800 = vadd.xlane.f32.xlu0 %v3752
    %v3801 = vpop.xlane.xlu0 %3800
    %3802 = vadd.xlane.f32.xlu0 %v3753
    %v3803 = vpop.xlane.xlu0 %3802
    %3804 = vadd.xlane.f32.xlu0 %v3754
    %v3805 = vpop.xlane.xlu0 %3804
    %3806 = vadd.xlane.f32.xlu0 %v3755
    %v3807 = vpop.xlane.xlu0 %3806
    %3808 = vadd.xlane.f32.xlu0 %v3756
    %v3809 = vpop.xlane.xlu0 %3808
    %3810 = vadd.xlane.f32.xlu0 %v3757
    %v3811 = vpop.xlane.xlu0 %3810
    %3812 = vadd.xlane.f32.xlu0 %v3758
    %v3813 = vpop.xlane.xlu0 %3812
    %3814 = vadd.xlane.f32.xlu0 %v3759
    %v3815 = vpop.xlane.xlu0 %3814
    %3816 = vadd.xlane.f32.xlu0 %v3760
    %v3817 = vpop.xlane.xlu0 %3816
    %3818 = vadd.xlane.f32.xlu0 %v3761
    %v3819 = vpop.xlane.xlu0 %3818
    %3820 = vadd.xlane.f32.xlu0 %v3762
    %v3821 = vpop.xlane.xlu0 %3820
    %3822 = vadd.xlane.f32.xlu0 %v3763
    %v3823 = vpop.xlane.xlu0 %3822
    %3824 = vadd.xlane.f32.xlu0 %v3764
    %v3825 = vpop.xlane.xlu0 %3824
    %3826 = vadd.xlane.f32.xlu0 %v3765
    %v3827 = vpop.xlane.xlu0 %3826
    %3828 = vadd.xlane.f32.xlu0 %v3766
    %v3829 = vpop.xlane.xlu0 %3828
    %3830 = vadd.xlane.f32.xlu0 %v3767
    %v3831 = vpop.xlane.xlu0 %3830
    %v3832 = vadd.f32 %v3769, %v684
    %v3833 = vadd.f32 %v3771, %v690
    %v3834 = vadd.f32 %v3773, %v697
    %v3835 = vadd.f32 %v3775, %v703
    %v3836 = vadd.f32 %v3777, %v710
    %v3837 = vadd.f32 %v3779, %v716
    %v3838 = vadd.f32 %v3781, %v723
    %v3839 = vadd.f32 %v3783, %v729
    %v3840 = vadd.f32 %v3785, %v736
    %v3841 = vadd.f32 %v3787, %v742
    %v3842 = vadd.f32 %v3789, %v749
    %v3843 = vadd.f32 %v3791, %v755
    %v3844 = vadd.f32 %v3793, %v762
    %v3845 = vadd.f32 %v3795, %v768
    %v3846 = vadd.f32 %v3797, %v775
    %v3847 = vadd.f32 %v3799, %v781
    %v3848 = vadd.f32 %v3801, %v788
    %v3849 = vadd.f32 %v3803, %v794
    %v3850 = vadd.f32 %v3805, %v801
    %v3851 = vadd.f32 %v3807, %v807
    %v3852 = vadd.f32 %v3809, %v814
    %v3853 = vadd.f32 %v3811, %v820
    %v3854 = vadd.f32 %v3813, %v827
    %v3855 = vadd.f32 %v3815, %v833
    %v3856 = vadd.f32 %v3817, %v840
    %v3857 = vadd.f32 %v3819, %v846
    %v3858 = vadd.f32 %v3821, %v853
    %v3859 = vadd.f32 %v3823, %v859
    %v3860 = vadd.f32 %v3825, %v866
    %v3861 = vadd.f32 %v3827, %v872
    %v3862 = vadd.f32 %v3829, %v879
    %v3863 = vadd.f32 %v3831, %v885
    %3896 = vset.pattern.permute.xlu0 0
    %3897 = vperm.xlu0 %3896, %v3832
    %v3898 = vpop.permute.xlu0 %3897
    %3899 = vset.pattern.permute.xlu0 0
    %3900 = vperm.xlu0 %3899, %v3833
    %v3901 = vpop.permute.xlu0 %3900
    %3902 = vset.pattern.permute.xlu0 0
    %3903 = vperm.xlu0 %3902, %v3834
    %v3904 = vpop.permute.xlu0 %3903
    %3905 = vset.pattern.permute.xlu0 0
    %3906 = vperm.xlu0 %3905, %v3835
    %v3907 = vpop.permute.xlu0 %3906
    %3908 = vset.pattern.permute.xlu0 0
    %3909 = vperm.xlu0 %3908, %v3836
    %v3910 = vpop.permute.xlu0 %3909
    %3911 = vset.pattern.permute.xlu0 0
    %3912 = vperm.xlu0 %3911, %v3837
    %v3913 = vpop.permute.xlu0 %3912
    %3914 = vset.pattern.permute.xlu0 0
    %3915 = vperm.xlu0 %3914, %v3838
    %v3916 = vpop.permute.xlu0 %3915
    %3917 = vset.pattern.permute.xlu0 0
    %3918 = vperm.xlu0 %3917, %v3839
    %v3919 = vpop.permute.xlu0 %3918
    %3920 = vset.pattern.permute.xlu0 0
    %3921 = vperm.xlu0 %3920, %v3840
    %v3922 = vpop.permute.xlu0 %3921
    %3923 = vset.pattern.permute.xlu0 0
    %3924 = vperm.xlu0 %3923, %v3841
    %v3925 = vpop.permute.xlu0 %3924
    %3926 = vset.pattern.permute.xlu0 0
    %3927 = vperm.xlu0 %3926, %v3842
    %v3928 = vpop.permute.xlu0 %3927
    %3929 = vset.pattern.permute.xlu0 0
    %3930 = vperm.xlu0 %3929, %v3843
    %v3931 = vpop.permute.xlu0 %3930
    %3932 = vset.pattern.permute.xlu0 0
    %3933 = vperm.xlu0 %3932, %v3844
    %v3934 = vpop.permute.xlu0 %3933
    %3935 = vset.pattern.permute.xlu0 0
    %3936 = vperm.xlu0 %3935, %v3845
    %v3937 = vpop.permute.xlu0 %3936
    %3938 = vset.pattern.permute.xlu0 0
    %3939 = vperm.xlu0 %3938, %v3846
    %v3940 = vpop.permute.xlu0 %3939
    %3941 = vset.pattern.permute.xlu0 0
    %3942 = vperm.xlu0 %3941, %v3847
    %v3943 = vpop.permute.xlu0 %3942
    %3944 = vset.pattern.permute.xlu0 0
    %3945 = vperm.xlu0 %3944, %v3848
    %v3946 = vpop.permute.xlu0 %3945
    %3947 = vset.pattern.permute.xlu0 0
    %3948 = vperm.xlu0 %3947, %v3849
    %v3949 = vpop.permute.xlu0 %3948
    %3950 = vset.pattern.permute.xlu0 0
    %3951 = vperm.xlu0 %3950, %v3850
    %v3952 = vpop.permute.xlu0 %3951
    %3953 = vset.pattern.permute.xlu0 0
    %3954 = vperm.xlu0 %3953, %v3851
    %v3955 = vpop.permute.xlu0 %3954
    %3956 = vset.pattern.permute.xlu0 0
    %3957 = vperm.xlu0 %3956, %v3852
    %v3958 = vpop.permute.xlu0 %3957
    %3959 = vset.pattern.permute.xlu0 0
    %3960 = vperm.xlu0 %3959, %v3853
    %v3961 = vpop.permute.xlu0 %3960
    %3962 = vset.pattern.permute.xlu0 0
    %3963 = vperm.xlu0 %3962, %v3854
    %v3964 = vpop.permute.xlu0 %3963
    %3965 = vset.pattern.permute.xlu0 0
    %3966 = vperm.xlu0 %3965, %v3855
    %v3967 = vpop.permute.xlu0 %3966
    %3968 = vset.pattern.permute.xlu0 0
    %3969 = vperm.xlu0 %3968, %v3856
    %v3970 = vpop.permute.xlu0 %3969
    %3971 = vset.pattern.permute.xlu0 0
    %3972 = vperm.xlu0 %3971, %v3857
    %v3973 = vpop.permute.xlu0 %3972
    %3974 = vset.pattern.permute.xlu0 0
    %3975 = vperm.xlu0 %3974, %v3858
    %v3976 = vpop.permute.xlu0 %3975
    %3977 = vset.pattern.permute.xlu0 0
    %3978 = vperm.xlu0 %3977, %v3859
    %v3979 = vpop.permute.xlu0 %3978
    %3980 = vset.pattern.permute.xlu0 0
    %3981 = vperm.xlu0 %3980, %v3860
    %v3982 = vpop.permute.xlu0 %3981
    %3983 = vset.pattern.permute.xlu0 0
    %3984 = vperm.xlu0 %3983, %v3861
    %v3985 = vpop.permute.xlu0 %3984
    %3986 = vset.pattern.permute.xlu0 0
    %3987 = vperm.xlu0 %3986, %v3862
    %v3988 = vpop.permute.xlu0 %3987
    %3989 = vset.pattern.permute.xlu0 0
    %3990 = vperm.xlu0 %3989, %v3863
    %v3991 = vpop.permute.xlu0 %3990
    %v3992 = vperm.slane %v3898, %v1079
    %v3993 = vperm.slane %v3901, %v1081
    %v3994 = vsel %vm1083, %v3993, %v3992
    %v3995 = vperm.slane %v3904, %v1079
    %v3996 = vperm.slane %v3907, %v1081
    %v3997 = vsel %vm1083, %v3996, %v3995
    %v3998 = vperm.slane %v3910, %v1079
    %v3999 = vperm.slane %v3913, %v1081
    %v4000 = vsel %vm1083, %v3999, %v3998
    %v4001 = vperm.slane %v3916, %v1079
    %v4002 = vperm.slane %v3919, %v1081
    %v4003 = vsel %vm1083, %v4002, %v4001
    %v4004 = vperm.slane %v3922, %v1079
    %v4005 = vperm.slane %v3925, %v1081
    %v4006 = vsel %vm1083, %v4005, %v4004
    %v4007 = vperm.slane %v3928, %v1079
    %v4008 = vperm.slane %v3931, %v1081
    %v4009 = vsel %vm1083, %v4008, %v4007
    %v4010 = vperm.slane %v3934, %v1079
    %v4011 = vperm.slane %v3937, %v1081
    %v4012 = vsel %vm1083, %v4011, %v4010
    %v4013 = vperm.slane %v3940, %v1079
    %v4014 = vperm.slane %v3943, %v1081
    %v4015 = vsel %vm1083, %v4014, %v4013
    %v4016 = vperm.slane %v3946, %v1079
    %v4017 = vperm.slane %v3949, %v1081
    %v4018 = vsel %vm1083, %v4017, %v4016
    %v4019 = vperm.slane %v3952, %v1079
    %v4020 = vperm.slane %v3955, %v1081
    %v4021 = vsel %vm1083, %v4020, %v4019
    %v4022 = vperm.slane %v3958, %v1079
    %v4023 = vperm.slane %v3961, %v1081
    %v4024 = vsel %vm1083, %v4023, %v4022
    %v4025 = vperm.slane %v3964, %v1079
    %v4026 = vperm.slane %v3967, %v1081
    %v4027 = vsel %vm1083, %v4026, %v4025
    %v4028 = vperm.slane %v3970, %v1079
    %v4029 = vperm.slane %v3973, %v1081
    %v4030 = vsel %vm1083, %v4029, %v4028
    %v4031 = vperm.slane %v3976, %v1079
    %v4032 = vperm.slane %v3979, %v1081
    %v4033 = vsel %vm1083, %v4032, %v4031
    %v4034 = vperm.slane %v3982, %v1079
    %v4035 = vperm.slane %v3985, %v1081
    %v4036 = vsel %vm1083, %v4035, %v4034
    %v4037 = vperm.slane %v3988, %v1079
    %v4038 = vperm.slane %v3991, %v1081
    %v4039 = vsel %vm1083, %v4038, %v4037
    %v4040 = vsel %vm1130, %v3997, %v3994
    %v4041 = vsel %vm1132, %v4000, %v4040
    %v4042 = vsel %vm1134, %v4003, %v4041
    %v4043 = vsel %vm1136, %v4006, %v4042
    %v4044 = vsel %vm1138, %v4009, %v4043
    %v4045 = vsel %vm1140, %v4012, %v4044
    %v4046 = vsel %vm1142, %v4015, %v4045
    %v4047 = vsel %vm1130, %v4021, %v4018
    %v4048 = vsel %vm1132, %v4024, %v4047
    %v4049 = vsel %vm1134, %v4027, %v4048
    %v4050 = vsel %vm1136, %v4030, %v4049
    %v4051 = vsel %vm1138, %v4033, %v4050
    %v4052 = vsel %vm1140, %v4036, %v4051
    %v4053 = vsel %vm1142, %v4039, %v4052
    %v4056 = vsel %vm1153, %v4046, -inf
    %4057 = vmax.xlane.f32.xlu0 %v4056
    %v4058 = vpop.xlane.xlu0 %4057
    %v4059 = vsel %vm1153, %v4053, -inf
    %4060 = vmax.xlane.f32.xlu0 %v4059
    %v4061 = vpop.xlane.xlu0 %4060
    %v4064 = vperm.slane %v4058, 0
    %v4065 = vperm.slane %v4058, 1
    %v4066 = vperm.slane %v4058, 2
    %v4067 = vperm.slane %v4058, 3
    %v4068 = vperm.slane %v4058, 4
    %v4069 = vperm.slane %v4058, 5
    %v4070 = vperm.slane %v4058, 6
    %v4071 = vperm.slane %v4058, 7
    %v4072 = vperm.slane %v4061, 0
    %v4073 = vperm.slane %v4061, 1
    %v4074 = vperm.slane %v4061, 2
    %v4075 = vperm.slane %v4061, 3
    %v4076 = vperm.slane %v4061, 4
    %v4077 = vperm.slane %v4061, 5
    %v4078 = vperm.slane %v4061, 6
    %v4079 = vperm.slane %v4061, 7
    %v4096 = vsub.f32 %v3832, %v4064
    %v4097 = vsub.f32 %v3833, %v4064
    %v4098 = vsub.f32 %v3834, %v4065
    %v4099 = vsub.f32 %v3835, %v4065
    %v4100 = vsub.f32 %v3836, %v4066
    %v4101 = vsub.f32 %v3837, %v4066
    %v4102 = vsub.f32 %v3838, %v4067
    %v4103 = vsub.f32 %v3839, %v4067
    %v4104 = vsub.f32 %v3840, %v4068
    %v4105 = vsub.f32 %v3841, %v4068
    %v4106 = vsub.f32 %v3842, %v4069
    %v4107 = vsub.f32 %v3843, %v4069
    %v4108 = vsub.f32 %v3844, %v4070
    %v4109 = vsub.f32 %v3845, %v4070
    %v4110 = vsub.f32 %v3846, %v4071
    %v4111 = vsub.f32 %v3847, %v4071
    %v4112 = vsub.f32 %v3848, %v4072
    %v4113 = vsub.f32 %v3849, %v4072
    %v4114 = vsub.f32 %v3850, %v4073
    %v4115 = vsub.f32 %v3851, %v4073
    %v4116 = vsub.f32 %v3852, %v4074
    %v4117 = vsub.f32 %v3853, %v4074
    %v4118 = vsub.f32 %v3854, %v4075
    %v4119 = vsub.f32 %v3855, %v4075
    %v4120 = vsub.f32 %v3856, %v4076
    %v4121 = vsub.f32 %v3857, %v4076
    %v4122 = vsub.f32 %v3858, %v4077
    %v4123 = vsub.f32 %v3859, %v4077
    %v4124 = vsub.f32 %v3860, %v4078
    %v4125 = vsub.f32 %v3861, %v4078
    %v4126 = vsub.f32 %v3862, %v4079
    %v4127 = vsub.f32 %v3863, %v4079
    %v4128 = vmul.f32 %v4096, 1.442695
    %v4129 = vpow.pop %v4128
    %v4130 = vmul.f32 %v4097, 1.442695
    %v4131 = vpow.pop %v4130
    %v4132 = vmul.f32 %v4098, 1.442695
    %v4133 = vpow.pop %v4132
    %v4134 = vmul.f32 %v4099, 1.442695
    %v4135 = vpow.pop %v4134
    %v4136 = vmul.f32 %v4100, 1.442695
    %v4137 = vpow.pop %v4136
    %v4138 = vmul.f32 %v4101, 1.442695
    %v4139 = vpow.pop %v4138
    %v4140 = vmul.f32 %v4102, 1.442695
    %v4141 = vpow.pop %v4140
    %v4142 = vmul.f32 %v4103, 1.442695
    %v4143 = vpow.pop %v4142
    %v4144 = vmul.f32 %v4104, 1.442695
    %v4145 = vpow.pop %v4144
    %v4146 = vmul.f32 %v4105, 1.442695
    %v4147 = vpow.pop %v4146
    %v4148 = vmul.f32 %v4106, 1.442695
    %v4149 = vpow.pop %v4148
    %v4150 = vmul.f32 %v4107, 1.442695
    %v4151 = vpow.pop %v4150
    %v4152 = vmul.f32 %v4108, 1.442695
    %v4153 = vpow.pop %v4152
    %v4154 = vmul.f32 %v4109, 1.442695
    %v4155 = vpow.pop %v4154
    %v4156 = vmul.f32 %v4110, 1.442695
    %v4157 = vpow.pop %v4156
    %v4158 = vmul.f32 %v4111, 1.442695
    %v4159 = vpow.pop %v4158
    %v4160 = vmul.f32 %v4112, 1.442695
    %v4161 = vpow.pop %v4160
    %v4162 = vmul.f32 %v4113, 1.442695
    %v4163 = vpow.pop %v4162
    %v4164 = vmul.f32 %v4114, 1.442695
    %v4165 = vpow.pop %v4164
    %v4166 = vmul.f32 %v4115, 1.442695
    %v4167 = vpow.pop %v4166
    %v4168 = vmul.f32 %v4116, 1.442695
    %v4169 = vpow.pop %v4168
    %v4170 = vmul.f32 %v4117, 1.442695
    %v4171 = vpow.pop %v4170
    %v4172 = vmul.f32 %v4118, 1.442695
    %v4173 = vpow.pop %v4172
    %v4174 = vmul.f32 %v4119, 1.442695
    %v4175 = vpow.pop %v4174
    %v4176 = vmul.f32 %v4120, 1.442695
    %v4177 = vpow.pop %v4176
    %v4178 = vmul.f32 %v4121, 1.442695
    %v4179 = vpow.pop %v4178
    %v4180 = vmul.f32 %v4122, 1.442695
    %v4181 = vpow.pop %v4180
    %v4182 = vmul.f32 %v4123, 1.442695
    %v4183 = vpow.pop %v4182
    %v4184 = vmul.f32 %v4124, 1.442695
    %v4185 = vpow.pop %v4184
    %v4186 = vmul.f32 %v4125, 1.442695
    %v4187 = vpow.pop %v4186
    %v4188 = vmul.f32 %v4126, 1.442695
    %v4189 = vpow.pop %v4188
    %v4190 = vmul.f32 %v4127, 1.442695
    %v4191 = vpow.pop %v4190
    %4224 = vset.pattern.permute.xlu0 0
    %4225 = vperm.xlu0 %4224, %v4129
    %v4226 = vpop.permute.xlu0 %4225
    %4227 = vset.pattern.permute.xlu0 0
    %4228 = vperm.xlu0 %4227, %v4131
    %v4229 = vpop.permute.xlu0 %4228
    %4230 = vset.pattern.permute.xlu0 0
    %4231 = vperm.xlu0 %4230, %v4133
    %v4232 = vpop.permute.xlu0 %4231
    %4233 = vset.pattern.permute.xlu0 0
    %4234 = vperm.xlu0 %4233, %v4135
    %v4235 = vpop.permute.xlu0 %4234
    %4236 = vset.pattern.permute.xlu0 0
    %4237 = vperm.xlu0 %4236, %v4137
    %v4238 = vpop.permute.xlu0 %4237
    %4239 = vset.pattern.permute.xlu0 0
    %4240 = vperm.xlu0 %4239, %v4139
    %v4241 = vpop.permute.xlu0 %4240
    %4242 = vset.pattern.permute.xlu0 0
    %4243 = vperm.xlu0 %4242, %v4141
    %v4244 = vpop.permute.xlu0 %4243
    %4245 = vset.pattern.permute.xlu0 0
    %4246 = vperm.xlu0 %4245, %v4143
    %v4247 = vpop.permute.xlu0 %4246
    %4248 = vset.pattern.permute.xlu0 0
    %4249 = vperm.xlu0 %4248, %v4145
    %v4250 = vpop.permute.xlu0 %4249
    %4251 = vset.pattern.permute.xlu0 0
    %4252 = vperm.xlu0 %4251, %v4147
    %v4253 = vpop.permute.xlu0 %4252
    %4254 = vset.pattern.permute.xlu0 0
    %4255 = vperm.xlu0 %4254, %v4149
    %v4256 = vpop.permute.xlu0 %4255
    %4257 = vset.pattern.permute.xlu0 0
    %4258 = vperm.xlu0 %4257, %v4151
    %v4259 = vpop.permute.xlu0 %4258
    %4260 = vset.pattern.permute.xlu0 0
    %4261 = vperm.xlu0 %4260, %v4153
    %v4262 = vpop.permute.xlu0 %4261
    %4263 = vset.pattern.permute.xlu0 0
    %4264 = vperm.xlu0 %4263, %v4155
    %v4265 = vpop.permute.xlu0 %4264
    %4266 = vset.pattern.permute.xlu0 0
    %4267 = vperm.xlu0 %4266, %v4157
    %v4268 = vpop.permute.xlu0 %4267
    %4269 = vset.pattern.permute.xlu0 0
    %4270 = vperm.xlu0 %4269, %v4159
    %v4271 = vpop.permute.xlu0 %4270
    %4272 = vset.pattern.permute.xlu0 0
    %4273 = vperm.xlu0 %4272, %v4161
    %v4274 = vpop.permute.xlu0 %4273
    %4275 = vset.pattern.permute.xlu0 0
    %4276 = vperm.xlu0 %4275, %v4163
    %v4277 = vpop.permute.xlu0 %4276
    %4278 = vset.pattern.permute.xlu0 0
    %4279 = vperm.xlu0 %4278, %v4165
    %v4280 = vpop.permute.xlu0 %4279
    %4281 = vset.pattern.permute.xlu0 0
    %4282 = vperm.xlu0 %4281, %v4167
    %v4283 = vpop.permute.xlu0 %4282
    %4284 = vset.pattern.permute.xlu0 0
    %4285 = vperm.xlu0 %4284, %v4169
    %v4286 = vpop.permute.xlu0 %4285
    %4287 = vset.pattern.permute.xlu0 0
    %4288 = vperm.xlu0 %4287, %v4171
    %v4289 = vpop.permute.xlu0 %4288
    %4290 = vset.pattern.permute.xlu0 0
    %4291 = vperm.xlu0 %4290, %v4173
    %v4292 = vpop.permute.xlu0 %4291
    %4293 = vset.pattern.permute.xlu0 0
    %4294 = vperm.xlu0 %4293, %v4175
    %v4295 = vpop.permute.xlu0 %4294
    %4296 = vset.pattern.permute.xlu0 0
    %4297 = vperm.xlu0 %4296, %v4177
    %v4298 = vpop.permute.xlu0 %4297
    %4299 = vset.pattern.permute.xlu0 0
    %4300 = vperm.xlu0 %4299, %v4179
    %v4301 = vpop.permute.xlu0 %4300
    %4302 = vset.pattern.permute.xlu0 0
    %4303 = vperm.xlu0 %4302, %v4181
    %v4304 = vpop.permute.xlu0 %4303
    %4305 = vset.pattern.permute.xlu0 0
    %4306 = vperm.xlu0 %4305, %v4183
    %v4307 = vpop.permute.xlu0 %4306
    %4308 = vset.pattern.permute.xlu0 0
    %4309 = vperm.xlu0 %4308, %v4185
    %v4310 = vpop.permute.xlu0 %4309
    %4311 = vset.pattern.permute.xlu0 0
    %4312 = vperm.xlu0 %4311, %v4187
    %v4313 = vpop.permute.xlu0 %4312
    %4314 = vset.pattern.permute.xlu0 0
    %4315 = vperm.xlu0 %4314, %v4189
    %v4316 = vpop.permute.xlu0 %4315
    %4317 = vset.pattern.permute.xlu0 0
    %4318 = vperm.xlu0 %4317, %v4191
    %v4319 = vpop.permute.xlu0 %4318
    %v4320 = vperm.slane %v4226, %v1079
    %v4321 = vperm.slane %v4229, %v1081
    %v4322 = vsel %vm1083, %v4321, %v4320
    %v4323 = vperm.slane %v4232, %v1079
    %v4324 = vperm.slane %v4235, %v1081
    %v4325 = vsel %vm1083, %v4324, %v4323
    %v4326 = vperm.slane %v4238, %v1079
    %v4327 = vperm.slane %v4241, %v1081
    %v4328 = vsel %vm1083, %v4327, %v4326
    %v4329 = vperm.slane %v4244, %v1079
    %v4330 = vperm.slane %v4247, %v1081
    %v4331 = vsel %vm1083, %v4330, %v4329
    %v4332 = vperm.slane %v4250, %v1079
    %v4333 = vperm.slane %v4253, %v1081
    %v4334 = vsel %vm1083, %v4333, %v4332
    %v4335 = vperm.slane %v4256, %v1079
    %v4336 = vperm.slane %v4259, %v1081
    %v4337 = vsel %vm1083, %v4336, %v4335
    %v4338 = vperm.slane %v4262, %v1079
    %v4339 = vperm.slane %v4265, %v1081
    %v4340 = vsel %vm1083, %v4339, %v4338
    %v4341 = vperm.slane %v4268, %v1079
    %v4342 = vperm.slane %v4271, %v1081
    %v4343 = vsel %vm1083, %v4342, %v4341
    %v4344 = vperm.slane %v4274, %v1079
    %v4345 = vperm.slane %v4277, %v1081
    %v4346 = vsel %vm1083, %v4345, %v4344
    %v4347 = vperm.slane %v4280, %v1079
    %v4348 = vperm.slane %v4283, %v1081
    %v4349 = vsel %vm1083, %v4348, %v4347
    %v4350 = vperm.slane %v4286, %v1079
    %v4351 = vperm.slane %v4289, %v1081
    %v4352 = vsel %vm1083, %v4351, %v4350
    %v4353 = vperm.slane %v4292, %v1079
    %v4354 = vperm.slane %v4295, %v1081
    %v4355 = vsel %vm1083, %v4354, %v4353
    %v4356 = vperm.slane %v4298, %v1079
    %v4357 = vperm.slane %v4301, %v1081
    %v4358 = vsel %vm1083, %v4357, %v4356
    %v4359 = vperm.slane %v4304, %v1079
    %v4360 = vperm.slane %v4307, %v1081
    %v4361 = vsel %vm1083, %v4360, %v4359
    %v4362 = vperm.slane %v4310, %v1079
    %v4363 = vperm.slane %v4313, %v1081
    %v4364 = vsel %vm1083, %v4363, %v4362
    %v4365 = vperm.slane %v4316, %v1079
    %v4366 = vperm.slane %v4319, %v1081
    %v4367 = vsel %vm1083, %v4366, %v4365
    %v4368 = vsel %vm1130, %v4325, %v4322
    %v4369 = vsel %vm1132, %v4328, %v4368
    %v4370 = vsel %vm1134, %v4331, %v4369
    %v4371 = vsel %vm1136, %v4334, %v4370
    %v4372 = vsel %vm1138, %v4337, %v4371
    %v4373 = vsel %vm1140, %v4340, %v4372
    %v4374 = vsel %vm1142, %v4343, %v4373
    %v4375 = vsel %vm1130, %v4349, %v4346
    %v4376 = vsel %vm1132, %v4352, %v4375
    %v4377 = vsel %vm1134, %v4355, %v4376
    %v4378 = vsel %vm1136, %v4358, %v4377
    %v4379 = vsel %vm1138, %v4361, %v4378
    %v4380 = vsel %vm1140, %v4364, %v4379
    %v4381 = vsel %vm1142, %v4367, %v4380
    %v4384 = vsel %vm1153, %v4374, 0.0
    %4385 = vadd.xlane.f32.xlu0 %v4384
    %v4386 = vpop.xlane.xlu0 %4385
    %v4387 = vsel %vm1153, %v4381, 0.0
    %4388 = vadd.xlane.f32.xlu0 %v4387
    %v4389 = vpop.xlane.xlu0 %4388
    %v4390 = vrcp.pop %v4386
    %v4391 = vrcp.pop %v4389
    %v4394 = vperm.slane %v4390, 0
    %v4395 = vperm.slane %v4390, 1
    %v4396 = vperm.slane %v4390, 2
    %v4397 = vperm.slane %v4390, 3
    %v4398 = vperm.slane %v4390, 4
    %v4399 = vperm.slane %v4390, 5
    %v4400 = vperm.slane %v4390, 6
    %v4401 = vperm.slane %v4390, 7
    %v4402 = vperm.slane %v4391, 0
    %v4403 = vperm.slane %v4391, 1
    %v4404 = vperm.slane %v4391, 2
    %v4405 = vperm.slane %v4391, 3
    %v4406 = vperm.slane %v4391, 4
    %v4407 = vperm.slane %v4391, 5
    %v4408 = vperm.slane %v4391, 6
    %v4409 = vperm.slane %v4391, 7
    %v4426 = vmul.f32 %v4129, %v4394
    %v4427 = vmul.f32 %v4131, %v4394
    %v4428 = vmul.f32 %v4133, %v4395
    %v4429 = vmul.f32 %v4135, %v4395
    %v4430 = vmul.f32 %v4137, %v4396
    %v4431 = vmul.f32 %v4139, %v4396
    %v4432 = vmul.f32 %v4141, %v4397
    %v4433 = vmul.f32 %v4143, %v4397
    %v4434 = vmul.f32 %v4145, %v4398
    %v4435 = vmul.f32 %v4147, %v4398
    %v4436 = vmul.f32 %v4149, %v4399
    %v4437 = vmul.f32 %v4151, %v4399
    %v4438 = vmul.f32 %v4153, %v4400
    %v4439 = vmul.f32 %v4155, %v4400
    %v4440 = vmul.f32 %v4157, %v4401
    %v4441 = vmul.f32 %v4159, %v4401
    %v4442 = vmul.f32 %v4161, %v4402
    %v4443 = vmul.f32 %v4163, %v4402
    %v4444 = vmul.f32 %v4165, %v4403
    %v4445 = vmul.f32 %v4167, %v4403
    %v4446 = vmul.f32 %v4169, %v4404
    %v4447 = vmul.f32 %v4171, %v4404
    %v4448 = vmul.f32 %v4173, %v4405
    %v4449 = vmul.f32 %v4175, %v4405
    %v4450 = vmul.f32 %v4177, %v4406
    %v4451 = vmul.f32 %v4179, %v4406
    %v4452 = vmul.f32 %v4181, %v4407
    %v4453 = vmul.f32 %v4183, %v4407
    %v4454 = vmul.f32 %v4185, %v4408
    %v4455 = vmul.f32 %v4187, %v4408
    %v4456 = vmul.f32 %v4189, %v4409
    %v4457 = vmul.f32 %v4191, %v4409
    %v4458 = vpack.c.bf16 %v4427, %v4426
    %v4459 = vpack.c.bf16 %v4429, %v4428
    %v4460 = vpack.c.bf16 %v4431, %v4430
    %v4461 = vpack.c.bf16 %v4433, %v4432
    %v4462 = vpack.c.bf16 %v4435, %v4434
    %v4463 = vpack.c.bf16 %v4437, %v4436
    %v4464 = vpack.c.bf16 %v4439, %v4438
    %v4465 = vpack.c.bf16 %v4441, %v4440
    %v4466 = vpack.c.bf16 %v4443, %v4442
    %v4467 = vpack.c.bf16 %v4445, %v4444
    %v4468 = vpack.c.bf16 %v4447, %v4446
    %v4469 = vpack.c.bf16 %v4449, %v4448
    %v4470 = vpack.c.bf16 %v4451, %v4450
    %v4471 = vpack.c.bf16 %v4453, %v4452
    %v4472 = vpack.c.bf16 %v4455, %v4454
    %v4473 = vpack.c.bf16 %v4457, %v4456
    %v4474 = vpack.c.bf16 %v3442, %v3440
    %s4475 = scalar_lea.vmem %s5, 2
    %v4476 = vld [vmem:[%s4475] sm:$0x1]
    %v4478 = vperm.slane %v4476, 0
    %v4496 = vunpack.c.l.b16 %v4458
    %v4497 = vunpack.c.h.b16 %v4458
    %v4498 = vunpack.c.l.b16 %v4459
    %v4499 = vunpack.c.h.b16 %v4459
    %v4500 = vunpack.c.l.b16 %v4460
    %v4501 = vunpack.c.h.b16 %v4460
    %v4502 = vunpack.c.l.b16 %v4461
    %v4503 = vunpack.c.h.b16 %v4461
    %v4504 = vunpack.c.l.b16 %v4462
    %v4505 = vunpack.c.h.b16 %v4462
    %v4506 = vunpack.c.l.b16 %v4463
    %v4507 = vunpack.c.h.b16 %v4463
    %v4508 = vunpack.c.l.b16 %v4464
    %v4509 = vunpack.c.h.b16 %v4464
    %v4510 = vunpack.c.l.b16 %v4465
    %v4511 = vunpack.c.h.b16 %v4465
    %v4512 = vunpack.c.l.b16 %v4466
    %v4513 = vunpack.c.h.b16 %v4466
    %v4514 = vunpack.c.l.b16 %v4467
    %v4515 = vunpack.c.h.b16 %v4467
    %v4516 = vunpack.c.l.b16 %v4468
    %v4517 = vunpack.c.h.b16 %v4468
    %v4518 = vunpack.c.l.b16 %v4469
    %v4519 = vunpack.c.h.b16 %v4469
    %v4520 = vunpack.c.l.b16 %v4470
    %v4521 = vunpack.c.h.b16 %v4470
    %v4522 = vunpack.c.l.b16 %v4471
    %v4523 = vunpack.c.h.b16 %v4471
    %v4524 = vunpack.c.l.b16 %v4472
    %v4525 = vunpack.c.h.b16 %v4472
    %v4526 = vunpack.c.l.b16 %v4473
    %v4527 = vunpack.c.h.b16 %v4473
    %4528 = vset.pattern.permute.xlu0 0
    %4529 = vperm.xlu0 %4528, %v4496
    %v4530 = vpop.permute.xlu0 %4529
    %4531 = vset.pattern.permute.xlu0 0
    %4532 = vperm.xlu0 %4531, %v4497
    %v4533 = vpop.permute.xlu0 %4532
    %4534 = vset.pattern.permute.xlu0 0
    %4535 = vperm.xlu0 %4534, %v4498
    %v4536 = vpop.permute.xlu0 %4535
    %4537 = vset.pattern.permute.xlu0 0
    %4538 = vperm.xlu0 %4537, %v4499
    %v4539 = vpop.permute.xlu0 %4538
    %4540 = vset.pattern.permute.xlu0 0
    %4541 = vperm.xlu0 %4540, %v4500
    %v4542 = vpop.permute.xlu0 %4541
    %4543 = vset.pattern.permute.xlu0 0
    %4544 = vperm.xlu0 %4543, %v4501
    %v4545 = vpop.permute.xlu0 %4544
    %4546 = vset.pattern.permute.xlu0 0
    %4547 = vperm.xlu0 %4546, %v4502
    %v4548 = vpop.permute.xlu0 %4547
    %4549 = vset.pattern.permute.xlu0 0
    %4550 = vperm.xlu0 %4549, %v4503
    %v4551 = vpop.permute.xlu0 %4550
    %4552 = vset.pattern.permute.xlu0 0
    %4553 = vperm.xlu0 %4552, %v4504
    %v4554 = vpop.permute.xlu0 %4553
    %4555 = vset.pattern.permute.xlu0 0
    %4556 = vperm.xlu0 %4555, %v4505
    %v4557 = vpop.permute.xlu0 %4556
    %4558 = vset.pattern.permute.xlu0 0
    %4559 = vperm.xlu0 %4558, %v4506
    %v4560 = vpop.permute.xlu0 %4559
    %4561 = vset.pattern.permute.xlu0 0
    %4562 = vperm.xlu0 %4561, %v4507
    %v4563 = vpop.permute.xlu0 %4562
    %4564 = vset.pattern.permute.xlu0 0
    %4565 = vperm.xlu0 %4564, %v4508
    %v4566 = vpop.permute.xlu0 %4565
    %4567 = vset.pattern.permute.xlu0 0
    %4568 = vperm.xlu0 %4567, %v4509
    %v4569 = vpop.permute.xlu0 %4568
    %4570 = vset.pattern.permute.xlu0 0
    %4571 = vperm.xlu0 %4570, %v4510
    %v4572 = vpop.permute.xlu0 %4571
    %4573 = vset.pattern.permute.xlu0 0
    %4574 = vperm.xlu0 %4573, %v4511
    %v4575 = vpop.permute.xlu0 %4574
    %4576 = vset.pattern.permute.xlu0 0
    %4577 = vperm.xlu0 %4576, %v4512
    %v4578 = vpop.permute.xlu0 %4577
    %4579 = vset.pattern.permute.xlu0 0
    %4580 = vperm.xlu0 %4579, %v4513
    %v4581 = vpop.permute.xlu0 %4580
    %4582 = vset.pattern.permute.xlu0 0
    %4583 = vperm.xlu0 %4582, %v4514
    %v4584 = vpop.permute.xlu0 %4583
    %4585 = vset.pattern.permute.xlu0 0
    %4586 = vperm.xlu0 %4585, %v4515
    %v4587 = vpop.permute.xlu0 %4586
    %4588 = vset.pattern.permute.xlu0 0
    %4589 = vperm.xlu0 %4588, %v4516
    %v4590 = vpop.permute.xlu0 %4589
    %4591 = vset.pattern.permute.xlu0 0
    %4592 = vperm.xlu0 %4591, %v4517
    %v4593 = vpop.permute.xlu0 %4592
    %4594 = vset.pattern.permute.xlu0 0
    %4595 = vperm.xlu0 %4594, %v4518
    %v4596 = vpop.permute.xlu0 %4595
    %4597 = vset.pattern.permute.xlu0 0
    %4598 = vperm.xlu0 %4597, %v4519
    %v4599 = vpop.permute.xlu0 %4598
    %4600 = vset.pattern.permute.xlu0 0
    %4601 = vperm.xlu0 %4600, %v4520
    %v4602 = vpop.permute.xlu0 %4601
    %4603 = vset.pattern.permute.xlu0 0
    %4604 = vperm.xlu0 %4603, %v4521
    %v4605 = vpop.permute.xlu0 %4604
    %4606 = vset.pattern.permute.xlu0 0
    %4607 = vperm.xlu0 %4606, %v4522
    %v4608 = vpop.permute.xlu0 %4607
    %4609 = vset.pattern.permute.xlu0 0
    %4610 = vperm.xlu0 %4609, %v4523
    %v4611 = vpop.permute.xlu0 %4610
    %4612 = vset.pattern.permute.xlu0 0
    %4613 = vperm.xlu0 %4612, %v4524
    %v4614 = vpop.permute.xlu0 %4613
    %4615 = vset.pattern.permute.xlu0 0
    %4616 = vperm.xlu0 %4615, %v4525
    %v4617 = vpop.permute.xlu0 %4616
    %4618 = vset.pattern.permute.xlu0 0
    %4619 = vperm.xlu0 %4618, %v4526
    %v4620 = vpop.permute.xlu0 %4619
    %4621 = vset.pattern.permute.xlu0 0
    %4622 = vperm.xlu0 %4621, %v4527
    %v4623 = vpop.permute.xlu0 %4622
    %v4624 = vperm.slane %v4530, %v1079
    %v4625 = vperm.slane %v4533, %v1081
    %v4626 = vsel %vm1083, %v4625, %v4624
    %v4627 = vperm.slane %v4536, %v1079
    %v4628 = vperm.slane %v4539, %v1081
    %v4629 = vsel %vm1083, %v4628, %v4627
    %v4630 = vperm.slane %v4542, %v1079
    %v4631 = vperm.slane %v4545, %v1081
    %v4632 = vsel %vm1083, %v4631, %v4630
    %v4633 = vperm.slane %v4548, %v1079
    %v4634 = vperm.slane %v4551, %v1081
    %v4635 = vsel %vm1083, %v4634, %v4633
    %v4636 = vperm.slane %v4554, %v1079
    %v4637 = vperm.slane %v4557, %v1081
    %v4638 = vsel %vm1083, %v4637, %v4636
    %v4639 = vperm.slane %v4560, %v1079
    %v4640 = vperm.slane %v4563, %v1081
    %v4641 = vsel %vm1083, %v4640, %v4639
    %v4642 = vperm.slane %v4566, %v1079
    %v4643 = vperm.slane %v4569, %v1081
    %v4644 = vsel %vm1083, %v4643, %v4642
    %v4645 = vperm.slane %v4572, %v1079
    %v4646 = vperm.slane %v4575, %v1081
    %v4647 = vsel %vm1083, %v4646, %v4645
    %v4648 = vperm.slane %v4578, %v1079
    %v4649 = vperm.slane %v4581, %v1081
    %v4650 = vsel %vm1083, %v4649, %v4648
    %v4651 = vperm.slane %v4584, %v1079
    %v4652 = vperm.slane %v4587, %v1081
    %v4653 = vsel %vm1083, %v4652, %v4651
    %v4654 = vperm.slane %v4590, %v1079
    %v4655 = vperm.slane %v4593, %v1081
    %v4656 = vsel %vm1083, %v4655, %v4654
    %v4657 = vperm.slane %v4596, %v1079
    %v4658 = vperm.slane %v4599, %v1081
    %v4659 = vsel %vm1083, %v4658, %v4657
    %v4660 = vperm.slane %v4602, %v1079
    %v4661 = vperm.slane %v4605, %v1081
    %v4662 = vsel %vm1083, %v4661, %v4660
    %v4663 = vperm.slane %v4608, %v1079
    %v4664 = vperm.slane %v4611, %v1081
    %v4665 = vsel %vm1083, %v4664, %v4663
    %v4666 = vperm.slane %v4614, %v1079
    %v4667 = vperm.slane %v4617, %v1081
    %v4668 = vsel %vm1083, %v4667, %v4666
    %v4669 = vperm.slane %v4620, %v1079
    %v4670 = vperm.slane %v4623, %v1081
    %v4671 = vsel %vm1083, %v4670, %v4669
    %v4672 = vsel %vm1130, %v4629, %v4626
    %v4673 = vsel %vm1132, %v4632, %v4672
    %v4674 = vsel %vm1134, %v4635, %v4673
    %v4675 = vsel %vm1136, %v4638, %v4674
    %v4676 = vsel %vm1138, %v4641, %v4675
    %v4677 = vsel %vm1140, %v4644, %v4676
    %v4678 = vsel %vm1142, %v4647, %v4677
    %v4679 = vsel %vm1130, %v4653, %v4650
    %v4680 = vsel %vm1132, %v4656, %v4679
    %v4681 = vsel %vm1134, %v4659, %v4680
    %v4682 = vsel %vm1136, %v4662, %v4681
    %v4683 = vsel %vm1138, %v4665, %v4682
    %v4684 = vsel %vm1140, %v4668, %v4683
    %v4685 = vsel %vm1142, %v4671, %v4684
    %v4686 = vpack.c.b16 %v4685, %v4678
    %v4688 = vsel %vm1153, %v4686, 0
    %4690 = vmatpush.bf16.msra.mxu0 0
    %4691 = vmatpush.bf16.msra.mxu0 0
    %4692 = vmatpush.bf16.msra.mxu0 0
    %4693 = vmatpush.bf16.msra.mxu0 0
    %4694 = vmatpush.bf16.msra.mxu0 0
    %4695 = vmatpush.bf16.msra.mxu0 0
    %4696 = vmatpush.bf16.msra.mxu0 0
    %4697 = vmatpush.bf16.msra.mxu0 %v4474
    %4698 = vmatmul.bf16.gmra.mxu0 %v4688
    %v4699 = vpop.f32.mrf.mxu0
    %v4700 = vadd.f32 %v4478, %v4699
    %v4701 = vpop.f32.mrf.mxu0
    %v4702 = vadd.f32 %v4478, %v4701
    %4703 = vdwg.mxu0
    %v4704 = vpack.c.bf16 %v4702, %v4700
    %s4705 = scalar_lea.vmem [#allocation7], 384
    %v4706 = vld [vmem:[%s4705] sm:$0xff]
    %v4707 = vld [vmem:[%s4705 + $0x8] sm:$0xff]
    %v4708 = vld [vmem:[%s4705 + $0x10] sm:$0xff]
    %v4709 = vld [vmem:[%s4705 + $0x18] sm:$0xff]
    %v4710 = vld [vmem:[%s4705 + $0x20] sm:$0xff]
    %v4711 = vld [vmem:[%s4705 + $0x28] sm:$0xff]
    %v4712 = vld [vmem:[%s4705 + $0x30] sm:$0xff]
    %v4713 = vld [vmem:[%s4705 + $0x38] sm:$0xff]
    %v4714 = vld [vmem:[%s4705 + $0x40] sm:$0xff]
    %v4715 = vld [vmem:[%s4705 + $0x48] sm:$0xff]
    %v4716 = vld [vmem:[%s4705 + $0x50] sm:$0xff]
    %v4717 = vld [vmem:[%s4705 + $0x58] sm:$0xff]
    %v4718 = vld [vmem:[%s4705 + $0x60] sm:$0xff]
    %v4719 = vld [vmem:[%s4705 + $0x68] sm:$0xff]
    %v4720 = vld [vmem:[%s4705 + $0x70] sm:$0xff]
    %v4721 = vld [vmem:[%s4705 + $0x78] sm:$0xff]
    %s4722 = scalar_lea.vmem [#allocation8], 6
    %v4723 = vld [vmem:[%s4722] sm:$0x3]
    %v4725 = vperm.slane %v4723, 0
    %v4726 = vperm.slane %v4723, 1
    %v4745 = vunpack.c.l.b16 %v4706
    %v4746 = vunpack.c.h.b16 %v4706
    %v4747 = vunpack.c.l.b16 %v4707
    %v4748 = vunpack.c.h.b16 %v4707
    %v4749 = vunpack.c.l.b16 %v4708
    %v4750 = vunpack.c.h.b16 %v4708
    %v4751 = vunpack.c.l.b16 %v4709
    %v4752 = vunpack.c.h.b16 %v4709
    %v4753 = vunpack.c.l.b16 %v4710
    %v4754 = vunpack.c.h.b16 %v4710
    %v4755 = vunpack.c.l.b16 %v4711
    %v4756 = vunpack.c.h.b16 %v4711
    %v4757 = vunpack.c.l.b16 %v4712
    %v4758 = vunpack.c.h.b16 %v4712
    %v4759 = vunpack.c.l.b16 %v4713
    %v4760 = vunpack.c.h.b16 %v4713
    %v4761 = vunpack.c.l.b16 %v4714
    %v4762 = vunpack.c.h.b16 %v4714
    %v4763 = vunpack.c.l.b16 %v4715
    %v4764 = vunpack.c.h.b16 %v4715
    %v4765 = vunpack.c.l.b16 %v4716
    %v4766 = vunpack.c.h.b16 %v4716
    %v4767 = vunpack.c.l.b16 %v4717
    %v4768 = vunpack.c.h.b16 %v4717
    %v4769 = vunpack.c.l.b16 %v4718
    %v4770 = vunpack.c.h.b16 %v4718
    %v4771 = vunpack.c.l.b16 %v4719
    %v4772 = vunpack.c.h.b16 %v4719
    %v4773 = vunpack.c.l.b16 %v4720
    %v4774 = vunpack.c.h.b16 %v4720
    %v4775 = vunpack.c.l.b16 %v4721
    %v4776 = vunpack.c.h.b16 %v4721
    %v4777 = vpack.c.b16 %v4747, %v4745
    %v4778 = vpack.c.b16 %v4748, %v4746
    %v4779 = vpack.c.b16 %v4751, %v4749
    %v4780 = vpack.c.b16 %v4752, %v4750
    %v4781 = vpack.c.b16 %v4755, %v4753
    %v4782 = vpack.c.b16 %v4756, %v4754
    %v4783 = vpack.c.b16 %v4759, %v4757
    %v4784 = vpack.c.b16 %v4760, %v4758
    %v4785 = vpack.c.b16 %v4763, %v4761
    %v4786 = vpack.c.b16 %v4764, %v4762
    %v4787 = vpack.c.b16 %v4767, %v4765
    %v4788 = vpack.c.b16 %v4768, %v4766
    %v4789 = vpack.c.b16 %v4771, %v4769
    %v4790 = vpack.c.b16 %v4772, %v4770
    %v4791 = vpack.c.b16 %v4775, %v4773
    %v4792 = vpack.c.b16 %v4776, %v4774
    %4809 = vmatpush.bf16.msra.mxu0 %v4791
    %4810 = vmatpush.bf16.msra.mxu0 %v4789
    %4811 = vmatpush.bf16.msra.mxu0 %v4787
    %4812 = vmatpush.bf16.msra.mxu0 %v4785
    %4813 = vmatpush.bf16.msra.mxu0 %v4783
    %4814 = vmatpush.bf16.msra.mxu0 %v4781
    %4815 = vmatpush.bf16.msra.mxu0 %v4779
    %4816 = vmatpush.bf16.msra.mxu0 %v4777
    %4817 = vmatmul.bf16.gmra.mxu0 %v4704
    %v4818 = vpop.f32.mrf.mxu0
    %v4819 = vadd.f32 %v4725, %v4818
    %v4820 = vpop.f32.mrf.mxu0
    %v4821 = vadd.f32 %v4725, %v4820
    %4822 = vdwg.mxu0
    %4823 = vmatpush.bf16.msra.mxu0 %v4792
    %4824 = vmatpush.bf16.msra.mxu0 %v4790
    %4825 = vmatpush.bf16.msra.mxu0 %v4788
    %4826 = vmatpush.bf16.msra.mxu0 %v4786
    %4827 = vmatpush.bf16.msra.mxu0 %v4784
    %4828 = vmatpush.bf16.msra.mxu0 %v4782
    %4829 = vmatpush.bf16.msra.mxu0 %v4780
    %4830 = vmatpush.bf16.msra.mxu0 %v4778
    %4831 = vmatmul.bf16.gmra.mxu0 %v4704
    %v4832 = vpop.f32.mrf.mxu0
    %v4833 = vadd.f32 %v4726, %v4832
    %v4834 = vpop.f32.mrf.mxu0
    %v4835 = vadd.f32 %v4726, %v4834
    %4836 = vdwg.mxu0
    %v4839 = vrot.slane %v4833, 1
    %v4840 = vrot.slane %v4833, 2
    %v4841 = vrot.slane %v4833, 3
    %v4842 = vrot.slane %v4833, 4
    %v4843 = vrot.slane %v4833, 5
    %v4844 = vrot.slane %v4833, 6
    %v4845 = vrot.slane %v4833, 7
    %v4846 = vrot.slane %v4835, 1
    %v4847 = vrot.slane %v4835, 2
    %v4848 = vrot.slane %v4835, 3
    %v4849 = vrot.slane %v4835, 4
    %v4850 = vrot.slane %v4835, 5
    %v4851 = vrot.slane %v4835, 6
    %v4852 = vrot.slane %v4835, 7
    %v4853 = vperm.slane %v4833, 0
    %v4854 = vperm.slane %v4839, 0
    %v4855 = vperm.slane %v4840, 0
    %v4856 = vperm.slane %v4841, 0
    %v4857 = vperm.slane %v4842, 0
    %v4858 = vperm.slane %v4843, 0
    %v4859 = vperm.slane %v4844, 0
    %v4860 = vperm.slane %v4845, 0
    %v4861 = vperm.slane %v4835, 0
    %v4862 = vperm.slane %v4846, 0
    %v4863 = vperm.slane %v4847, 0
    %v4864 = vperm.slane %v4848, 0
    %v4865 = vperm.slane %v4849, 0
    %v4866 = vperm.slane %v4850, 0
    %v4867 = vperm.slane %v4851, 0
    %v4868 = vperm.slane %v4852, 0
    %v4885 = vadd.f32 %v4853, %v4819
    %v4886 = vadd.f32 %v4853, %v4821
    %v4887 = vadd.f32 %v4854, %v4819
    %v4888 = vadd.f32 %v4854, %v4821
    %v4889 = vadd.f32 %v4855, %v4819
    %v4890 = vadd.f32 %v4855, %v4821
    %v4891 = vadd.f32 %v4856, %v4819
    %v4892 = vadd.f32 %v4856, %v4821
    %v4893 = vadd.f32 %v4857, %v4819
    %v4894 = vadd.f32 %v4857, %v4821
    %v4895 = vadd.f32 %v4858, %v4819
    %v4896 = vadd.f32 %v4858, %v4821
    %v4897 = vadd.f32 %v4859, %v4819
    %v4898 = vadd.f32 %v4859, %v4821
    %v4899 = vadd.f32 %v4860, %v4819
    %v4900 = vadd.f32 %v4860, %v4821
    %v4901 = vadd.f32 %v4861, %v4819
    %v4902 = vadd.f32 %v4861, %v4821
    %v4903 = vadd.f32 %v4862, %v4819
    %v4904 = vadd.f32 %v4862, %v4821
    %v4905 = vadd.f32 %v4863, %v4819
    %v4906 = vadd.f32 %v4863, %v4821
    %v4907 = vadd.f32 %v4864, %v4819
    %v4908 = vadd.f32 %v4864, %v4821
    %v4909 = vadd.f32 %v4865, %v4819
    %v4910 = vadd.f32 %v4865, %v4821
    %v4911 = vadd.f32 %v4866, %v4819
    %v4912 = vadd.f32 %v4866, %v4821
    %v4913 = vadd.f32 %v4867, %v4819
    %v4914 = vadd.f32 %v4867, %v4821
    %v4915 = vadd.f32 %v4868, %v4819
    %v4916 = vadd.f32 %v4868, %v4821
    %s4917 = scalar_lea.vmem [#allocation11], 384
    %v4918 = vld [vmem:[%s4917] sm:$0xf]
    %v4919 = vld [vmem:[%s4917 + $0x4] sm:$0xf]
    %v4920 = vld [vmem:[%s4917 + $0x8] sm:$0xf]
    %v4921 = vld [vmem:[%s4917 + $0xc] sm:$0xf]
    %v4922 = vld [vmem:[%s4917 + $0x10] sm:$0xf]
    %v4923 = vld [vmem:[%s4917 + $0x14] sm:$0xf]
    %v4924 = vld [vmem:[%s4917 + $0x18] sm:$0xf]
    %v4925 = vld [vmem:[%s4917 + $0x1c] sm:$0xf]
    %v4926 = vld [vmem:[%s4917 + $0x20] sm:$0xf]
    %v4927 = vld [vmem:[%s4917 + $0x24] sm:$0xf]
    %v4928 = vld [vmem:[%s4917 + $0x28] sm:$0xf]
    %v4929 = vld [vmem:[%s4917 + $0x2c] sm:$0xf]
    %v4930 = vld [vmem:[%s4917 + $0x30] sm:$0xf]
    %v4931 = vld [vmem:[%s4917 + $0x34] sm:$0xf]
    %v4932 = vld [vmem:[%s4917 + $0x38] sm:$0xf]
    %v4933 = vld [vmem:[%s4917 + $0x3c] sm:$0xf]
    %v4934 = vld [vmem:[%s4917 + $0x40] sm:$0xf]
    %v4935 = vld [vmem:[%s4917 + $0x44] sm:$0xf]
    %v4936 = vld [vmem:[%s4917 + $0x48] sm:$0xf]
    %v4937 = vld [vmem:[%s4917 + $0x4c] sm:$0xf]
    %v4938 = vld [vmem:[%s4917 + $0x50] sm:$0xf]
    %v4939 = vld [vmem:[%s4917 + $0x54] sm:$0xf]
    %v4940 = vld [vmem:[%s4917 + $0x58] sm:$0xf]
    %v4941 = vld [vmem:[%s4917 + $0x5c] sm:$0xf]
    %v4942 = vld [vmem:[%s4917 + $0x60] sm:$0xf]
    %v4943 = vld [vmem:[%s4917 + $0x64] sm:$0xf]
    %v4944 = vld [vmem:[%s4917 + $0x68] sm:$0xf]
    %v4945 = vld [vmem:[%s4917 + $0x6c] sm:$0xf]
    %v4946 = vld [vmem:[%s4917 + $0x70] sm:$0xf]
    %v4947 = vld [vmem:[%s4917 + $0x74] sm:$0xf]
    %v4948 = vld [vmem:[%s4917 + $0x78] sm:$0xf]
    %v4949 = vld [vmem:[%s4917 + $0x7c] sm:$0xf]
    %v4950 = vunpack.c.l.bf16 %v4918
    %v4951 = vunpack.c.l.bf16 %v4919
    %v4952 = vunpack.c.l.bf16 %v4920
    %v4953 = vunpack.c.l.bf16 %v4921
    %v4954 = vunpack.c.l.bf16 %v4922
    %v4955 = vunpack.c.l.bf16 %v4923
    %v4956 = vunpack.c.l.bf16 %v4924
    %v4957 = vunpack.c.l.bf16 %v4925
    %v4958 = vunpack.c.l.bf16 %v4926
    %v4959 = vunpack.c.l.bf16 %v4927
    %v4960 = vunpack.c.l.bf16 %v4928
    %v4961 = vunpack.c.l.bf16 %v4929
    %v4962 = vunpack.c.l.bf16 %v4930
    %v4963 = vunpack.c.l.bf16 %v4931
    %v4964 = vunpack.c.l.bf16 %v4932
    %v4965 = vunpack.c.l.bf16 %v4933
    %v4966 = vunpack.c.l.bf16 %v4934
    %v4967 = vunpack.c.l.bf16 %v4935
    %v4968 = vunpack.c.l.bf16 %v4936
    %v4969 = vunpack.c.l.bf16 %v4937
    %v4970 = vunpack.c.l.bf16 %v4938
    %v4971 = vunpack.c.l.bf16 %v4939
    %v4972 = vunpack.c.l.bf16 %v4940
    %v4973 = vunpack.c.l.bf16 %v4941
    %v4974 = vunpack.c.l.bf16 %v4942
    %v4975 = vunpack.c.l.bf16 %v4943
    %v4976 = vunpack.c.l.bf16 %v4944
    %v4977 = vunpack.c.l.bf16 %v4945
    %v4978 = vunpack.c.l.bf16 %v4946
    %v4979 = vunpack.c.l.bf16 %v4947
    %v4980 = vunpack.c.l.bf16 %v4948
    %v4981 = vunpack.c.l.bf16 %v4949
    %v4982 = vadd.f32 %v4885, %v4950
    %v4983 = vadd.f32 %v4886, %v4951
    %v4984 = vadd.f32 %v4887, %v4952
    %v4985 = vadd.f32 %v4888, %v4953
    %v4986 = vadd.f32 %v4889, %v4954
    %v4987 = vadd.f32 %v4890, %v4955
    %v4988 = vadd.f32 %v4891, %v4956
    %v4989 = vadd.f32 %v4892, %v4957
    %v4990 = vadd.f32 %v4893, %v4958
    %v4991 = vadd.f32 %v4894, %v4959
    %v4992 = vadd.f32 %v4895, %v4960
    %v4993 = vadd.f32 %v4896, %v4961
    %v4994 = vadd.f32 %v4897, %v4962
    %v4995 = vadd.f32 %v4898, %v4963
    %v4996 = vadd.f32 %v4899, %v4964
    %v4997 = vadd.f32 %v4900, %v4965
    %v4998 = vadd.f32 %v4901, %v4966
    %v4999 = vadd.f32 %v4902, %v4967
    %v5000 = vadd.f32 %v4903, %v4968
    %v5001 = vadd.f32 %v4904, %v4969
    %v5002 = vadd.f32 %v4905, %v4970
    %v5003 = vadd.f32 %v4906, %v4971
    %v5004 = vadd.f32 %v4907, %v4972
    %v5005 = vadd.f32 %v4908, %v4973
    %v5006 = vadd.f32 %v4909, %v4974
    %v5007 = vadd.f32 %v4910, %v4975
    %v5008 = vadd.f32 %v4911, %v4976
    %v5009 = vadd.f32 %v4912, %v4977
    %v5010 = vadd.f32 %v4913, %v4978
    %v5011 = vadd.f32 %v4914, %v4979
    %v5012 = vadd.f32 %v4915, %v4980
    %v5013 = vadd.f32 %v4916, %v4981
    %vm5014 = vcmp.ge.f32.partialorder %v4982, 0.0
    %vm5015 = vcmp.ge.f32.partialorder %v4983, 0.0
    %vm5016 = vcmp.ge.f32.partialorder %v4984, 0.0
    %vm5017 = vcmp.ge.f32.partialorder %v4985, 0.0
    %vm5018 = vcmp.ge.f32.partialorder %v4986, 0.0
    %vm5019 = vcmp.ge.f32.partialorder %v4987, 0.0
    %vm5020 = vcmp.ge.f32.partialorder %v4988, 0.0
    %vm5021 = vcmp.ge.f32.partialorder %v4989, 0.0
    %vm5022 = vcmp.ge.f32.partialorder %v4990, 0.0
    %vm5023 = vcmp.ge.f32.partialorder %v4991, 0.0
    %vm5024 = vcmp.ge.f32.partialorder %v4992, 0.0
    %vm5025 = vcmp.ge.f32.partialorder %v4993, 0.0
    %vm5026 = vcmp.ge.f32.partialorder %v4994, 0.0
    %vm5027 = vcmp.ge.f32.partialorder %v4995, 0.0
    %vm5028 = vcmp.ge.f32.partialorder %v4996, 0.0
    %vm5029 = vcmp.ge.f32.partialorder %v4997, 0.0
    %vm5030 = vcmp.ge.f32.partialorder %v4998, 0.0
    %vm5031 = vcmp.ge.f32.partialorder %v4999, 0.0
    %vm5032 = vcmp.ge.f32.partialorder %v5000, 0.0
    %vm5033 = vcmp.ge.f32.partialorder %v5001, 0.0
    %vm5034 = vcmp.ge.f32.partialorder %v5002, 0.0
    %vm5035 = vcmp.ge.f32.partialorder %v5003, 0.0
    %vm5036 = vcmp.ge.f32.partialorder %v5004, 0.0
    %vm5037 = vcmp.ge.f32.partialorder %v5005, 0.0
    %vm5038 = vcmp.ge.f32.partialorder %v5006, 0.0
    %vm5039 = vcmp.ge.f32.partialorder %v5007, 0.0
    %vm5040 = vcmp.ge.f32.partialorder %v5008, 0.0
    %vm5041 = vcmp.ge.f32.partialorder %v5009, 0.0
    %vm5042 = vcmp.ge.f32.partialorder %v5010, 0.0
    %vm5043 = vcmp.ge.f32.partialorder %v5011, 0.0
    %vm5044 = vcmp.ge.f32.partialorder %v5012, 0.0
    %vm5045 = vcmp.ge.f32.partialorder %v5013, 0.0
    %v5046 = vmul.f32 %v4982, 0.2
    %v5047 = vmul.f32 %v4983, 0.2
    %v5048 = vmul.f32 %v4984, 0.2
    %v5049 = vmul.f32 %v4985, 0.2
    %v5050 = vmul.f32 %v4986, 0.2
    %v5051 = vmul.f32 %v4987, 0.2
    %v5052 = vmul.f32 %v4988, 0.2
    %v5053 = vmul.f32 %v4989, 0.2
    %v5054 = vmul.f32 %v4990, 0.2
    %v5055 = vmul.f32 %v4991, 0.2
    %v5056 = vmul.f32 %v4992, 0.2
    %v5057 = vmul.f32 %v4993, 0.2
    %v5058 = vmul.f32 %v4994, 0.2
    %v5059 = vmul.f32 %v4995, 0.2
    %v5060 = vmul.f32 %v4996, 0.2
    %v5061 = vmul.f32 %v4997, 0.2
    %v5062 = vmul.f32 %v4998, 0.2
    %v5063 = vmul.f32 %v4999, 0.2
    %v5064 = vmul.f32 %v5000, 0.2
    %v5065 = vmul.f32 %v5001, 0.2
    %v5066 = vmul.f32 %v5002, 0.2
    %v5067 = vmul.f32 %v5003, 0.2
    %v5068 = vmul.f32 %v5004, 0.2
    %v5069 = vmul.f32 %v5005, 0.2
    %v5070 = vmul.f32 %v5006, 0.2
    %v5071 = vmul.f32 %v5007, 0.2
    %v5072 = vmul.f32 %v5008, 0.2
    %v5073 = vmul.f32 %v5009, 0.2
    %v5074 = vmul.f32 %v5010, 0.2
    %v5075 = vmul.f32 %v5011, 0.2
    %v5076 = vmul.f32 %v5012, 0.2
    %v5077 = vmul.f32 %v5013, 0.2
    %v5078 = vsel %vm5014, %v4982, %v5046
    %v5079 = vsel %vm5015, %v4983, %v5047
    %v5080 = vsel %vm5016, %v4984, %v5048
    %v5081 = vsel %vm5017, %v4985, %v5049
    %v5082 = vsel %vm5018, %v4986, %v5050
    %v5083 = vsel %vm5019, %v4987, %v5051
    %v5084 = vsel %vm5020, %v4988, %v5052
    %v5085 = vsel %vm5021, %v4989, %v5053
    %v5086 = vsel %vm5022, %v4990, %v5054
    %v5087 = vsel %vm5023, %v4991, %v5055
    %v5088 = vsel %vm5024, %v4992, %v5056
    %v5089 = vsel %vm5025, %v4993, %v5057
    %v5090 = vsel %vm5026, %v4994, %v5058
    %v5091 = vsel %vm5027, %v4995, %v5059
    %v5092 = vsel %vm5028, %v4996, %v5060
    %v5093 = vsel %vm5029, %v4997, %v5061
    %v5094 = vsel %vm5030, %v4998, %v5062
    %v5095 = vsel %vm5031, %v4999, %v5063
    %v5096 = vsel %vm5032, %v5000, %v5064
    %v5097 = vsel %vm5033, %v5001, %v5065
    %v5098 = vsel %vm5034, %v5002, %v5066
    %v5099 = vsel %vm5035, %v5003, %v5067
    %v5100 = vsel %vm5036, %v5004, %v5068
    %v5101 = vsel %vm5037, %v5005, %v5069
    %v5102 = vsel %vm5038, %v5006, %v5070
    %v5103 = vsel %vm5039, %v5007, %v5071
    %v5104 = vsel %vm5040, %v5008, %v5072
    %v5105 = vsel %vm5041, %v5009, %v5073
    %v5106 = vsel %vm5042, %v5010, %v5074
    %v5107 = vsel %vm5043, %v5011, %v5075
    %v5108 = vsel %vm5044, %v5012, %v5076
    %v5109 = vsel %vm5045, %v5013, %v5077
    %s5110 = scalar_lea.vmem [#allocation10], 3
    %v5111 = vld [vmem:[%s5110] sm:$0x1]
    %v5113 = vperm.slane %v5111, 0
    %v5115 = vmul.f32 %v5078, %v5113
    %v5116 = vmul.f32 %v5079, %v5113
    %v5117 = vmul.f32 %v5080, %v5113
    %v5118 = vmul.f32 %v5081, %v5113
    %v5119 = vmul.f32 %v5082, %v5113
    %v5120 = vmul.f32 %v5083, %v5113
    %v5121 = vmul.f32 %v5084, %v5113
    %v5122 = vmul.f32 %v5085, %v5113
    %v5123 = vmul.f32 %v5086, %v5113
    %v5124 = vmul.f32 %v5087, %v5113
    %v5125 = vmul.f32 %v5088, %v5113
    %v5126 = vmul.f32 %v5089, %v5113
    %v5127 = vmul.f32 %v5090, %v5113
    %v5128 = vmul.f32 %v5091, %v5113
    %v5129 = vmul.f32 %v5092, %v5113
    %v5130 = vmul.f32 %v5093, %v5113
    %v5131 = vmul.f32 %v5094, %v5113
    %v5132 = vmul.f32 %v5095, %v5113
    %v5133 = vmul.f32 %v5096, %v5113
    %v5134 = vmul.f32 %v5097, %v5113
    %v5135 = vmul.f32 %v5098, %v5113
    %v5136 = vmul.f32 %v5099, %v5113
    %v5137 = vmul.f32 %v5100, %v5113
    %v5138 = vmul.f32 %v5101, %v5113
    %v5139 = vmul.f32 %v5102, %v5113
    %v5140 = vmul.f32 %v5103, %v5113
    %v5141 = vmul.f32 %v5104, %v5113
    %v5142 = vmul.f32 %v5105, %v5113
    %v5143 = vmul.f32 %v5106, %v5113
    %v5144 = vmul.f32 %v5107, %v5113
    %v5145 = vmul.f32 %v5108, %v5113
    %v5146 = vmul.f32 %v5109, %v5113
    %5147 = vadd.xlane.f32.xlu0 %v5115
    %v5148 = vpop.xlane.xlu0 %5147
    %5149 = vadd.xlane.f32.xlu0 %v5116
    %v5150 = vpop.xlane.xlu0 %5149
    %5151 = vadd.xlane.f32.xlu0 %v5117
    %v5152 = vpop.xlane.xlu0 %5151
    %5153 = vadd.xlane.f32.xlu0 %v5118
    %v5154 = vpop.xlane.xlu0 %5153
    %5155 = vadd.xlane.f32.xlu0 %v5119
    %v5156 = vpop.xlane.xlu0 %5155
    %5157 = vadd.xlane.f32.xlu0 %v5120
    %v5158 = vpop.xlane.xlu0 %5157
    %5159 = vadd.xlane.f32.xlu0 %v5121
    %v5160 = vpop.xlane.xlu0 %5159
    %5161 = vadd.xlane.f32.xlu0 %v5122
    %v5162 = vpop.xlane.xlu0 %5161
    %5163 = vadd.xlane.f32.xlu0 %v5123
    %v5164 = vpop.xlane.xlu0 %5163
    %5165 = vadd.xlane.f32.xlu0 %v5124
    %v5166 = vpop.xlane.xlu0 %5165
    %5167 = vadd.xlane.f32.xlu0 %v5125
    %v5168 = vpop.xlane.xlu0 %5167
    %5169 = vadd.xlane.f32.xlu0 %v5126
    %v5170 = vpop.xlane.xlu0 %5169
    %5171 = vadd.xlane.f32.xlu0 %v5127
    %v5172 = vpop.xlane.xlu0 %5171
    %5173 = vadd.xlane.f32.xlu0 %v5128
    %v5174 = vpop.xlane.xlu0 %5173
    %5175 = vadd.xlane.f32.xlu0 %v5129
    %v5176 = vpop.xlane.xlu0 %5175
    %5177 = vadd.xlane.f32.xlu0 %v5130
    %v5178 = vpop.xlane.xlu0 %5177
    %5179 = vadd.xlane.f32.xlu0 %v5131
    %v5180 = vpop.xlane.xlu0 %5179
    %5181 = vadd.xlane.f32.xlu0 %v5132
    %v5182 = vpop.xlane.xlu0 %5181
    %5183 = vadd.xlane.f32.xlu0 %v5133
    %v5184 = vpop.xlane.xlu0 %5183
    %5185 = vadd.xlane.f32.xlu0 %v5134
    %v5186 = vpop.xlane.xlu0 %5185
    %5187 = vadd.xlane.f32.xlu0 %v5135
    %v5188 = vpop.xlane.xlu0 %5187
    %5189 = vadd.xlane.f32.xlu0 %v5136
    %v5190 = vpop.xlane.xlu0 %5189
    %5191 = vadd.xlane.f32.xlu0 %v5137
    %v5192 = vpop.xlane.xlu0 %5191
    %5193 = vadd.xlane.f32.xlu0 %v5138
    %v5194 = vpop.xlane.xlu0 %5193
    %5195 = vadd.xlane.f32.xlu0 %v5139
    %v5196 = vpop.xlane.xlu0 %5195
    %5197 = vadd.xlane.f32.xlu0 %v5140
    %v5198 = vpop.xlane.xlu0 %5197
    %5199 = vadd.xlane.f32.xlu0 %v5141
    %v5200 = vpop.xlane.xlu0 %5199
    %5201 = vadd.xlane.f32.xlu0 %v5142
    %v5202 = vpop.xlane.xlu0 %5201
    %5203 = vadd.xlane.f32.xlu0 %v5143
    %v5204 = vpop.xlane.xlu0 %5203
    %5205 = vadd.xlane.f32.xlu0 %v5144
    %v5206 = vpop.xlane.xlu0 %5205
    %5207 = vadd.xlane.f32.xlu0 %v5145
    %v5208 = vpop.xlane.xlu0 %5207
    %5209 = vadd.xlane.f32.xlu0 %v5146
    %v5210 = vpop.xlane.xlu0 %5209
    %v5211 = vadd.f32 %v5148, %v684
    %v5212 = vadd.f32 %v5150, %v690
    %v5213 = vadd.f32 %v5152, %v697
    %v5214 = vadd.f32 %v5154, %v703
    %v5215 = vadd.f32 %v5156, %v710
    %v5216 = vadd.f32 %v5158, %v716
    %v5217 = vadd.f32 %v5160, %v723
    %v5218 = vadd.f32 %v5162, %v729
    %v5219 = vadd.f32 %v5164, %v736
    %v5220 = vadd.f32 %v5166, %v742
    %v5221 = vadd.f32 %v5168, %v749
    %v5222 = vadd.f32 %v5170, %v755
    %v5223 = vadd.f32 %v5172, %v762
    %v5224 = vadd.f32 %v5174, %v768
    %v5225 = vadd.f32 %v5176, %v775
    %v5226 = vadd.f32 %v5178, %v781
    %v5227 = vadd.f32 %v5180, %v788
    %v5228 = vadd.f32 %v5182, %v794
    %v5229 = vadd.f32 %v5184, %v801
    %v5230 = vadd.f32 %v5186, %v807
    %v5231 = vadd.f32 %v5188, %v814
    %v5232 = vadd.f32 %v5190, %v820
    %v5233 = vadd.f32 %v5192, %v827
    %v5234 = vadd.f32 %v5194, %v833
    %v5235 = vadd.f32 %v5196, %v840
    %v5236 = vadd.f32 %v5198, %v846
    %v5237 = vadd.f32 %v5200, %v853
    %v5238 = vadd.f32 %v5202, %v859
    %v5239 = vadd.f32 %v5204, %v866
    %v5240 = vadd.f32 %v5206, %v872
    %v5241 = vadd.f32 %v5208, %v879
    %v5242 = vadd.f32 %v5210, %v885
    %5275 = vset.pattern.permute.xlu0 0
    %5276 = vperm.xlu0 %5275, %v5211
    %v5277 = vpop.permute.xlu0 %5276
    %5278 = vset.pattern.permute.xlu0 0
    %5279 = vperm.xlu0 %5278, %v5212
    %v5280 = vpop.permute.xlu0 %5279
    %5281 = vset.pattern.permute.xlu0 0
    %5282 = vperm.xlu0 %5281, %v5213
    %v5283 = vpop.permute.xlu0 %5282
    %5284 = vset.pattern.permute.xlu0 0
    %5285 = vperm.xlu0 %5284, %v5214
    %v5286 = vpop.permute.xlu0 %5285
    %5287 = vset.pattern.permute.xlu0 0
    %5288 = vperm.xlu0 %5287, %v5215
    %v5289 = vpop.permute.xlu0 %5288
    %5290 = vset.pattern.permute.xlu0 0
    %5291 = vperm.xlu0 %5290, %v5216
    %v5292 = vpop.permute.xlu0 %5291
    %5293 = vset.pattern.permute.xlu0 0
    %5294 = vperm.xlu0 %5293, %v5217
    %v5295 = vpop.permute.xlu0 %5294
    %5296 = vset.pattern.permute.xlu0 0
    %5297 = vperm.xlu0 %5296, %v5218
    %v5298 = vpop.permute.xlu0 %5297
    %5299 = vset.pattern.permute.xlu0 0
    %5300 = vperm.xlu0 %5299, %v5219
    %v5301 = vpop.permute.xlu0 %5300
    %5302 = vset.pattern.permute.xlu0 0
    %5303 = vperm.xlu0 %5302, %v5220
    %v5304 = vpop.permute.xlu0 %5303
    %5305 = vset.pattern.permute.xlu0 0
    %5306 = vperm.xlu0 %5305, %v5221
    %v5307 = vpop.permute.xlu0 %5306
    %5308 = vset.pattern.permute.xlu0 0
    %5309 = vperm.xlu0 %5308, %v5222
    %v5310 = vpop.permute.xlu0 %5309
    %5311 = vset.pattern.permute.xlu0 0
    %5312 = vperm.xlu0 %5311, %v5223
    %v5313 = vpop.permute.xlu0 %5312
    %5314 = vset.pattern.permute.xlu0 0
    %5315 = vperm.xlu0 %5314, %v5224
    %v5316 = vpop.permute.xlu0 %5315
    %5317 = vset.pattern.permute.xlu0 0
    %5318 = vperm.xlu0 %5317, %v5225
    %v5319 = vpop.permute.xlu0 %5318
    %5320 = vset.pattern.permute.xlu0 0
    %5321 = vperm.xlu0 %5320, %v5226
    %v5322 = vpop.permute.xlu0 %5321
    %5323 = vset.pattern.permute.xlu0 0
    %5324 = vperm.xlu0 %5323, %v5227
    %v5325 = vpop.permute.xlu0 %5324
    %5326 = vset.pattern.permute.xlu0 0
    %5327 = vperm.xlu0 %5326, %v5228
    %v5328 = vpop.permute.xlu0 %5327
    %5329 = vset.pattern.permute.xlu0 0
    %5330 = vperm.xlu0 %5329, %v5229
    %v5331 = vpop.permute.xlu0 %5330
    %5332 = vset.pattern.permute.xlu0 0
    %5333 = vperm.xlu0 %5332, %v5230
    %v5334 = vpop.permute.xlu0 %5333
    %5335 = vset.pattern.permute.xlu0 0
    %5336 = vperm.xlu0 %5335, %v5231
    %v5337 = vpop.permute.xlu0 %5336
    %5338 = vset.pattern.permute.xlu0 0
    %5339 = vperm.xlu0 %5338, %v5232
    %v5340 = vpop.permute.xlu0 %5339
    %5341 = vset.pattern.permute.xlu0 0
    %5342 = vperm.xlu0 %5341, %v5233
    %v5343 = vpop.permute.xlu0 %5342
    %5344 = vset.pattern.permute.xlu0 0
    %5345 = vperm.xlu0 %5344, %v5234
    %v5346 = vpop.permute.xlu0 %5345
    %5347 = vset.pattern.permute.xlu0 0
    %5348 = vperm.xlu0 %5347, %v5235
    %v5349 = vpop.permute.xlu0 %5348
    %5350 = vset.pattern.permute.xlu0 0
    %5351 = vperm.xlu0 %5350, %v5236
    %v5352 = vpop.permute.xlu0 %5351
    %5353 = vset.pattern.permute.xlu0 0
    %5354 = vperm.xlu0 %5353, %v5237
    %v5355 = vpop.permute.xlu0 %5354
    %5356 = vset.pattern.permute.xlu0 0
    %5357 = vperm.xlu0 %5356, %v5238
    %v5358 = vpop.permute.xlu0 %5357
    %5359 = vset.pattern.permute.xlu0 0
    %5360 = vperm.xlu0 %5359, %v5239
    %v5361 = vpop.permute.xlu0 %5360
    %5362 = vset.pattern.permute.xlu0 0
    %5363 = vperm.xlu0 %5362, %v5240
    %v5364 = vpop.permute.xlu0 %5363
    %5365 = vset.pattern.permute.xlu0 0
    %5366 = vperm.xlu0 %5365, %v5241
    %v5367 = vpop.permute.xlu0 %5366
    %5368 = vset.pattern.permute.xlu0 0
    %5369 = vperm.xlu0 %5368, %v5242
    %v5370 = vpop.permute.xlu0 %5369
    %v5371 = vperm.slane %v5277, %v1079
    %v5372 = vperm.slane %v5280, %v1081
    %v5373 = vsel %vm1083, %v5372, %v5371
    %v5374 = vperm.slane %v5283, %v1079
    %v5375 = vperm.slane %v5286, %v1081
    %v5376 = vsel %vm1083, %v5375, %v5374
    %v5377 = vperm.slane %v5289, %v1079
    %v5378 = vperm.slane %v5292, %v1081
    %v5379 = vsel %vm1083, %v5378, %v5377
    %v5380 = vperm.slane %v5295, %v1079
    %v5381 = vperm.slane %v5298, %v1081
    %v5382 = vsel %vm1083, %v5381, %v5380
    %v5383 = vperm.slane %v5301, %v1079
    %v5384 = vperm.slane %v5304, %v1081
    %v5385 = vsel %vm1083, %v5384, %v5383
    %v5386 = vperm.slane %v5307, %v1079
    %v5387 = vperm.slane %v5310, %v1081
    %v5388 = vsel %vm1083, %v5387, %v5386
    %v5389 = vperm.slane %v5313, %v1079
    %v5390 = vperm.slane %v5316, %v1081
    %v5391 = vsel %vm1083, %v5390, %v5389
    %v5392 = vperm.slane %v5319, %v1079
    %v5393 = vperm.slane %v5322, %v1081
    %v5394 = vsel %vm1083, %v5393, %v5392
    %v5395 = vperm.slane %v5325, %v1079
    %v5396 = vperm.slane %v5328, %v1081
    %v5397 = vsel %vm1083, %v5396, %v5395
    %v5398 = vperm.slane %v5331, %v1079
    %v5399 = vperm.slane %v5334, %v1081
    %v5400 = vsel %vm1083, %v5399, %v5398
    %v5401 = vperm.slane %v5337, %v1079
    %v5402 = vperm.slane %v5340, %v1081
    %v5403 = vsel %vm1083, %v5402, %v5401
    %v5404 = vperm.slane %v5343, %v1079
    %v5405 = vperm.slane %v5346, %v1081
    %v5406 = vsel %vm1083, %v5405, %v5404
    %v5407 = vperm.slane %v5349, %v1079
    %v5408 = vperm.slane %v5352, %v1081
    %v5409 = vsel %vm1083, %v5408, %v5407
    %v5410 = vperm.slane %v5355, %v1079
    %v5411 = vperm.slane %v5358, %v1081
    %v5412 = vsel %vm1083, %v5411, %v5410
    %v5413 = vperm.slane %v5361, %v1079
    %v5414 = vperm.slane %v5364, %v1081
    %v5415 = vsel %vm1083, %v5414, %v5413
    %v5416 = vperm.slane %v5367, %v1079
    %v5417 = vperm.slane %v5370, %v1081
    %v5418 = vsel %vm1083, %v5417, %v5416
    %v5419 = vsel %vm1130, %v5376, %v5373
    %v5420 = vsel %vm1132, %v5379, %v5419
    %v5421 = vsel %vm1134, %v5382, %v5420
    %v5422 = vsel %vm1136, %v5385, %v5421
    %v5423 = vsel %vm1138, %v5388, %v5422
    %v5424 = vsel %vm1140, %v5391, %v5423
    %v5425 = vsel %vm1142, %v5394, %v5424
    %v5426 = vsel %vm1130, %v5400, %v5397
    %v5427 = vsel %vm1132, %v5403, %v5426
    %v5428 = vsel %vm1134, %v5406, %v5427
    %v5429 = vsel %vm1136, %v5409, %v5428
    %v5430 = vsel %vm1138, %v5412, %v5429
    %v5431 = vsel %vm1140, %v5415, %v5430
    %v5432 = vsel %vm1142, %v5418, %v5431
    %v5435 = vsel %vm1153, %v5425, -inf
    %5436 = vmax.xlane.f32.xlu0 %v5435
    %v5437 = vpop.xlane.xlu0 %5436
    %v5438 = vsel %vm1153, %v5432, -inf
    %5439 = vmax.xlane.f32.xlu0 %v5438
    %v5440 = vpop.xlane.xlu0 %5439
    %v5443 = vperm.slane %v5437, 0
    %v5444 = vperm.slane %v5437, 1
    %v5445 = vperm.slane %v5437, 2
    %v5446 = vperm.slane %v5437, 3
    %v5447 = vperm.slane %v5437, 4
    %v5448 = vperm.slane %v5437, 5
    %v5449 = vperm.slane %v5437, 6
    %v5450 = vperm.slane %v5437, 7
    %v5451 = vperm.slane %v5440, 0
    %v5452 = vperm.slane %v5440, 1
    %v5453 = vperm.slane %v5440, 2
    %v5454 = vperm.slane %v5440, 3
    %v5455 = vperm.slane %v5440, 4
    %v5456 = vperm.slane %v5440, 5
    %v5457 = vperm.slane %v5440, 6
    %v5458 = vperm.slane %v5440, 7
    %v5475 = vsub.f32 %v5211, %v5443
    %v5476 = vsub.f32 %v5212, %v5443
    %v5477 = vsub.f32 %v5213, %v5444
    %v5478 = vsub.f32 %v5214, %v5444
    %v5479 = vsub.f32 %v5215, %v5445
    %v5480 = vsub.f32 %v5216, %v5445
    %v5481 = vsub.f32 %v5217, %v5446
    %v5482 = vsub.f32 %v5218, %v5446
    %v5483 = vsub.f32 %v5219, %v5447
    %v5484 = vsub.f32 %v5220, %v5447
    %v5485 = vsub.f32 %v5221, %v5448
    %v5486 = vsub.f32 %v5222, %v5448
    %v5487 = vsub.f32 %v5223, %v5449
    %v5488 = vsub.f32 %v5224, %v5449
    %v5489 = vsub.f32 %v5225, %v5450
    %v5490 = vsub.f32 %v5226, %v5450
    %v5491 = vsub.f32 %v5227, %v5451
    %v5492 = vsub.f32 %v5228, %v5451
    %v5493 = vsub.f32 %v5229, %v5452
    %v5494 = vsub.f32 %v5230, %v5452
    %v5495 = vsub.f32 %v5231, %v5453
    %v5496 = vsub.f32 %v5232, %v5453
    %v5497 = vsub.f32 %v5233, %v5454
    %v5498 = vsub.f32 %v5234, %v5454
    %v5499 = vsub.f32 %v5235, %v5455
    %v5500 = vsub.f32 %v5236, %v5455
    %v5501 = vsub.f32 %v5237, %v5456
    %v5502 = vsub.f32 %v5238, %v5456
    %v5503 = vsub.f32 %v5239, %v5457
    %v5504 = vsub.f32 %v5240, %v5457
    %v5505 = vsub.f32 %v5241, %v5458
    %v5506 = vsub.f32 %v5242, %v5458
    %v5507 = vmul.f32 %v5475, 1.442695
    %v5508 = vpow.pop %v5507
    %v5509 = vmul.f32 %v5476, 1.442695
    %v5510 = vpow.pop %v5509
    %v5511 = vmul.f32 %v5477, 1.442695
    %v5512 = vpow.pop %v5511
    %v5513 = vmul.f32 %v5478, 1.442695
    %v5514 = vpow.pop %v5513
    %v5515 = vmul.f32 %v5479, 1.442695
    %v5516 = vpow.pop %v5515
    %v5517 = vmul.f32 %v5480, 1.442695
    %v5518 = vpow.pop %v5517
    %v5519 = vmul.f32 %v5481, 1.442695
    %v5520 = vpow.pop %v5519
    %v5521 = vmul.f32 %v5482, 1.442695
    %v5522 = vpow.pop %v5521
    %v5523 = vmul.f32 %v5483, 1.442695
    %v5524 = vpow.pop %v5523
    %v5525 = vmul.f32 %v5484, 1.442695
    %v5526 = vpow.pop %v5525
    %v5527 = vmul.f32 %v5485, 1.442695
    %v5528 = vpow.pop %v5527
    %v5529 = vmul.f32 %v5486, 1.442695
    %v5530 = vpow.pop %v5529
    %v5531 = vmul.f32 %v5487, 1.442695
    %v5532 = vpow.pop %v5531
    %v5533 = vmul.f32 %v5488, 1.442695
    %v5534 = vpow.pop %v5533
    %v5535 = vmul.f32 %v5489, 1.442695
    %v5536 = vpow.pop %v5535
    %v5537 = vmul.f32 %v5490, 1.442695
    %v5538 = vpow.pop %v5537
    %v5539 = vmul.f32 %v5491, 1.442695
    %v5540 = vpow.pop %v5539
    %v5541 = vmul.f32 %v5492, 1.442695
    %v5542 = vpow.pop %v5541
    %v5543 = vmul.f32 %v5493, 1.442695
    %v5544 = vpow.pop %v5543
    %v5545 = vmul.f32 %v5494, 1.442695
    %v5546 = vpow.pop %v5545
    %v5547 = vmul.f32 %v5495, 1.442695
    %v5548 = vpow.pop %v5547
    %v5549 = vmul.f32 %v5496, 1.442695
    %v5550 = vpow.pop %v5549
    %v5551 = vmul.f32 %v5497, 1.442695
    %v5552 = vpow.pop %v5551
    %v5553 = vmul.f32 %v5498, 1.442695
    %v5554 = vpow.pop %v5553
    %v5555 = vmul.f32 %v5499, 1.442695
    %v5556 = vpow.pop %v5555
    %v5557 = vmul.f32 %v5500, 1.442695
    %v5558 = vpow.pop %v5557
    %v5559 = vmul.f32 %v5501, 1.442695
    %v5560 = vpow.pop %v5559
    %v5561 = vmul.f32 %v5502, 1.442695
    %v5562 = vpow.pop %v5561
    %v5563 = vmul.f32 %v5503, 1.442695
    %v5564 = vpow.pop %v5563
    %v5565 = vmul.f32 %v5504, 1.442695
    %v5566 = vpow.pop %v5565
    %v5567 = vmul.f32 %v5505, 1.442695
    %v5568 = vpow.pop %v5567
    %v5569 = vmul.f32 %v5506, 1.442695
    %v5570 = vpow.pop %v5569
    %5603 = vset.pattern.permute.xlu0 0
    %5604 = vperm.xlu0 %5603, %v5508
    %v5605 = vpop.permute.xlu0 %5604
    %5606 = vset.pattern.permute.xlu0 0
    %5607 = vperm.xlu0 %5606, %v5510
    %v5608 = vpop.permute.xlu0 %5607
    %5609 = vset.pattern.permute.xlu0 0
    %5610 = vperm.xlu0 %5609, %v5512
    %v5611 = vpop.permute.xlu0 %5610
    %5612 = vset.pattern.permute.xlu0 0
    %5613 = vperm.xlu0 %5612, %v5514
    %v5614 = vpop.permute.xlu0 %5613
    %5615 = vset.pattern.permute.xlu0 0
    %5616 = vperm.xlu0 %5615, %v5516
    %v5617 = vpop.permute.xlu0 %5616
    %5618 = vset.pattern.permute.xlu0 0
    %5619 = vperm.xlu0 %5618, %v5518
    %v5620 = vpop.permute.xlu0 %5619
    %5621 = vset.pattern.permute.xlu0 0
    %5622 = vperm.xlu0 %5621, %v5520
    %v5623 = vpop.permute.xlu0 %5622
    %5624 = vset.pattern.permute.xlu0 0
    %5625 = vperm.xlu0 %5624, %v5522
    %v5626 = vpop.permute.xlu0 %5625
    %5627 = vset.pattern.permute.xlu0 0
    %5628 = vperm.xlu0 %5627, %v5524
    %v5629 = vpop.permute.xlu0 %5628
    %5630 = vset.pattern.permute.xlu0 0
    %5631 = vperm.xlu0 %5630, %v5526
    %v5632 = vpop.permute.xlu0 %5631
    %5633 = vset.pattern.permute.xlu0 0
    %5634 = vperm.xlu0 %5633, %v5528
    %v5635 = vpop.permute.xlu0 %5634
    %5636 = vset.pattern.permute.xlu0 0
    %5637 = vperm.xlu0 %5636, %v5530
    %v5638 = vpop.permute.xlu0 %5637
    %5639 = vset.pattern.permute.xlu0 0
    %5640 = vperm.xlu0 %5639, %v5532
    %v5641 = vpop.permute.xlu0 %5640
    %5642 = vset.pattern.permute.xlu0 0
    %5643 = vperm.xlu0 %5642, %v5534
    %v5644 = vpop.permute.xlu0 %5643
    %5645 = vset.pattern.permute.xlu0 0
    %5646 = vperm.xlu0 %5645, %v5536
    %v5647 = vpop.permute.xlu0 %5646
    %5648 = vset.pattern.permute.xlu0 0
    %5649 = vperm.xlu0 %5648, %v5538
    %v5650 = vpop.permute.xlu0 %5649
    %5651 = vset.pattern.permute.xlu0 0
    %5652 = vperm.xlu0 %5651, %v5540
    %v5653 = vpop.permute.xlu0 %5652
    %5654 = vset.pattern.permute.xlu0 0
    %5655 = vperm.xlu0 %5654, %v5542
    %v5656 = vpop.permute.xlu0 %5655
    %5657 = vset.pattern.permute.xlu0 0
    %5658 = vperm.xlu0 %5657, %v5544
    %v5659 = vpop.permute.xlu0 %5658
    %5660 = vset.pattern.permute.xlu0 0
    %5661 = vperm.xlu0 %5660, %v5546
    %v5662 = vpop.permute.xlu0 %5661
    %5663 = vset.pattern.permute.xlu0 0
    %5664 = vperm.xlu0 %5663, %v5548
    %v5665 = vpop.permute.xlu0 %5664
    %5666 = vset.pattern.permute.xlu0 0
    %5667 = vperm.xlu0 %5666, %v5550
    %v5668 = vpop.permute.xlu0 %5667
    %5669 = vset.pattern.permute.xlu0 0
    %5670 = vperm.xlu0 %5669, %v5552
    %v5671 = vpop.permute.xlu0 %5670
    %5672 = vset.pattern.permute.xlu0 0
    %5673 = vperm.xlu0 %5672, %v5554
    %v5674 = vpop.permute.xlu0 %5673
    %5675 = vset.pattern.permute.xlu0 0
    %5676 = vperm.xlu0 %5675, %v5556
    %v5677 = vpop.permute.xlu0 %5676
    %5678 = vset.pattern.permute.xlu0 0
    %5679 = vperm.xlu0 %5678, %v5558
    %v5680 = vpop.permute.xlu0 %5679
    %5681 = vset.pattern.permute.xlu0 0
    %5682 = vperm.xlu0 %5681, %v5560
    %v5683 = vpop.permute.xlu0 %5682
    %5684 = vset.pattern.permute.xlu0 0
    %5685 = vperm.xlu0 %5684, %v5562
    %v5686 = vpop.permute.xlu0 %5685
    %5687 = vset.pattern.permute.xlu0 0
    %5688 = vperm.xlu0 %5687, %v5564
    %v5689 = vpop.permute.xlu0 %5688
    %5690 = vset.pattern.permute.xlu0 0
    %5691 = vperm.xlu0 %5690, %v5566
    %v5692 = vpop.permute.xlu0 %5691
    %5693 = vset.pattern.permute.xlu0 0
    %5694 = vperm.xlu0 %5693, %v5568
    %v5695 = vpop.permute.xlu0 %5694
    %5696 = vset.pattern.permute.xlu0 0
    %5697 = vperm.xlu0 %5696, %v5570
    %v5698 = vpop.permute.xlu0 %5697
    %v5699 = vperm.slane %v5605, %v1079
    %v5700 = vperm.slane %v5608, %v1081
    %v5701 = vsel %vm1083, %v5700, %v5699
    %v5702 = vperm.slane %v5611, %v1079
    %v5703 = vperm.slane %v5614, %v1081
    %v5704 = vsel %vm1083, %v5703, %v5702
    %v5705 = vperm.slane %v5617, %v1079
    %v5706 = vperm.slane %v5620, %v1081
    %v5707 = vsel %vm1083, %v5706, %v5705
    %v5708 = vperm.slane %v5623, %v1079
    %v5709 = vperm.slane %v5626, %v1081
    %v5710 = vsel %vm1083, %v5709, %v5708
    %v5711 = vperm.slane %v5629, %v1079
    %v5712 = vperm.slane %v5632, %v1081
    %v5713 = vsel %vm1083, %v5712, %v5711
    %v5714 = vperm.slane %v5635, %v1079
    %v5715 = vperm.slane %v5638, %v1081
    %v5716 = vsel %vm1083, %v5715, %v5714
    %v5717 = vperm.slane %v5641, %v1079
    %v5718 = vperm.slane %v5644, %v1081
    %v5719 = vsel %vm1083, %v5718, %v5717
    %v5720 = vperm.slane %v5647, %v1079
    %v5721 = vperm.slane %v5650, %v1081
    %v5722 = vsel %vm1083, %v5721, %v5720
    %v5723 = vperm.slane %v5653, %v1079
    %v5724 = vperm.slane %v5656, %v1081
    %v5725 = vsel %vm1083, %v5724, %v5723
    %v5726 = vperm.slane %v5659, %v1079
    %v5727 = vperm.slane %v5662, %v1081
    %v5728 = vsel %vm1083, %v5727, %v5726
    %v5729 = vperm.slane %v5665, %v1079
    %v5730 = vperm.slane %v5668, %v1081
    %v5731 = vsel %vm1083, %v5730, %v5729
    %v5732 = vperm.slane %v5671, %v1079
    %v5733 = vperm.slane %v5674, %v1081
    %v5734 = vsel %vm1083, %v5733, %v5732
    %v5735 = vperm.slane %v5677, %v1079
    %v5736 = vperm.slane %v5680, %v1081
    %v5737 = vsel %vm1083, %v5736, %v5735
    %v5738 = vperm.slane %v5683, %v1079
    %v5739 = vperm.slane %v5686, %v1081
    %v5740 = vsel %vm1083, %v5739, %v5738
    %v5741 = vperm.slane %v5689, %v1079
    %v5742 = vperm.slane %v5692, %v1081
    %v5743 = vsel %vm1083, %v5742, %v5741
    %v5744 = vperm.slane %v5695, %v1079
    %v5745 = vperm.slane %v5698, %v1081
    %v5746 = vsel %vm1083, %v5745, %v5744
    %v5747 = vsel %vm1130, %v5704, %v5701
    %v5748 = vsel %vm1132, %v5707, %v5747
    %v5749 = vsel %vm1134, %v5710, %v5748
    %v5750 = vsel %vm1136, %v5713, %v5749
    %v5751 = vsel %vm1138, %v5716, %v5750
    %v5752 = vsel %vm1140, %v5719, %v5751
    %v5753 = vsel %vm1142, %v5722, %v5752
    %v5754 = vsel %vm1130, %v5728, %v5725
    %v5755 = vsel %vm1132, %v5731, %v5754
    %v5756 = vsel %vm1134, %v5734, %v5755
    %v5757 = vsel %vm1136, %v5737, %v5756
    %v5758 = vsel %vm1138, %v5740, %v5757
    %v5759 = vsel %vm1140, %v5743, %v5758
    %v5760 = vsel %vm1142, %v5746, %v5759
    %v5763 = vsel %vm1153, %v5753, 0.0
    %5764 = vadd.xlane.f32.xlu0 %v5763
    %v5765 = vpop.xlane.xlu0 %5764
    %v5766 = vsel %vm1153, %v5760, 0.0
    %5767 = vadd.xlane.f32.xlu0 %v5766
    %v5768 = vpop.xlane.xlu0 %5767
    %v5769 = vrcp.pop %v5765
    %v5770 = vrcp.pop %v5768
    %v5773 = vperm.slane %v5769, 0
    %v5774 = vperm.slane %v5769, 1
    %v5775 = vperm.slane %v5769, 2
    %v5776 = vperm.slane %v5769, 3
    %v5777 = vperm.slane %v5769, 4
    %v5778 = vperm.slane %v5769, 5
    %v5779 = vperm.slane %v5769, 6
    %v5780 = vperm.slane %v5769, 7
    %v5781 = vperm.slane %v5770, 0
    %v5782 = vperm.slane %v5770, 1
    %v5783 = vperm.slane %v5770, 2
    %v5784 = vperm.slane %v5770, 3
    %v5785 = vperm.slane %v5770, 4
    %v5786 = vperm.slane %v5770, 5
    %v5787 = vperm.slane %v5770, 6
    %v5788 = vperm.slane %v5770, 7
    %v5805 = vmul.f32 %v5508, %v5773
    %v5806 = vmul.f32 %v5510, %v5773
    %v5807 = vmul.f32 %v5512, %v5774
    %v5808 = vmul.f32 %v5514, %v5774
    %v5809 = vmul.f32 %v5516, %v5775
    %v5810 = vmul.f32 %v5518, %v5775
    %v5811 = vmul.f32 %v5520, %v5776
    %v5812 = vmul.f32 %v5522, %v5776
    %v5813 = vmul.f32 %v5524, %v5777
    %v5814 = vmul.f32 %v5526, %v5777
    %v5815 = vmul.f32 %v5528, %v5778
    %v5816 = vmul.f32 %v5530, %v5778
    %v5817 = vmul.f32 %v5532, %v5779
    %v5818 = vmul.f32 %v5534, %v5779
    %v5819 = vmul.f32 %v5536, %v5780
    %v5820 = vmul.f32 %v5538, %v5780
    %v5821 = vmul.f32 %v5540, %v5781
    %v5822 = vmul.f32 %v5542, %v5781
    %v5823 = vmul.f32 %v5544, %v5782
    %v5824 = vmul.f32 %v5546, %v5782
    %v5825 = vmul.f32 %v5548, %v5783
    %v5826 = vmul.f32 %v5550, %v5783
    %v5827 = vmul.f32 %v5552, %v5784
    %v5828 = vmul.f32 %v5554, %v5784
    %v5829 = vmul.f32 %v5556, %v5785
    %v5830 = vmul.f32 %v5558, %v5785
    %v5831 = vmul.f32 %v5560, %v5786
    %v5832 = vmul.f32 %v5562, %v5786
    %v5833 = vmul.f32 %v5564, %v5787
    %v5834 = vmul.f32 %v5566, %v5787
    %v5835 = vmul.f32 %v5568, %v5788
    %v5836 = vmul.f32 %v5570, %v5788
    %v5837 = vpack.c.bf16 %v5806, %v5805
    %v5838 = vpack.c.bf16 %v5808, %v5807
    %v5839 = vpack.c.bf16 %v5810, %v5809
    %v5840 = vpack.c.bf16 %v5812, %v5811
    %v5841 = vpack.c.bf16 %v5814, %v5813
    %v5842 = vpack.c.bf16 %v5816, %v5815
    %v5843 = vpack.c.bf16 %v5818, %v5817
    %v5844 = vpack.c.bf16 %v5820, %v5819
    %v5845 = vpack.c.bf16 %v5822, %v5821
    %v5846 = vpack.c.bf16 %v5824, %v5823
    %v5847 = vpack.c.bf16 %v5826, %v5825
    %v5848 = vpack.c.bf16 %v5828, %v5827
    %v5849 = vpack.c.bf16 %v5830, %v5829
    %v5850 = vpack.c.bf16 %v5832, %v5831
    %v5851 = vpack.c.bf16 %v5834, %v5833
    %v5852 = vpack.c.bf16 %v5836, %v5835
    %v5853 = vpack.c.bf16 %v4821, %v4819
    %s5854 = scalar_lea.vmem %s5, 3
    %v5855 = vld [vmem:[%s5854] sm:$0x1]
    %v5857 = vperm.slane %v5855, 0
    %v5875 = vunpack.c.l.b16 %v5837
    %v5876 = vunpack.c.h.b16 %v5837
    %v5877 = vunpack.c.l.b16 %v5838
    %v5878 = vunpack.c.h.b16 %v5838
    %v5879 = vunpack.c.l.b16 %v5839
    %v5880 = vunpack.c.h.b16 %v5839
    %v5881 = vunpack.c.l.b16 %v5840
    %v5882 = vunpack.c.h.b16 %v5840
    %v5883 = vunpack.c.l.b16 %v5841
    %v5884 = vunpack.c.h.b16 %v5841
    %v5885 = vunpack.c.l.b16 %v5842
    %v5886 = vunpack.c.h.b16 %v5842
    %v5887 = vunpack.c.l.b16 %v5843
    %v5888 = vunpack.c.h.b16 %v5843
    %v5889 = vunpack.c.l.b16 %v5844
    %v5890 = vunpack.c.h.b16 %v5844
    %v5891 = vunpack.c.l.b16 %v5845
    %v5892 = vunpack.c.h.b16 %v5845
    %v5893 = vunpack.c.l.b16 %v5846
    %v5894 = vunpack.c.h.b16 %v5846
    %v5895 = vunpack.c.l.b16 %v5847
    %v5896 = vunpack.c.h.b16 %v5847
    %v5897 = vunpack.c.l.b16 %v5848
    %v5898 = vunpack.c.h.b16 %v5848
    %v5899 = vunpack.c.l.b16 %v5849
    %v5900 = vunpack.c.h.b16 %v5849
    %v5901 = vunpack.c.l.b16 %v5850
    %v5902 = vunpack.c.h.b16 %v5850
    %v5903 = vunpack.c.l.b16 %v5851
    %v5904 = vunpack.c.h.b16 %v5851
    %v5905 = vunpack.c.l.b16 %v5852
    %v5906 = vunpack.c.h.b16 %v5852
    %5907 = vset.pattern.permute.xlu0 0
    %5908 = vperm.xlu0 %5907, %v5875
    %v5909 = vpop.permute.xlu0 %5908
    %5910 = vset.pattern.permute.xlu0 0
    %5911 = vperm.xlu0 %5910, %v5876
    %v5912 = vpop.permute.xlu0 %5911
    %5913 = vset.pattern.permute.xlu0 0
    %5914 = vperm.xlu0 %5913, %v5877
    %v5915 = vpop.permute.xlu0 %5914
    %5916 = vset.pattern.permute.xlu0 0
    %5917 = vperm.xlu0 %5916, %v5878
    %v5918 = vpop.permute.xlu0 %5917
    %5919 = vset.pattern.permute.xlu0 0
    %5920 = vperm.xlu0 %5919, %v5879
    %v5921 = vpop.permute.xlu0 %5920
    %5922 = vset.pattern.permute.xlu0 0
    %5923 = vperm.xlu0 %5922, %v5880
    %v5924 = vpop.permute.xlu0 %5923
    %5925 = vset.pattern.permute.xlu0 0
    %5926 = vperm.xlu0 %5925, %v5881
    %v5927 = vpop.permute.xlu0 %5926
    %5928 = vset.pattern.permute.xlu0 0
    %5929 = vperm.xlu0 %5928, %v5882
    %v5930 = vpop.permute.xlu0 %5929
    %5931 = vset.pattern.permute.xlu0 0
    %5932 = vperm.xlu0 %5931, %v5883
    %v5933 = vpop.permute.xlu0 %5932
    %5934 = vset.pattern.permute.xlu0 0
    %5935 = vperm.xlu0 %5934, %v5884
    %v5936 = vpop.permute.xlu0 %5935
    %5937 = vset.pattern.permute.xlu0 0
    %5938 = vperm.xlu0 %5937, %v5885
    %v5939 = vpop.permute.xlu0 %5938
    %5940 = vset.pattern.permute.xlu0 0
    %5941 = vperm.xlu0 %5940, %v5886
    %v5942 = vpop.permute.xlu0 %5941
    %5943 = vset.pattern.permute.xlu0 0
    %5944 = vperm.xlu0 %5943, %v5887
    %v5945 = vpop.permute.xlu0 %5944
    %5946 = vset.pattern.permute.xlu0 0
    %5947 = vperm.xlu0 %5946, %v5888
    %v5948 = vpop.permute.xlu0 %5947
    %5949 = vset.pattern.permute.xlu0 0
    %5950 = vperm.xlu0 %5949, %v5889
    %v5951 = vpop.permute.xlu0 %5950
    %5952 = vset.pattern.permute.xlu0 0
    %5953 = vperm.xlu0 %5952, %v5890
    %v5954 = vpop.permute.xlu0 %5953
    %5955 = vset.pattern.permute.xlu0 0
    %5956 = vperm.xlu0 %5955, %v5891
    %v5957 = vpop.permute.xlu0 %5956
    %5958 = vset.pattern.permute.xlu0 0
    %5959 = vperm.xlu0 %5958, %v5892
    %v5960 = vpop.permute.xlu0 %5959
    %5961 = vset.pattern.permute.xlu0 0
    %5962 = vperm.xlu0 %5961, %v5893
    %v5963 = vpop.permute.xlu0 %5962
    %5964 = vset.pattern.permute.xlu0 0
    %5965 = vperm.xlu0 %5964, %v5894
    %v5966 = vpop.permute.xlu0 %5965
    %5967 = vset.pattern.permute.xlu0 0
    %5968 = vperm.xlu0 %5967, %v5895
    %v5969 = vpop.permute.xlu0 %5968
    %5970 = vset.pattern.permute.xlu0 0
    %5971 = vperm.xlu0 %5970, %v5896
    %v5972 = vpop.permute.xlu0 %5971
    %5973 = vset.pattern.permute.xlu0 0
    %5974 = vperm.xlu0 %5973, %v5897
    %v5975 = vpop.permute.xlu0 %5974
    %5976 = vset.pattern.permute.xlu0 0
    %5977 = vperm.xlu0 %5976, %v5898
    %v5978 = vpop.permute.xlu0 %5977
    %5979 = vset.pattern.permute.xlu0 0
    %5980 = vperm.xlu0 %5979, %v5899
    %v5981 = vpop.permute.xlu0 %5980
    %5982 = vset.pattern.permute.xlu0 0
    %5983 = vperm.xlu0 %5982, %v5900
    %v5984 = vpop.permute.xlu0 %5983
    %5985 = vset.pattern.permute.xlu0 0
    %5986 = vperm.xlu0 %5985, %v5901
    %v5987 = vpop.permute.xlu0 %5986
    %5988 = vset.pattern.permute.xlu0 0
    %5989 = vperm.xlu0 %5988, %v5902
    %v5990 = vpop.permute.xlu0 %5989
    %5991 = vset.pattern.permute.xlu0 0
    %5992 = vperm.xlu0 %5991, %v5903
    %v5993 = vpop.permute.xlu0 %5992
    %5994 = vset.pattern.permute.xlu0 0
    %5995 = vperm.xlu0 %5994, %v5904
    %v5996 = vpop.permute.xlu0 %5995
    %5997 = vset.pattern.permute.xlu0 0
    %5998 = vperm.xlu0 %5997, %v5905
    %v5999 = vpop.permute.xlu0 %5998
    %6000 = vset.pattern.permute.xlu0 0
    %6001 = vperm.xlu0 %6000, %v5906
    %v6002 = vpop.permute.xlu0 %6001
    %v6003 = vperm.slane %v5909, %v1079
    %v6004 = vperm.slane %v5912, %v1081
    %v6005 = vsel %vm1083, %v6004, %v6003
    %v6006 = vperm.slane %v5915, %v1079
    %v6007 = vperm.slane %v5918, %v1081
    %v6008 = vsel %vm1083, %v6007, %v6006
    %v6009 = vperm.slane %v5921, %v1079
    %v6010 = vperm.slane %v5924, %v1081
    %v6011 = vsel %vm1083, %v6010, %v6009
    %v6012 = vperm.slane %v5927, %v1079
    %v6013 = vperm.slane %v5930, %v1081
    %v6014 = vsel %vm1083, %v6013, %v6012
    %v6015 = vperm.slane %v5933, %v1079
    %v6016 = vperm.slane %v5936, %v1081
    %v6017 = vsel %vm1083, %v6016, %v6015
    %v6018 = vperm.slane %v5939, %v1079
    %v6019 = vperm.slane %v5942, %v1081
    %v6020 = vsel %vm1083, %v6019, %v6018
    %v6021 = vperm.slane %v5945, %v1079
    %v6022 = vperm.slane %v5948, %v1081
    %v6023 = vsel %vm1083, %v6022, %v6021
    %v6024 = vperm.slane %v5951, %v1079
    %v6025 = vperm.slane %v5954, %v1081
    %v6026 = vsel %vm1083, %v6025, %v6024
    %v6027 = vperm.slane %v5957, %v1079
    %v6028 = vperm.slane %v5960, %v1081
    %v6029 = vsel %vm1083, %v6028, %v6027
    %v6030 = vperm.slane %v5963, %v1079
    %v6031 = vperm.slane %v5966, %v1081
    %v6032 = vsel %vm1083, %v6031, %v6030
    %v6033 = vperm.slane %v5969, %v1079
    %v6034 = vperm.slane %v5972, %v1081
    %v6035 = vsel %vm1083, %v6034, %v6033
    %v6036 = vperm.slane %v5975, %v1079
    %v6037 = vperm.slane %v5978, %v1081
    %v6038 = vsel %vm1083, %v6037, %v6036
    %v6039 = vperm.slane %v5981, %v1079
    %v6040 = vperm.slane %v5984, %v1081
    %v6041 = vsel %vm1083, %v6040, %v6039
    %v6042 = vperm.slane %v5987, %v1079
    %v6043 = vperm.slane %v5990, %v1081
    %v6044 = vsel %vm1083, %v6043, %v6042
    %v6045 = vperm.slane %v5993, %v1079
    %v6046 = vperm.slane %v5996, %v1081
    %v6047 = vsel %vm1083, %v6046, %v6045
    %v6048 = vperm.slane %v5999, %v1079
    %v6049 = vperm.slane %v6002, %v1081
    %v6050 = vsel %vm1083, %v6049, %v6048
    %v6051 = vsel %vm1130, %v6008, %v6005
    %v6052 = vsel %vm1132, %v6011, %v6051
    %v6053 = vsel %vm1134, %v6014, %v6052
    %v6054 = vsel %vm1136, %v6017, %v6053
    %v6055 = vsel %vm1138, %v6020, %v6054
    %v6056 = vsel %vm1140, %v6023, %v6055
    %v6057 = vsel %vm1142, %v6026, %v6056
    %v6058 = vsel %vm1130, %v6032, %v6029
    %v6059 = vsel %vm1132, %v6035, %v6058
    %v6060 = vsel %vm1134, %v6038, %v6059
    %v6061 = vsel %vm1136, %v6041, %v6060
    %v6062 = vsel %vm1138, %v6044, %v6061
    %v6063 = vsel %vm1140, %v6047, %v6062
    %v6064 = vsel %vm1142, %v6050, %v6063
    %v6065 = vpack.c.b16 %v6064, %v6057
    %v6067 = vsel %vm1153, %v6065, 0
    %6069 = vmatpush.bf16.msra.mxu0 0
    %6070 = vmatpush.bf16.msra.mxu0 0
    %6071 = vmatpush.bf16.msra.mxu0 0
    %6072 = vmatpush.bf16.msra.mxu0 0
    %6073 = vmatpush.bf16.msra.mxu0 0
    %6074 = vmatpush.bf16.msra.mxu0 0
    %6075 = vmatpush.bf16.msra.mxu0 0
    %6076 = vmatpush.bf16.msra.mxu0 %v5853
    %6077 = vmatmul.bf16.gmra.mxu0 %v6067
    %v6078 = vpop.f32.mrf.mxu0
    %v6079 = vadd.f32 %v5857, %v6078
    %v6080 = vpop.f32.mrf.mxu0
    %v6081 = vadd.f32 %v5857, %v6080
    %6082 = vdwg.mxu0
    %6083 = vst [vmem:[#allocation17] sm:$0xff] %v6079
    %6084 = vst [vmem:[#allocation17 + $0x8] sm:$0xff] %v6081
    // Predicated region
    $region74: #{tpu_custom_call.1} parent=1 // pred_check
      _
    $region75: #{tpu_custom_call.1} parent=1 // pred_check_branch
      %6086 = sbr.rel (0) target = $region77
    $region76: #{tpu_custom_call.1} parent=1 // pred_region
      %6088 = vsyncadd [#allocation4], 0
      %s6089 = sshll.u32 [#allocation16], 4
      %s6090 = int_to_ptr.vmem [resolvable:$true] %s6089
      %s6091 = sshll.u32 %s10, 4
      %s6092 = int_to_ptr.hbm [resolvable:$true] %s6091
      %6097 = dma.vmem_to_hbm [thread:$0]  %s6090, 256, %s6092, [#allocation4], 128, 128, 8
    $region77: #{tpu_custom_call.1} parent=1 // pred_fallthru
      _
    // Predicated region
    $region78: #{tpu_custom_call.1} parent=1 // pred_check
      _
    $region79: #{tpu_custom_call.1} parent=1 // pred_check_branch
      %6099 = sbr.rel (0) target = $region81
    $region80: #{tpu_custom_call.1} parent=1 // pred_region
      %6101 = vsyncadd [#allocation18], 0
      %s6102 = sshll.u32 [#allocation17], 4
      %s6103 = int_to_ptr.vmem [resolvable:$true] %s6102
      %s6104 = sshll.u32 %s11, 4
      %s6105 = int_to_ptr.hbm [resolvable:$true] %s6104
      %6110 = dma.vmem_to_hbm [thread:$0]  %s6103, 256, %s6105, [#allocation18], 128, 128, 8
    $region81: #{tpu_custom_call.1} parent=1 // pred_fallthru
      _
    // Predicated region
    $region82: #{tpu_custom_call.1} parent=1 // pred_check
      _
    $region83: #{tpu_custom_call.1} parent=1 // pred_check_branch
      %6112 = sbr.rel (0) target = $region85
    $region84: #{tpu_custom_call.1} parent=1 // pred_region
      %6114 = dma.done [#allocation4], 256
    $region85: #{tpu_custom_call.1} parent=1 // pred_fallthru
      _
    // Predicated region
    $region86: #{tpu_custom_call.1} parent=1 // pred_check
      _
    $region87: #{tpu_custom_call.1} parent=1 // pred_check_branch
      %6116 = sbr.rel (0) target = $region89
    $region88: #{tpu_custom_call.1} parent=1 // pred_region
      %6118 = dma.done [#allocation18], 256
    $region89: #{tpu_custom_call.1} parent=1 // pred_fallthru
      _
    %6119 = vsyncpa [#allocation3], 1
    %6120 = vsyncpa [#allocation6], 1
    %6121 = vsyncpa [#allocation9], 1
    %6122 = vsyncpa [#allocation12], 1
    %6123 = vsyncpa [#allocation15], 1
    %6124 = vsyncpa [#allocation4], 1
    %6125 = vsyncpa [#allocation18], 1

</llo_original>
